<compile_context>
chip_gen: v6e
topology: v6e:2x2x1
jax: 0.10.0
libtpu: 0.0.40
codegen_flags: <defaults>
</compile_context>

<pallas_src>
import math

import jax
import jax.numpy as jnp
from jax.experimental import pallas as pl
from jax.experimental.pallas import tpu as pltpu

# ---- scaled-down bert-base-uncased config (small, lane-aligned shapes) ----
VOCAB = 512
TYPE_VOCAB = 2
MAX_POS = 64
HIDDEN = 128          # bert-base is 768; scaled down, lane-aligned
HEADS = 2             # bert-base is 12
HEAD_DIM = HIDDEN // HEADS
INTERMEDIATE = 512    # bert-base is 3072
LAYERS = 2            # bert-base is 12
LN_EPS = 1e-12        # HF BertLayerNorm eps
OUT_PAD = 128         # classifier Linear(H, 1) zero-padded to 128 lanes

BATCH = 2
SEQ = 8
M = BATCH * SEQ


# ---------------------------------------------------------------------------
# In-kernel math helpers (pure functions on loaded values, all f32)
# ---------------------------------------------------------------------------
def _layer_norm(h, g, b):
    mu = jnp.mean(h, axis=-1, keepdims=True)
    var = jnp.mean(jnp.square(h - mu), axis=-1, keepdims=True)
    return (h - mu) * jax.lax.rsqrt(var + LN_EPS) * g + b


def _gelu(x):
    # tanh-approximate GELU: one EUP tanh instead of the erf polynomial's
    # VALU divide + 5-term poly.  |err| vs exact erf GELU ~1e-3 (inference ok).
    c = math.sqrt(2.0 / math.pi)
    return 0.5 * x * (1.0 + jnp.tanh(c * (x + 0.044715 * x * x * x)))


def _bf16(x):
    return x.astype(jnp.bfloat16)


# ---------------------------------------------------------------------------
# Fused BERT kernel: grid=(LAYERS,), activations resident in VMEM scratch
# ---------------------------------------------------------------------------
def _bert_kernel(x_emb_ref, key_bias_ref, emb_g_ref, emb_b_ref,
                 wqkv_ref, bqkv_ref, wo_ref, bo_ref,
                 ln1_g_ref, ln1_b_ref,
                 w1_ref, b1_ref, w2_ref, b2_ref,
                 ln2_g_ref, ln2_b_ref,
                 pool_w_ref, pool_b_ref, out_w_ref, out_b_ref,
                 head_ref,
                 x_sc, ctx_sc):
    l = pl.program_id(0)

    # Layer 0: embedding LayerNorm folded in; hygiene-zero the revisited out.
    @pl.when(l == 0)
    def _():
        x_sc[...] = _layer_norm(x_emb_ref[...], emb_g_ref[...], emb_b_ref[...])
        head_ref[...] = jnp.zeros_like(head_ref)

    x = x_sc[...]                                            # (M, H) f32

    # --- fused QKV projection: one (H, 3H) bf16 matmul, f32 accumulation ---
    qkv = jnp.dot(_bf16(x), wqkv_ref[...],
                  preferred_element_type=jnp.float32) + bqkv_ref[...]

    # --- attention: per sequence, per head (static unroll).  (S, S) scores,
    #     additive key bias from the padding mask, context written straight
    #     into a VMEM scratch slab at its static (row, 64-lane) offset.
    scale = 1.0 / math.sqrt(HEAD_DIM)
    for b in range(BATCH):
        rows = slice(b * SEQ, (b + 1) * SEQ)
        kb = key_bias_ref[b:b + 1, :]                        # (1, S)
        for h in range(HEADS):
            cq = slice(h * HEAD_DIM, (h + 1) * HEAD_DIM)
            ck = slice(HIDDEN + h * HEAD_DIM, HIDDEN + (h + 1) * HEAD_DIM)
            cv = slice(2 * HIDDEN + h * HEAD_DIM, 2 * HIDDEN + (h + 1) * HEAD_DIM)
            qh = qkv[rows, cq]
            kh = qkv[rows, ck]
            vh = qkv[rows, cv]
            s = jax.lax.dot_general(                          # q @ k^T (NT)
                _bf16(qh), _bf16(kh), (((1,), (1,)), ((), ())),
                preferred_element_type=jnp.float32) * scale + kb
            s = s - jnp.max(s, axis=-1, keepdims=True)
            p = jnp.exp(s)
            p = p * pl.reciprocal(jnp.sum(p, axis=-1, keepdims=True),
                                  approx=True)
            ctx_sc[rows, cq] = jnp.dot(_bf16(p), _bf16(vh),
                                       preferred_element_type=jnp.float32)

    # --- attention output projection + residual + LayerNorm ---
    attn_out = jnp.dot(_bf16(ctx_sc[...]), wo_ref[...],
                       preferred_element_type=jnp.float32) + bo_ref[...]
    h1 = _layer_norm(x + attn_out, ln1_g_ref[...], ln1_b_ref[...])

    # --- FFN: dense -> GELU -> dense -> residual + LayerNorm ---
    ffn = _gelu(jnp.dot(_bf16(h1), w1_ref[...],
                        preferred_element_type=jnp.float32) + b1_ref[...])
    ffn = jnp.dot(_bf16(ffn), w2_ref[...],
                  preferred_element_type=jnp.float32) + b2_ref[...]
    x_new = _layer_norm(h1 + ffn, ln2_g_ref[...], ln2_b_ref[...])
    x_sc[...] = x_new

    # --- last layer: pooler (tanh dense) + classifier, fused in the same
    #     call.  Computed over all M rows so the store stays lane/sublane
    #     dense; the [CLS] rows and column 0 are selected outside.
    #     nn.Dropout(0.3) on the pooled output is identity at inference.
    @pl.when(l == LAYERS - 1)
    def _():
        pooled = jnp.tanh(jnp.dot(_bf16(x_new), pool_w_ref[...],
                                  preferred_element_type=jnp.float32)
                          + pool_b_ref[...])
        head_ref[...] = (jnp.dot(_bf16(pooled), out_w_ref[...],
                                 preferred_element_type=jnp.float32)
                         + out_b_ref[...]).astype(head_ref.dtype)


def bert_base_uncased_forward(params, ids, mask, token_type_ids):
    B, S = ids.shape
    m = B * S

    # Embedding lookups stay in plain JAX (gather glue); everything after is
    # a single fused Pallas call.
    word = jnp.take(params["word_emb"], ids, axis=0)                 # (B,S,H)
    pos = jnp.take(params["pos_emb"], jnp.arange(S), axis=0)         # (S,H)
    typ = jnp.take(params["type_emb"], token_type_ids, axis=0)       # (B,S,H)
    x_emb = (word + pos[None, :, :] + typ).reshape(m, HIDDEN)
    x_emb = x_emb.astype(jnp.float32)

    # Additive key bias per sequence: 0 for real tokens, -1e4 for padding.
    key_bias = (1.0 - mask.astype(jnp.float32)) * -10000.0           # (B, S)

    def const2(a):
        return pl.BlockSpec(a.shape, lambda l: (0, 0))

    def stack3(a):
        return pl.BlockSpec((None,) + a.shape[1:], lambda l: (l, 0, 0))

    args = (
        x_emb, key_bias, params["emb_ln_g"], params["emb_ln_b"],
        params["wqkv"], params["bqkv"], params["wo"], params["bo"],
        params["ln1_g"], params["ln1_b"],
        params["w1"], params["b1"], params["w2"], params["b2"],
        params["ln2_g"], params["ln2_b"],
        params["pool_w"], params["pool_b"],
        params["out_w_pad"], params["out_b_pad"],
    )
    in_specs = [const2(x_emb), const2(key_bias),
                const2(params["emb_ln_g"]), const2(params["emb_ln_b"])]
    in_specs += [stack3(params[k]) for k in
                 ("wqkv", "bqkv", "wo", "bo", "ln1_g", "ln1_b",
                  "w1", "b1", "w2", "b2", "ln2_g", "ln2_b")]
    in_specs += [const2(params[k]) for k in
                 ("pool_w", "pool_b", "out_w_pad", "out_b_pad")]

    head = pl.pallas_call(
        _bert_kernel,
        out_shape=jax.ShapeDtypeStruct((m, OUT_PAD), jnp.float32),
        grid=(LAYERS,),
        in_specs=in_specs,
        out_specs=pl.BlockSpec((m, OUT_PAD), lambda l: (0, 0)),
        scratch_shapes=[pltpu.VMEM((m, HIDDEN), jnp.float32),   # x slab
                        pltpu.VMEM((m, HIDDEN), jnp.float32)],  # attn context
        compiler_params=pltpu.CompilerParams(
            dimension_semantics=("arbitrary",),
            vmem_limit_bytes=32 * 1024 * 1024),
    )(*args)

    # [CLS] row of each sequence, classifier column 0 (rest is zero padding).
    return head.reshape(B, S, OUT_PAD)[:, 0, :1]                     # (B, 1)


def init_params(key):
    def normal(k, shape, scale=0.02):
        return scale * jax.random.normal(k, shape, dtype=jnp.float32)

    keys = iter(jax.random.split(key, 32))
    bf16 = jnp.bfloat16
    out_w = normal(next(keys), (HIDDEN, 1))                # nn.Linear(H, 1)
    out_w_pad = jnp.zeros((HIDDEN, OUT_PAD), jnp.float32).at[:, :1].set(out_w)

    # Matmul weights stored in HBM as bf16 (half the per-layer weight DMA);
    # biases and LayerNorm params stay f32.  Per-layer tensors are stacked on
    # a leading layer axis so one pallas_call can grid over layers.
    params = {
        "word_emb": normal(next(keys), (VOCAB, HIDDEN)),
        "pos_emb": normal(next(keys), (MAX_POS, HIDDEN)),
        "type_emb": normal(next(keys), (TYPE_VOCAB, HIDDEN)),
        "emb_ln_g": jnp.ones((1, HIDDEN), jnp.float32),
        "emb_ln_b": jnp.zeros((1, HIDDEN), jnp.float32),
        "wqkv": normal(next(keys), (LAYERS, HIDDEN, 3 * HIDDEN)).astype(bf16),
        "bqkv": jnp.zeros((LAYERS, 1, 3 * HIDDEN), jnp.float32),
        "wo": normal(next(keys), (LAYERS, HIDDEN, HIDDEN)).astype(bf16),
        "bo": jnp.zeros((LAYERS, 1, HIDDEN), jnp.float32),
        "ln1_g": jnp.ones((LAYERS, 1, HIDDEN), jnp.float32),
        "ln1_b": jnp.zeros((LAYERS, 1, HIDDEN), jnp.float32),
        "w1": normal(next(keys), (LAYERS, HIDDEN, INTERMEDIATE)).astype(bf16),
        "b1": jnp.zeros((LAYERS, 1, INTERMEDIATE), jnp.float32),
        "w2": normal(next(keys), (LAYERS, INTERMEDIATE, HIDDEN)).astype(bf16),
        "b2": jnp.zeros((LAYERS, 1, HIDDEN), jnp.float32),
        "ln2_g": jnp.ones((LAYERS, 1, HIDDEN), jnp.float32),
        "ln2_b": jnp.zeros((LAYERS, 1, HIDDEN), jnp.float32),
        "pool_w": normal(next(keys), (HIDDEN, HIDDEN)).astype(bf16),
        "pool_b": jnp.zeros((1, HIDDEN), jnp.float32),
        "out_w_pad": out_w_pad.astype(bf16),
        "out_b_pad": jnp.zeros((1, OUT_PAD), jnp.float32),
    }
    return params


if __name__ == "__main__":
    key = jax.random.PRNGKey(0)
    pkey, ikey = jax.random.split(key)
    params = init_params(pkey)

    ids = jax.random.randint(ikey, (BATCH, SEQ), 0, VOCAB, dtype=jnp.int32)
    mask = jnp.ones((BATCH, SEQ), jnp.int32).at[1, SEQ - 2:].set(0)  # pad 2
    token_type_ids = jnp.zeros((BATCH, SEQ), jnp.int32).at[:, SEQ // 2:].set(1)

    out = bert_base_uncased_forward(params, ids, mask, token_type_ids)
    out = jax.block_until_ready(out)
    assert out.shape == (BATCH, 1) and out.dtype == jnp.float32
    print("KERNEL_OK")
</pallas_src>

<mosaic_0001>
module attributes {stable_mosaic.version = 11 : i64} {
  func.func @_bert_kernel(%arg0: i32, %arg1: memref<16x128xf32, #tpu.memory_space<vmem>>, %arg2: memref<2x8xf32, #tpu.memory_space<vmem>>, %arg3: memref<1x128xf32, #tpu.memory_space<vmem>>, %arg4: memref<1x128xf32, #tpu.memory_space<vmem>>, %arg5: memref<1x128x384xbf16, #tpu.memory_space<vmem>>, %arg6: memref<1x1x384xf32, #tpu.memory_space<vmem>>, %arg7: memref<1x128x128xbf16, #tpu.memory_space<vmem>>, %arg8: memref<1x1x128xf32, #tpu.memory_space<vmem>>, %arg9: memref<1x1x128xf32, #tpu.memory_space<vmem>>, %arg10: memref<1x1x128xf32, #tpu.memory_space<vmem>>, %arg11: memref<1x128x512xbf16, #tpu.memory_space<vmem>>, %arg12: memref<1x1x512xf32, #tpu.memory_space<vmem>>, %arg13: memref<1x512x128xbf16, #tpu.memory_space<vmem>>, %arg14: memref<1x1x128xf32, #tpu.memory_space<vmem>>, %arg15: memref<1x1x128xf32, #tpu.memory_space<vmem>>, %arg16: memref<1x1x128xf32, #tpu.memory_space<vmem>>, %arg17: memref<128x128xbf16, #tpu.memory_space<vmem>>, %arg18: memref<1x128xf32, #tpu.memory_space<vmem>>, %arg19: memref<128x128xbf16, #tpu.memory_space<vmem>>, %arg20: memref<1x128xf32, #tpu.memory_space<vmem>>, %arg21: memref<16x128xf32, #tpu.memory_space<vmem>>, %arg22: memref<16x128xf32, #tpu.memory_space<vmem>>, %arg23: memref<16x128xf32, #tpu.memory_space<vmem>>) attributes {dimension_semantics = [#tpu.dimension_semantics<arbitrary>], iteration_bounds = array<i64: 2>, scalar_prefetch = 0 : i64, scratch_operands = 2 : i64, tpu.core_type = #tpu.core_type<tc>, window_params = [{pipeline_mode = #tpu.pipeline_mode<synchronous>, transform_indices = @transform_0, window_bounds = array<i64: 16, 128>}, {pipeline_mode = #tpu.pipeline_mode<synchronous>, transform_indices = @transform_1, window_bounds = array<i64: 2, 8>}, {pipeline_mode = #tpu.pipeline_mode<synchronous>, transform_indices = @transform_2, window_bounds = array<i64: 1, 128>}, {pipeline_mode = #tpu.pipeline_mode<synchronous>, transform_indices = @transform_3, window_bounds = array<i64: 1, 128>}, {transform_indices = @transform_4, window_bounds = array<i64: 1, 128, 384>}, {transform_indices = @transform_5, window_bounds = array<i64: 1, 1, 384>}, {transform_indices = @transform_6, window_bounds = array<i64: 1, 128, 128>}, {transform_indices = @transform_7, window_bounds = array<i64: 1, 1, 128>}, {transform_indices = @transform_8, window_bounds = array<i64: 1, 1, 128>}, {transform_indices = @transform_9, window_bounds = array<i64: 1, 1, 128>}, {transform_indices = @transform_10, window_bounds = array<i64: 1, 128, 512>}, {transform_indices = @transform_11, window_bounds = array<i64: 1, 1, 512>}, {transform_indices = @transform_12, window_bounds = array<i64: 1, 512, 128>}, {transform_indices = @transform_13, window_bounds = array<i64: 1, 1, 128>}, {transform_indices = @transform_14, window_bounds = array<i64: 1, 1, 128>}, {transform_indices = @transform_15, window_bounds = array<i64: 1, 1, 128>}, {pipeline_mode = #tpu.pipeline_mode<synchronous>, transform_indices = @transform_16, window_bounds = array<i64: 128, 128>}, {pipeline_mode = #tpu.pipeline_mode<synchronous>, transform_indices = @transform_17, window_bounds = array<i64: 1, 128>}, {pipeline_mode = #tpu.pipeline_mode<synchronous>, transform_indices = @transform_18, window_bounds = array<i64: 128, 128>}, {pipeline_mode = #tpu.pipeline_mode<synchronous>, transform_indices = @transform_19, window_bounds = array<i64: 1, 128>}, {pipeline_mode = #tpu.pipeline_mode<synchronous>, transform_indices = @transform_20, window_bounds = array<i64: 16, 128>}]} {
    %c0_i32 = arith.constant 0 : i32
    %0 = arith.cmpi eq, %arg0, %c0_i32 : i32
    %1 = arith.extui %0 : i1 to i32
    %c0_i32_0 = arith.constant 0 : i32
    %2 = arith.cmpi ne, %1, %c0_i32_0 : i32
    scf.if %2 {
      %c0_89 = arith.constant 0 : index
      %c0_90 = arith.constant 0 : index
      %206 = vector.load %arg1[%c0_89, %c0_90] : memref<16x128xf32, #tpu.memory_space<vmem>>, vector<16x128xf32>
      %c0_91 = arith.constant 0 : index
      %c0_92 = arith.constant 0 : index
      %207 = vector.load %arg3[%c0_91, %c0_92] : memref<1x128xf32, #tpu.memory_space<vmem>>, vector<1x128xf32>
      %c0_93 = arith.constant 0 : index
      %c0_94 = arith.constant 0 : index
      %208 = vector.load %arg4[%c0_93, %c0_94] : memref<1x128xf32, #tpu.memory_space<vmem>>, vector<1x128xf32>
      %cst_95 = arith.constant dense<0.000000e+00> : vector<16xf32>
      %209 = vector.multi_reduction <add>, %206, %cst_95 [1] : vector<16x128xf32> to vector<16xf32>
      %210 = vector.shape_cast %209 : vector<16xf32> to vector<16x1xf32>
      %cst_96 = arith.constant 1.280000e+02 : f32
      %211 = vector.broadcast %cst_96 : f32 to vector<16x1xf32>
      %212 = arith.divf %210, %211 : vector<16x1xf32>
      %213 = vector.broadcast %212 : vector<16x1xf32> to vector<16x128xf32>
      %214 = arith.subf %206, %213 : vector<16x128xf32>
      %215 = arith.mulf %214, %214 : vector<16x128xf32>
      %cst_97 = arith.constant dense<0.000000e+00> : vector<16xf32>
      %216 = vector.multi_reduction <add>, %215, %cst_97 [1] : vector<16x128xf32> to vector<16xf32>
      %217 = vector.shape_cast %216 : vector<16xf32> to vector<16x1xf32>
      %cst_98 = arith.constant 1.280000e+02 : f32
      %218 = vector.broadcast %cst_98 : f32 to vector<16x1xf32>
      %219 = arith.divf %217, %218 : vector<16x1xf32>
      %220 = vector.broadcast %212 : vector<16x1xf32> to vector<16x128xf32>
      %221 = arith.subf %206, %220 : vector<16x128xf32>
      %cst_99 = arith.constant 9.99999996E-13 : f32
      %222 = vector.broadcast %cst_99 : f32 to vector<16x1xf32>
      %223 = arith.addf %219, %222 : vector<16x1xf32>
      %224 = math.rsqrt %223 : vector<16x1xf32>
      %225 = vector.broadcast %224 : vector<16x1xf32> to vector<16x128xf32>
      %226 = arith.mulf %221, %225 : vector<16x128xf32>
      %227 = vector.broadcast %207 : vector<1x128xf32> to vector<16x128xf32>
      %228 = arith.mulf %226, %227 : vector<16x128xf32>
      %229 = vector.broadcast %208 : vector<1x128xf32> to vector<16x128xf32>
      %230 = arith.addf %228, %229 : vector<16x128xf32>
      %c0_100 = arith.constant 0 : index
      %c0_101 = arith.constant 0 : index
      %231 = vector.load %arg22[%c0_100, %c0_101] : memref<16x128xf32, #tpu.memory_space<vmem>>, vector<16x128xf32>
      tpu.vector_store %arg22[%c0_100, %c0_101], %230 {strides = array<i32>} : memref<16x128xf32, #tpu.memory_space<vmem>>, vector<16x128xf32>,
      %cst_102 = arith.constant 0.000000e+00 : f32
      %232 = vector.broadcast %cst_102 : f32 to vector<16x128xf32>
      %c0_103 = arith.constant 0 : index
      %c0_104 = arith.constant 0 : index
      %233 = vector.load %arg21[%c0_103, %c0_104] : memref<16x128xf32, #tpu.memory_space<vmem>>, vector<16x128xf32>
      tpu.vector_store %arg21[%c0_103, %c0_104], %232 {strides = array<i32>} : memref<16x128xf32, #tpu.memory_space<vmem>>, vector<16x128xf32>,
    } else {
    }
    %c0 = arith.constant 0 : index
    %c0_1 = arith.constant 0 : index
    %3 = vector.load %arg22[%c0, %c0_1] : memref<16x128xf32, #tpu.memory_space<vmem>>, vector<16x128xf32>
    %4 = arith.truncf %3 : vector<16x128xf32> to vector<16x128xbf16>
    %c0_2 = arith.constant 0 : index
    %c0_3 = arith.constant 0 : index
    %c0_4 = arith.constant 0 : index
    %5 = vector.load %arg5[%c0_2, %c0_3, %c0_4] : memref<1x128x384xbf16, #tpu.memory_space<vmem>>, vector<1x128x384xbf16>
    %6 = vector.shape_cast %5 : vector<1x128x384xbf16> to vector<128x384xbf16>
    %cst = arith.constant dense<0.000000e+00> : vector<16x384xf32>
    %7 = tpu.matmul %4, %6, %cst {dimension_numbers = #tpu.dot_dimension_numbers<[1], [0], [0], [1], [0, 0, 1, 1], [], []>} : vector<16x128xbf16>, vector<128x384xbf16>, vector<16x384xf32> -> vector<16x384xf32>
    %c0_5 = arith.constant 0 : index
    %c0_6 = arith.constant 0 : index
    %c0_7 = arith.constant 0 : index
    %8 = vector.load %arg6[%c0_5, %c0_6, %c0_7] : memref<1x1x384xf32, #tpu.memory_space<vmem>>, vector<1x1x384xf32>
    %9 = vector.shape_cast %8 : vector<1x1x384xf32> to vector<1x384xf32>
    %10 = vector.broadcast %9 : vector<1x384xf32> to vector<16x384xf32>
    %11 = arith.addf %7, %10 : vector<16x384xf32>
    %c0_8 = arith.constant 0 : index
    %c0_9 = arith.constant 0 : index
    %12 = vector.load %arg2[%c0_8, %c0_9] : memref<2x8xf32, #tpu.memory_space<vmem>>, vector<1x8xf32>
    %13 = vector.extract_strided_slice %11 {offsets = [0, 0], sizes = [8, 64], strides = [1, 1]} : vector<16x384xf32> to vector<8x64xf32>
    %14 = vector.extract_strided_slice %11 {offsets = [0, 128], sizes = [8, 64], strides = [1, 1]} : vector<16x384xf32> to vector<8x64xf32>
    %15 = vector.extract_strided_slice %11 {offsets = [0, 256], sizes = [8, 64], strides = [1, 1]} : vector<16x384xf32> to vector<8x64xf32>
    %16 = arith.truncf %13 : vector<8x64xf32> to vector<8x64xbf16>
    %17 = arith.truncf %14 : vector<8x64xf32> to vector<8x64xbf16>
    %cst_10 = arith.constant dense<0.000000e+00> : vector<8x8xf32>
    %18 = tpu.matmul %16, %17, %cst_10 {dimension_numbers = #tpu.dot_dimension_numbers<[1], [1], [0], [0], [0, 0, 1, 0], [], []>} : vector<8x64xbf16>, vector<8x64xbf16>, vector<8x8xf32> -> vector<8x8xf32>
    %cst_11 = arith.constant 1.250000e-01 : f32
    %19 = vector.broadcast %cst_11 : f32 to vector<8x8xf32>
    %20 = arith.mulf %18, %19 : vector<8x8xf32>
    %21 = vector.broadcast %12 : vector<1x8xf32> to vector<8x8xf32>
    %22 = arith.addf %20, %21 : vector<8x8xf32>
    %cst_12 = arith.constant dense<0xFF800000> : vector<8xf32>
    %23 = vector.multi_reduction <maximumf>, %22, %cst_12 [1] : vector<8x8xf32> to vector<8xf32>
    %24 = vector.shape_cast %23 : vector<8xf32> to vector<8x1xf32>
    %25 = vector.broadcast %24 : vector<8x1xf32> to vector<8x8xf32>
    %26 = arith.subf %22, %25 : vector<8x8xf32>
    %27 = math.exp %26 : vector<8x8xf32>
    %cst_13 = arith.constant dense<0.000000e+00> : vector<8xf32>
    %28 = vector.multi_reduction <add>, %27, %cst_13 [1] : vector<8x8xf32> to vector<8xf32>
    %29 = vector.shape_cast %28 : vector<8xf32> to vector<8x1xf32>
    %30 = tpu.reciprocal %29 {approx = true} : vector<8x1xf32> -> vector<8x1xf32>
    %31 = vector.broadcast %30 : vector<8x1xf32> to vector<8x8xf32>
    %32 = arith.mulf %27, %31 : vector<8x8xf32>
    %33 = arith.truncf %32 : vector<8x8xf32> to vector<8x8xbf16>
    %34 = arith.truncf %15 : vector<8x64xf32> to vector<8x64xbf16>
    %cst_14 = arith.constant dense<0.000000e+00> : vector<8x64xf32>
    %35 = tpu.matmul %33, %34, %cst_14 {dimension_numbers = #tpu.dot_dimension_numbers<[1], [0], [0], [1], [0, 0, 1, 1], [], []>} : vector<8x8xbf16>, vector<8x64xbf16>, vector<8x64xf32> -> vector<8x64xf32>
    %c0_15 = arith.constant 0 : index
    %c0_16 = arith.constant 0 : index
    %36 = vector.load %arg23[%c0_15, %c0_16] : memref<16x128xf32, #tpu.memory_space<vmem>>, vector<8x64xf32>
    tpu.vector_store %arg23[%c0_15, %c0_16], %35 {strides = array<i32>} : memref<16x128xf32, #tpu.memory_space<vmem>>, vector<8x64xf32>,
    %37 = vector.extract_strided_slice %11 {offsets = [0, 64], sizes = [8, 64], strides = [1, 1]} : vector<16x384xf32> to vector<8x64xf32>
    %38 = vector.extract_strided_slice %11 {offsets = [0, 192], sizes = [8, 64], strides = [1, 1]} : vector<16x384xf32> to vector<8x64xf32>
    %39 = vector.extract_strided_slice %11 {offsets = [0, 320], sizes = [8, 64], strides = [1, 1]} : vector<16x384xf32> to vector<8x64xf32>
    %40 = arith.truncf %37 : vector<8x64xf32> to vector<8x64xbf16>
    %41 = arith.truncf %38 : vector<8x64xf32> to vector<8x64xbf16>
    %cst_17 = arith.constant dense<0.000000e+00> : vector<8x8xf32>
    %42 = tpu.matmul %40, %41, %cst_17 {dimension_numbers = #tpu.dot_dimension_numbers<[1], [1], [0], [0], [0, 0, 1, 0], [], []>} : vector<8x64xbf16>, vector<8x64xbf16>, vector<8x8xf32> -> vector<8x8xf32>
    %cst_18 = arith.constant 1.250000e-01 : f32
    %43 = vector.broadcast %cst_18 : f32 to vector<8x8xf32>
    %44 = arith.mulf %42, %43 : vector<8x8xf32>
    %45 = vector.broadcast %12 : vector<1x8xf32> to vector<8x8xf32>
    %46 = arith.addf %44, %45 : vector<8x8xf32>
    %cst_19 = arith.constant dense<0xFF800000> : vector<8xf32>
    %47 = vector.multi_reduction <maximumf>, %46, %cst_19 [1] : vector<8x8xf32> to vector<8xf32>
    %48 = vector.shape_cast %47 : vector<8xf32> to vector<8x1xf32>
    %49 = vector.broadcast %48 : vector<8x1xf32> to vector<8x8xf32>
    %50 = arith.subf %46, %49 : vector<8x8xf32>
    %51 = math.exp %50 : vector<8x8xf32>
    %cst_20 = arith.constant dense<0.000000e+00> : vector<8xf32>
    %52 = vector.multi_reduction <add>, %51, %cst_20 [1] : vector<8x8xf32> to vector<8xf32>
    %53 = vector.shape_cast %52 : vector<8xf32> to vector<8x1xf32>
    %54 = tpu.reciprocal %53 {approx = true} : vector<8x1xf32> -> vector<8x1xf32>
    %55 = vector.broadcast %54 : vector<8x1xf32> to vector<8x8xf32>
    %56 = arith.mulf %51, %55 : vector<8x8xf32>
    %57 = arith.truncf %56 : vector<8x8xf32> to vector<8x8xbf16>
    %58 = arith.truncf %39 : vector<8x64xf32> to vector<8x64xbf16>
    %cst_21 = arith.constant dense<0.000000e+00> : vector<8x64xf32>
    %59 = tpu.matmul %57, %58, %cst_21 {dimension_numbers = #tpu.dot_dimension_numbers<[1], [0], [0], [1], [0, 0, 1, 1], [], []>} : vector<8x8xbf16>, vector<8x64xbf16>, vector<8x64xf32> -> vector<8x64xf32>
    %c0_22 = arith.constant 0 : index
    %c64 = arith.constant 64 : index
    %60 = vector.load %arg23[%c0_22, %c64] : memref<16x128xf32, #tpu.memory_space<vmem>>, vector<8x64xf32>
    tpu.vector_store %arg23[%c0_22, %c64], %59 {strides = array<i32>} : memref<16x128xf32, #tpu.memory_space<vmem>>, vector<8x64xf32>,
    %c1 = arith.constant 1 : index
    %c0_23 = arith.constant 0 : index
    %61 = vector.load %arg2[%c1, %c0_23] : memref<2x8xf32, #tpu.memory_space<vmem>>, vector<1x8xf32>
    %62 = vector.extract_strided_slice %11 {offsets = [8, 0], sizes = [8, 64], strides = [1, 1]} : vector<16x384xf32> to vector<8x64xf32>
    %63 = vector.extract_strided_slice %11 {offsets = [8, 128], sizes = [8, 64], strides = [1, 1]} : vector<16x384xf32> to vector<8x64xf32>
    %64 = vector.extract_strided_slice %11 {offsets = [8, 256], sizes = [8, 64], strides = [1, 1]} : vector<16x384xf32> to vector<8x64xf32>
    %65 = arith.truncf %62 : vector<8x64xf32> to vector<8x64xbf16>
    %66 = arith.truncf %63 : vector<8x64xf32> to vector<8x64xbf16>
    %cst_24 = arith.constant dense<0.000000e+00> : vector<8x8xf32>
    %67 = tpu.matmul %65, %66, %cst_24 {dimension_numbers = #tpu.dot_dimension_numbers<[1], [1], [0], [0], [0, 0, 1, 0], [], []>} : vector<8x64xbf16>, vector<8x64xbf16>, vector<8x8xf32> -> vector<8x8xf32>
    %cst_25 = arith.constant 1.250000e-01 : f32
    %68 = vector.broadcast %cst_25 : f32 to vector<8x8xf32>
    %69 = arith.mulf %67, %68 : vector<8x8xf32>
    %70 = vector.broadcast %61 : vector<1x8xf32> to vector<8x8xf32>
    %71 = arith.addf %69, %70 : vector<8x8xf32>
    %cst_26 = arith.constant dense<0xFF800000> : vector<8xf32>
    %72 = vector.multi_reduction <maximumf>, %71, %cst_26 [1] : vector<8x8xf32> to vector<8xf32>
    %73 = vector.shape_cast %72 : vector<8xf32> to vector<8x1xf32>
    %74 = vector.broadcast %73 : vector<8x1xf32> to vector<8x8xf32>
    %75 = arith.subf %71, %74 : vector<8x8xf32>
    %76 = math.exp %75 : vector<8x8xf32>
    %cst_27 = arith.constant dense<0.000000e+00> : vector<8xf32>
    %77 = vector.multi_reduction <add>, %76, %cst_27 [1] : vector<8x8xf32> to vector<8xf32>
    %78 = vector.shape_cast %77 : vector<8xf32> to vector<8x1xf32>
    %79 = tpu.reciprocal %78 {approx = true} : vector<8x1xf32> -> vector<8x1xf32>
    %80 = vector.broadcast %79 : vector<8x1xf32> to vector<8x8xf32>
    %81 = arith.mulf %76, %80 : vector<8x8xf32>
    %82 = arith.truncf %81 : vector<8x8xf32> to vector<8x8xbf16>
    %83 = arith.truncf %64 : vector<8x64xf32> to vector<8x64xbf16>
    %cst_28 = arith.constant dense<0.000000e+00> : vector<8x64xf32>
    %84 = tpu.matmul %82, %83, %cst_28 {dimension_numbers = #tpu.dot_dimension_numbers<[1], [0], [0], [1], [0, 0, 1, 1], [], []>} : vector<8x8xbf16>, vector<8x64xbf16>, vector<8x64xf32> -> vector<8x64xf32>
    %c8 = arith.constant 8 : index
    %c0_29 = arith.constant 0 : index
    %85 = vector.load %arg23[%c8, %c0_29] : memref<16x128xf32, #tpu.memory_space<vmem>>, vector<8x64xf32>
    tpu.vector_store %arg23[%c8, %c0_29], %84 {strides = array<i32>} : memref<16x128xf32, #tpu.memory_space<vmem>>, vector<8x64xf32>,
    %86 = vector.extract_strided_slice %11 {offsets = [8, 64], sizes = [8, 64], strides = [1, 1]} : vector<16x384xf32> to vector<8x64xf32>
    %87 = vector.extract_strided_slice %11 {offsets = [8, 192], sizes = [8, 64], strides = [1, 1]} : vector<16x384xf32> to vector<8x64xf32>
    %88 = vector.extract_strided_slice %11 {offsets = [8, 320], sizes = [8, 64], strides = [1, 1]} : vector<16x384xf32> to vector<8x64xf32>
    %89 = arith.truncf %86 : vector<8x64xf32> to vector<8x64xbf16>
    %90 = arith.truncf %87 : vector<8x64xf32> to vector<8x64xbf16>
    %cst_30 = arith.constant dense<0.000000e+00> : vector<8x8xf32>
    %91 = tpu.matmul %89, %90, %cst_30 {dimension_numbers = #tpu.dot_dimension_numbers<[1], [1], [0], [0], [0, 0, 1, 0], [], []>} : vector<8x64xbf16>, vector<8x64xbf16>, vector<8x8xf32> -> vector<8x8xf32>
    %cst_31 = arith.constant 1.250000e-01 : f32
    %92 = vector.broadcast %cst_31 : f32 to vector<8x8xf32>
    %93 = arith.mulf %91, %92 : vector<8x8xf32>
    %94 = vector.broadcast %61 : vector<1x8xf32> to vector<8x8xf32>
    %95 = arith.addf %93, %94 : vector<8x8xf32>
    %cst_32 = arith.constant dense<0xFF800000> : vector<8xf32>
    %96 = vector.multi_reduction <maximumf>, %95, %cst_32 [1] : vector<8x8xf32> to vector<8xf32>
    %97 = vector.shape_cast %96 : vector<8xf32> to vector<8x1xf32>
    %98 = vector.broadcast %97 : vector<8x1xf32> to vector<8x8xf32>
    %99 = arith.subf %95, %98 : vector<8x8xf32>
    %100 = math.exp %99 : vector<8x8xf32>
    %cst_33 = arith.constant dense<0.000000e+00> : vector<8xf32>
    %101 = vector.multi_reduction <add>, %100, %cst_33 [1] : vector<8x8xf32> to vector<8xf32>
    %102 = vector.shape_cast %101 : vector<8xf32> to vector<8x1xf32>
    %103 = tpu.reciprocal %102 {approx = true} : vector<8x1xf32> -> vector<8x1xf32>
    %104 = vector.broadcast %103 : vector<8x1xf32> to vector<8x8xf32>
    %105 = arith.mulf %100, %104 : vector<8x8xf32>
    %106 = arith.truncf %105 : vector<8x8xf32> to vector<8x8xbf16>
    %107 = arith.truncf %88 : vector<8x64xf32> to vector<8x64xbf16>
    %cst_34 = arith.constant dense<0.000000e+00> : vector<8x64xf32>
    %108 = tpu.matmul %106, %107, %cst_34 {dimension_numbers = #tpu.dot_dimension_numbers<[1], [0], [0], [1], [0, 0, 1, 1], [], []>} : vector<8x8xbf16>, vector<8x64xbf16>, vector<8x64xf32> -> vector<8x64xf32>
    %c8_35 = arith.constant 8 : index
    %c64_36 = arith.constant 64 : index
    %109 = vector.load %arg23[%c8_35, %c64_36] : memref<16x128xf32, #tpu.memory_space<vmem>>, vector<8x64xf32>
    tpu.vector_store %arg23[%c8_35, %c64_36], %108 {strides = array<i32>} : memref<16x128xf32, #tpu.memory_space<vmem>>, vector<8x64xf32>,
    %c0_37 = arith.constant 0 : index
    %c0_38 = arith.constant 0 : index
    %110 = vector.load %arg23[%c0_37, %c0_38] : memref<16x128xf32, #tpu.memory_space<vmem>>, vector<16x128xf32>
    %111 = arith.truncf %110 : vector<16x128xf32> to vector<16x128xbf16>
    %c0_39 = arith.constant 0 : index
    %c0_40 = arith.constant 0 : index
    %c0_41 = arith.constant 0 : index
    %112 = vector.load %arg7[%c0_39, %c0_40, %c0_41] : memref<1x128x128xbf16, #tpu.memory_space<vmem>>, vector<1x128x128xbf16>
    %113 = vector.shape_cast %112 : vector<1x128x128xbf16> to vector<128x128xbf16>
    %cst_42 = arith.constant dense<0.000000e+00> : vector<16x128xf32>
    %114 = tpu.matmul %111, %113, %cst_42 {dimension_numbers = #tpu.dot_dimension_numbers<[1], [0], [0], [1], [0, 0, 1, 1], [], []>} : vector<16x128xbf16>, vector<128x128xbf16>, vector<16x128xf32> -> vector<16x128xf32>
    %c0_43 = arith.constant 0 : index
    %c0_44 = arith.constant 0 : index
    %c0_45 = arith.constant 0 : index
    %115 = vector.load %arg8[%c0_43, %c0_44, %c0_45] : memref<1x1x128xf32, #tpu.memory_space<vmem>>, vector<1x1x128xf32>
    %116 = vector.shape_cast %115 : vector<1x1x128xf32> to vector<1x128xf32>
    %117 = vector.broadcast %116 : vector<1x128xf32> to vector<16x128xf32>
    %118 = arith.addf %114, %117 : vector<16x128xf32>
    %119 = arith.addf %3, %118 : vector<16x128xf32>
    %c0_46 = arith.constant 0 : index
    %c0_47 = arith.constant 0 : index
    %c0_48 = arith.constant 0 : index
    %120 = vector.load %arg9[%c0_46, %c0_47, %c0_48] : memref<1x1x128xf32, #tpu.memory_space<vmem>>, vector<1x1x128xf32>
    %121 = vector.shape_cast %120 : vector<1x1x128xf32> to vector<1x128xf32>
    %c0_49 = arith.constant 0 : index
    %c0_50 = arith.constant 0 : index
    %c0_51 = arith.constant 0 : index
    %122 = vector.load %arg10[%c0_49, %c0_50, %c0_51] : memref<1x1x128xf32, #tpu.memory_space<vmem>>, vector<1x1x128xf32>
    %123 = vector.shape_cast %122 : vector<1x1x128xf32> to vector<1x128xf32>
    %cst_52 = arith.constant dense<0.000000e+00> : vector<16xf32>
    %124 = vector.multi_reduction <add>, %119, %cst_52 [1] : vector<16x128xf32> to vector<16xf32>
    %125 = vector.shape_cast %124 : vector<16xf32> to vector<16x1xf32>
    %cst_53 = arith.constant 1.280000e+02 : f32
    %126 = vector.broadcast %cst_53 : f32 to vector<16x1xf32>
    %127 = arith.divf %125, %126 : vector<16x1xf32>
    %128 = vector.broadcast %127 : vector<16x1xf32> to vector<16x128xf32>
    %129 = arith.subf %119, %128 : vector<16x128xf32>
    %130 = arith.mulf %129, %129 : vector<16x128xf32>
    %cst_54 = arith.constant dense<0.000000e+00> : vector<16xf32>
    %131 = vector.multi_reduction <add>, %130, %cst_54 [1] : vector<16x128xf32> to vector<16xf32>
    %132 = vector.shape_cast %131 : vector<16xf32> to vector<16x1xf32>
    %cst_55 = arith.constant 1.280000e+02 : f32
    %133 = vector.broadcast %cst_55 : f32 to vector<16x1xf32>
    %134 = arith.divf %132, %133 : vector<16x1xf32>
    %135 = vector.broadcast %127 : vector<16x1xf32> to vector<16x128xf32>
    %136 = arith.subf %119, %135 : vector<16x128xf32>
    %cst_56 = arith.constant 9.99999996E-13 : f32
    %137 = vector.broadcast %cst_56 : f32 to vector<16x1xf32>
    %138 = arith.addf %134, %137 : vector<16x1xf32>
    %139 = math.rsqrt %138 : vector<16x1xf32>
    %140 = vector.broadcast %139 : vector<16x1xf32> to vector<16x128xf32>
    %141 = arith.mulf %136, %140 : vector<16x128xf32>
    %142 = vector.broadcast %121 : vector<1x128xf32> to vector<16x128xf32>
    %143 = arith.mulf %141, %142 : vector<16x128xf32>
    %144 = vector.broadcast %123 : vector<1x128xf32> to vector<16x128xf32>
    %145 = arith.addf %143, %144 : vector<16x128xf32>
    %146 = arith.truncf %145 : vector<16x128xf32> to vector<16x128xbf16>
    %c0_57 = arith.constant 0 : index
    %c0_58 = arith.constant 0 : index
    %c0_59 = arith.constant 0 : index
    %147 = vector.load %arg11[%c0_57, %c0_58, %c0_59] : memref<1x128x512xbf16, #tpu.memory_space<vmem>>, vector<1x128x512xbf16>
    %148 = vector.shape_cast %147 : vector<1x128x512xbf16> to vector<128x512xbf16>
    %cst_60 = arith.constant dense<0.000000e+00> : vector<16x512xf32>
    %149 = tpu.matmul %146, %148, %cst_60 {dimension_numbers = #tpu.dot_dimension_numbers<[1], [0], [0], [1], [0, 0, 1, 1], [], []>} : vector<16x128xbf16>, vector<128x512xbf16>, vector<16x512xf32> -> vector<16x512xf32>
    %c0_61 = arith.constant 0 : index
    %c0_62 = arith.constant 0 : index
    %c0_63 = arith.constant 0 : index
    %150 = vector.load %arg12[%c0_61, %c0_62, %c0_63] : memref<1x1x512xf32, #tpu.memory_space<vmem>>, vector<1x1x512xf32>
    %151 = vector.shape_cast %150 : vector<1x1x512xf32> to vector<1x512xf32>
    %152 = vector.broadcast %151 : vector<1x512xf32> to vector<16x512xf32>
    %153 = arith.addf %149, %152 : vector<16x512xf32>
    %cst_64 = arith.constant 5.000000e-01 : f32
    %154 = vector.broadcast %cst_64 : f32 to vector<16x512xf32>
    %155 = arith.mulf %154, %153 : vector<16x512xf32>
    %cst_65 = arith.constant 4.471500e-02 : f32
    %156 = vector.broadcast %cst_65 : f32 to vector<16x512xf32>
    %157 = arith.mulf %156, %153 : vector<16x512xf32>
    %158 = arith.mulf %157, %153 : vector<16x512xf32>
    %159 = arith.mulf %158, %153 : vector<16x512xf32>
    %160 = arith.addf %153, %159 : vector<16x512xf32>
    %cst_66 = arith.constant 0.797884583 : f32
    %161 = vector.broadcast %cst_66 : f32 to vector<16x512xf32>
    %162 = arith.mulf %161, %160 : vector<16x512xf32>
    %163 = math.tanh %162 : vector<16x512xf32>
    %cst_67 = arith.constant 1.000000e+00 : f32
    %164 = vector.broadcast %cst_67 : f32 to vector<16x512xf32>
    %165 = arith.addf %164, %163 : vector<16x512xf32>
    %166 = arith.mulf %155, %165 : vector<16x512xf32>
    %167 = arith.truncf %166 : vector<16x512xf32> to vector<16x512xbf16>
    %c0_68 = arith.constant 0 : index
    %c0_69 = arith.constant 0 : index
    %c0_70 = arith.constant 0 : index
    %168 = vector.load %arg13[%c0_68, %c0_69, %c0_70] : memref<1x512x128xbf16, #tpu.memory_space<vmem>>, vector<1x512x128xbf16>
    %169 = vector.shape_cast %168 : vector<1x512x128xbf16> to vector<512x128xbf16>
    %cst_71 = arith.constant dense<0.000000e+00> : vector<16x128xf32>
    %170 = tpu.matmul %167, %169, %cst_71 {dimension_numbers = #tpu.dot_dimension_numbers<[1], [0], [0], [1], [0, 0, 1, 1], [], []>} : vector<16x512xbf16>, vector<512x128xbf16>, vector<16x128xf32> -> vector<16x128xf32>
    %c0_72 = arith.constant 0 : index
    %c0_73 = arith.constant 0 : index
    %c0_74 = arith.constant 0 : index
    %171 = vector.load %arg14[%c0_72, %c0_73, %c0_74] : memref<1x1x128xf32, #tpu.memory_space<vmem>>, vector<1x1x128xf32>
    %172 = vector.shape_cast %171 : vector<1x1x128xf32> to vector<1x128xf32>
    %173 = vector.broadcast %172 : vector<1x128xf32> to vector<16x128xf32>
    %174 = arith.addf %170, %173 : vector<16x128xf32>
    %175 = arith.addf %145, %174 : vector<16x128xf32>
    %c0_75 = arith.constant 0 : index
    %c0_76 = arith.constant 0 : index
    %c0_77 = arith.constant 0 : index
    %176 = vector.load %arg15[%c0_75, %c0_76, %c0_77] : memref<1x1x128xf32, #tpu.memory_space<vmem>>, vector<1x1x128xf32>
    %177 = vector.shape_cast %176 : vector<1x1x128xf32> to vector<1x128xf32>
    %c0_78 = arith.constant 0 : index
    %c0_79 = arith.constant 0 : index
    %c0_80 = arith.constant 0 : index
    %178 = vector.load %arg16[%c0_78, %c0_79, %c0_80] : memref<1x1x128xf32, #tpu.memory_space<vmem>>, vector<1x1x128xf32>
    %179 = vector.shape_cast %178 : vector<1x1x128xf32> to vector<1x128xf32>
    %cst_81 = arith.constant dense<0.000000e+00> : vector<16xf32>
    %180 = vector.multi_reduction <add>, %175, %cst_81 [1] : vector<16x128xf32> to vector<16xf32>
    %181 = vector.shape_cast %180 : vector<16xf32> to vector<16x1xf32>
    %cst_82 = arith.constant 1.280000e+02 : f32
    %182 = vector.broadcast %cst_82 : f32 to vector<16x1xf32>
    %183 = arith.divf %181, %182 : vector<16x1xf32>
    %184 = vector.broadcast %183 : vector<16x1xf32> to vector<16x128xf32>
    %185 = arith.subf %175, %184 : vector<16x128xf32>
    %186 = arith.mulf %185, %185 : vector<16x128xf32>
    %cst_83 = arith.constant dense<0.000000e+00> : vector<16xf32>
    %187 = vector.multi_reduction <add>, %186, %cst_83 [1] : vector<16x128xf32> to vector<16xf32>
    %188 = vector.shape_cast %187 : vector<16xf32> to vector<16x1xf32>
    %cst_84 = arith.constant 1.280000e+02 : f32
    %189 = vector.broadcast %cst_84 : f32 to vector<16x1xf32>
    %190 = arith.divf %188, %189 : vector<16x1xf32>
    %191 = vector.broadcast %183 : vector<16x1xf32> to vector<16x128xf32>
    %192 = arith.subf %175, %191 : vector<16x128xf32>
    %cst_85 = arith.constant 9.99999996E-13 : f32
    %193 = vector.broadcast %cst_85 : f32 to vector<16x1xf32>
    %194 = arith.addf %190, %193 : vector<16x1xf32>
    %195 = math.rsqrt %194 : vector<16x1xf32>
    %196 = vector.broadcast %195 : vector<16x1xf32> to vector<16x128xf32>
    %197 = arith.mulf %192, %196 : vector<16x128xf32>
    %198 = vector.broadcast %177 : vector<1x128xf32> to vector<16x128xf32>
    %199 = arith.mulf %197, %198 : vector<16x128xf32>
    %200 = vector.broadcast %179 : vector<1x128xf32> to vector<16x128xf32>
    %201 = arith.addf %199, %200 : vector<16x128xf32>
    %c0_86 = arith.constant 0 : index
    %c0_87 = arith.constant 0 : index
    %202 = vector.load %arg22[%c0_86, %c0_87] : memref<16x128xf32, #tpu.memory_space<vmem>>, vector<16x128xf32>
    tpu.vector_store %arg22[%c0_86, %c0_87], %201 {strides = array<i32>} : memref<16x128xf32, #tpu.memory_space<vmem>>, vector<16x128xf32>,
    %c1_i32 = arith.constant 1 : i32
    %203 = arith.cmpi eq, %arg0, %c1_i32 : i32
    %204 = arith.extui %203 : i1 to i32
    %c0_i32_88 = arith.constant 0 : i32
    %205 = arith.cmpi ne, %204, %c0_i32_88 : i32
    scf.if %205 {
      %206 = arith.truncf %201 : vector<16x128xf32> to vector<16x128xbf16>
      %c0_89 = arith.constant 0 : index
      %c0_90 = arith.constant 0 : index
      %207 = vector.load %arg17[%c0_89, %c0_90] : memref<128x128xbf16, #tpu.memory_space<vmem>>, vector<128x128xbf16>
      %cst_91 = arith.constant dense<0.000000e+00> : vector<16x128xf32>
      %208 = tpu.matmul %206, %207, %cst_91 {dimension_numbers = #tpu.dot_dimension_numbers<[1], [0], [0], [1], [0, 0, 1, 1], [], []>} : vector<16x128xbf16>, vector<128x128xbf16>, vector<16x128xf32> -> vector<16x128xf32>
      %c0_92 = arith.constant 0 : index
      %c0_93 = arith.constant 0 : index
      %209 = vector.load %arg18[%c0_92, %c0_93] : memref<1x128xf32, #tpu.memory_space<vmem>>, vector<1x128xf32>
      %210 = vector.broadcast %209 : vector<1x128xf32> to vector<16x128xf32>
      %211 = arith.addf %208, %210 : vector<16x128xf32>
      %212 = math.tanh %211 : vector<16x128xf32>
      %213 = arith.truncf %212 : vector<16x128xf32> to vector<16x128xbf16>
      %c0_94 = arith.constant 0 : index
      %c0_95 = arith.constant 0 : index
      %214 = vector.load %arg19[%c0_94, %c0_95] : memref<128x128xbf16, #tpu.memory_space<vmem>>, vector<128x128xbf16>
      %cst_96 = arith.constant dense<0.000000e+00> : vector<16x128xf32>
      %215 = tpu.matmul %213, %214, %cst_96 {dimension_numbers = #tpu.dot_dimension_numbers<[1], [0], [0], [1], [0, 0, 1, 1], [], []>} : vector<16x128xbf16>, vector<128x128xbf16>, vector<16x128xf32> -> vector<16x128xf32>
      %c0_97 = arith.constant 0 : index
      %c0_98 = arith.constant 0 : index
      %216 = vector.load %arg20[%c0_97, %c0_98] : memref<1x128xf32, #tpu.memory_space<vmem>>, vector<1x128xf32>
      %217 = vector.broadcast %216 : vector<1x128xf32> to vector<16x128xf32>
      %218 = arith.addf %215, %217 : vector<16x128xf32>
      %c0_99 = arith.constant 0 : index
      %c0_100 = arith.constant 0 : index
      %219 = vector.load %arg21[%c0_99, %c0_100] : memref<16x128xf32, #tpu.memory_space<vmem>>, vector<16x128xf32>
      tpu.vector_store %arg21[%c0_99, %c0_100], %218 {strides = array<i32>} : memref<16x128xf32, #tpu.memory_space<vmem>>, vector<16x128xf32>,
    } else {
    }
    return
  }
  func.func @transform_0(%arg0: i32) -> (i32, i32) {
    %c0_i32 = arith.constant 0 : i32
    %c0_i32_0 = arith.constant 0 : i32
    %c0_i32_1 = arith.constant 0 : i32
    return %c0_i32, %c0_i32_0 : i32, i32
  }
  func.func @transform_1(%arg0: i32) -> (i32, i32) {
    %c0_i32 = arith.constant 0 : i32
    %c0_i32_0 = arith.constant 0 : i32
    %c0_i32_1 = arith.constant 0 : i32
    return %c0_i32, %c0_i32_0 : i32, i32
  }
  func.func @transform_2(%arg0: i32) -> (i32, i32) {
    %c0_i32 = arith.constant 0 : i32
    %c0_i32_0 = arith.constant 0 : i32
    %c0_i32_1 = arith.constant 0 : i32
    return %c0_i32, %c0_i32_0 : i32, i32
  }
  func.func @transform_3(%arg0: i32) -> (i32, i32) {
    %c0_i32 = arith.constant 0 : i32
    %c0_i32_0 = arith.constant 0 : i32
    %c0_i32_1 = arith.constant 0 : i32
    return %c0_i32, %c0_i32_0 : i32, i32
  }
  func.func @transform_4(%arg0: i32) -> (i32, i32, i32) {
    %c0_i32 = arith.constant 0 : i32
    %c0_i32_0 = arith.constant 0 : i32
    %c0_i32_1 = arith.constant 0 : i32
    return %arg0, %c0_i32, %c0_i32_0 : i32, i32, i32
  }
  func.func @transform_5(%arg0: i32) -> (i32, i32, i32) {
    %c0_i32 = arith.constant 0 : i32
    %c0_i32_0 = arith.constant 0 : i32
    %c0_i32_1 = arith.constant 0 : i32
    return %arg0, %c0_i32, %c0_i32_0 : i32, i32, i32
  }
  func.func @transform_6(%arg0: i32) -> (i32, i32, i32) {
    %c0_i32 = arith.constant 0 : i32
    %c0_i32_0 = arith.constant 0 : i32
    %c0_i32_1 = arith.constant 0 : i32
    return %arg0, %c0_i32, %c0_i32_0 : i32, i32, i32
  }
  func.func @transform_7(%arg0: i32) -> (i32, i32, i32) {
    %c0_i32 = arith.constant 0 : i32
    %c0_i32_0 = arith.constant 0 : i32
    %c0_i32_1 = arith.constant 0 : i32
    return %arg0, %c0_i32, %c0_i32_0 : i32, i32, i32
  }
  func.func @transform_8(%arg0: i32) -> (i32, i32, i32) {
    %c0_i32 = arith.constant 0 : i32
    %c0_i32_0 = arith.constant 0 : i32
    %c0_i32_1 = arith.constant 0 : i32
    return %arg0, %c0_i32, %c0_i32_0 : i32, i32, i32
  }
  func.func @transform_9(%arg0: i32) -> (i32, i32, i32) {
    %c0_i32 = arith.constant 0 : i32
    %c0_i32_0 = arith.constant 0 : i32
    %c0_i32_1 = arith.constant 0 : i32
    return %arg0, %c0_i32, %c0_i32_0 : i32, i32, i32
  }
  func.func @transform_10(%arg0: i32) -> (i32, i32, i32) {
    %c0_i32 = arith.constant 0 : i32
    %c0_i32_0 = arith.constant 0 : i32
    %c0_i32_1 = arith.constant 0 : i32
    return %arg0, %c0_i32, %c0_i32_0 : i32, i32, i32
  }
  func.func @transform_11(%arg0: i32) -> (i32, i32, i32) {
    %c0_i32 = arith.constant 0 : i32
    %c0_i32_0 = arith.constant 0 : i32
    %c0_i32_1 = arith.constant 0 : i32
    return %arg0, %c0_i32, %c0_i32_0 : i32, i32, i32
  }
  func.func @transform_12(%arg0: i32) -> (i32, i32, i32) {
    %c0_i32 = arith.constant 0 : i32
    %c0_i32_0 = arith.constant 0 : i32
    %c0_i32_1 = arith.constant 0 : i32
    return %arg0, %c0_i32, %c0_i32_0 : i32, i32, i32
  }
  func.func @transform_13(%arg0: i32) -> (i32, i32, i32) {
    %c0_i32 = arith.constant 0 : i32
    %c0_i32_0 = arith.constant 0 : i32
    %c0_i32_1 = arith.constant 0 : i32
    return %arg0, %c0_i32, %c0_i32_0 : i32, i32, i32
  }
  func.func @transform_14(%arg0: i32) -> (i32, i32, i32) {
    %c0_i32 = arith.constant 0 : i32
    %c0_i32_0 = arith.constant 0 : i32
    %c0_i32_1 = arith.constant 0 : i32
    return %arg0, %c0_i32, %c0_i32_0 : i32, i32, i32
  }
  func.func @transform_15(%arg0: i32) -> (i32, i32, i32) {
    %c0_i32 = arith.constant 0 : i32
    %c0_i32_0 = arith.constant 0 : i32
    %c0_i32_1 = arith.constant 0 : i32
    return %arg0, %c0_i32, %c0_i32_0 : i32, i32, i32
  }
  func.func @transform_16(%arg0: i32) -> (i32, i32) {
    %c0_i32 = arith.constant 0 : i32
    %c0_i32_0 = arith.constant 0 : i32
    %c0_i32_1 = arith.constant 0 : i32
    return %c0_i32, %c0_i32_0 : i32, i32
  }
  func.func @transform_17(%arg0: i32) -> (i32, i32) {
    %c0_i32 = arith.constant 0 : i32
    %c0_i32_0 = arith.constant 0 : i32
    %c0_i32_1 = arith.constant 0 : i32
    return %c0_i32, %c0_i32_0 : i32, i32
  }
  func.func @transform_18(%arg0: i32) -> (i32, i32) {
    %c0_i32 = arith.constant 0 : i32
    %c0_i32_0 = arith.constant 0 : i32
    %c0_i32_1 = arith.constant 0 : i32
    return %c0_i32, %c0_i32_0 : i32, i32
  }
  func.func @transform_19(%arg0: i32) -> (i32, i32) {
    %c0_i32 = arith.constant 0 : i32
    %c0_i32_0 = arith.constant 0 : i32
    %c0_i32_1 = arith.constant 0 : i32
    return %c0_i32, %c0_i32_0 : i32, i32
  }
  func.func @transform_20(%arg0: i32) -> (i32, i32) {
    %c0_i32 = arith.constant 0 : i32
    %c0_i32_0 = arith.constant 0 : i32
    %c0_i32_1 = arith.constant 0 : i32
    return %c0_i32, %c0_i32_0 : i32, i32
  }
}

</mosaic_0001>

<llo_original>
// kernel: tpu_custom_call.1
$region0: #{tpu_custom_call.1}
  #allocation0 [shape = 'u32[]', space=smem, size = 0x4, offset = 0x4, fixed_abs, tag = 'smem constant byte address 0x4 - core index']
  #allocation1 [shape = 'u32[144,128]{1,0:T(1,128)}', space=vmem, size = 0x12000, scoped, tag = 'internal scratch']
  #allocation2 [shape = 'f32[16,128]{1,0:T(8,128)}', space=vmem, size = 0x2000, scoped, tag = 'scratch operand']
  #allocation3 [shape = 'f32[16,128]{1,0:T(8,128)}', space=vmem, size = 0x2000, scoped, tag = 'scratch operand']
  %s0 = inlined_call_operand.hbm [shape: f32[16,128], index: 0, kind: input, shape index: {}]
  %s1 = inlined_call_operand.hbm [shape: f32[2,8], index: 1, kind: input, shape index: {}]
  %s2 = inlined_call_operand.hbm [shape: f32[1,128], index: 2, kind: input, shape index: {}]
  %s3 = inlined_call_operand.hbm [shape: f32[1,128], index: 3, kind: input, shape index: {}]
  %s4 = inlined_call_operand.hbm [shape: bf16[2,128,384], index: 4, kind: input, shape index: {}]
  %s5 = inlined_call_operand.vmem [shape: f32[2,1,384], index: 5, kind: input, shape index: {}]
  %s6 = inlined_call_operand.hbm [shape: bf16[2,128,128], index: 6, kind: input, shape index: {}]
  %s7 = inlined_call_operand.vmem [shape: f32[2,1,128], index: 7, kind: input, shape index: {}]
  %s8 = inlined_call_operand.hbm [shape: f32[2,1,128], index: 8, kind: input, shape index: {}]
  %s9 = inlined_call_operand.hbm [shape: f32[2,1,128], index: 9, kind: input, shape index: {}]
  %s10 = inlined_call_operand.hbm [shape: bf16[2,128,512], index: 10, kind: input, shape index: {}]
  %s11 = inlined_call_operand.vmem [shape: f32[2,1,512], index: 11, kind: input, shape index: {}]
  %s12 = inlined_call_operand.hbm [shape: bf16[2,512,128], index: 12, kind: input, shape index: {}]
  %s13 = inlined_call_operand.vmem [shape: f32[2,1,128], index: 13, kind: input, shape index: {}]
  %s14 = inlined_call_operand.vmem [shape: f32[2,1,128], index: 14, kind: input, shape index: {}]
  %s15 = inlined_call_operand.vmem [shape: f32[2,1,128], index: 15, kind: input, shape index: {}]
  %s16 = inlined_call_operand.hbm [shape: bf16[128,128], index: 16, kind: input, shape index: {}]
  %s17 = inlined_call_operand.vmem [shape: f32[1,128], index: 17, kind: input, shape index: {}]
  %s18 = inlined_call_operand.hbm [shape: bf16[128,128], index: 18, kind: input, shape index: {}]
  %s19 = inlined_call_operand.vmem [shape: f32[1,128], index: 19, kind: input, shape index: {}]
  %s20 = inlined_call_operand.hbm [shape: f32[16,128], index: 20, kind: output, shape index: {}]
  %s21 = sld [smem:[#allocation0]]
  $region169: #{tpu_custom_call.1} parent=0
    _
  %s23 = ssub.s32 1, %s21
  %s24 = scalar_select 0, %s23, %s21
  $region1: #{tpu_custom_call.1} parent=0
    #allocation4 [shape = 'u8[8192]{0}', space=vmem, size = 0x2000, scoped, tag = 'input window, operand 0, single buffered']
    #allocation5 [shape = 's32[2]{0}', space=sflag, size = 0x8, scoped, tag = 'scoped memory for tpu_custom_call.1']
    #allocation6 [shape = 's32[2]{0}', space=sflag, size = 0x8, scoped, tag = 'scoped memory for tpu_custom_call.1']
    #allocation7 [shape = 'u8[1024]{0}', space=vmem, size = 0x400, scoped, tag = 'input window, operand 1, single buffered']
    #allocation8 [shape = 's32[1]{0}', space=sflag, size = 0x4, scoped, tag = 'scoped memory for tpu_custom_call.1']
    #allocation9 [shape = 'u8[512]{0}', space=vmem, size = 0x400, scoped, tag = 'input window, operand 2, single buffered']
    #allocation10 [shape = 'u8[512]{0}', space=vmem, size = 0x400, scoped, tag = 'input window, operand 3, single buffered']
    #allocation11 [shape = 's32[1]{0}', space=sflag, size = 0x4, scoped, tag = 'scoped memory for tpu_custom_call.1']
    #allocation12 [shape = 'u8[196608]{0}', space=vmem, size = 0x30000, scoped, tag = 'input window, operand 4']
    #allocation13 [shape = 'u8[65536]{0}', space=vmem, size = 0x10000, scoped, tag = 'input window, operand 6']
    #allocation14 [shape = 'u8[1024]{0}', space=vmem, size = 0x400, scoped, tag = 'input window, operand 8']
    #allocation15 [shape = 'u8[1024]{0}', space=vmem, size = 0x400, scoped, tag = 'input window, operand 9']
    #allocation16 [shape = 'u8[262144]{0}', space=vmem, size = 0x40000, scoped, tag = 'input window, operand 10']
    #allocation17 [shape = 'u8[262144]{0}', space=vmem, size = 0x40000, scoped, tag = 'input window, operand 12']
    #allocation18 [shape = 'u8[32768]{0}', space=vmem, size = 0x8000, scoped, tag = 'input window, operand 16, single buffered']
    #allocation19 [shape = 'u8[32768]{0}', space=vmem, size = 0x8000, scoped, tag = 'input window, operand 18, single buffered']
    #allocation20 [shape = 'u8[8192]{0}', space=vmem, size = 0x2000, scoped, tag = 'output window, operand 0, single buffered']
    %25 = vsyncpa [#allocation5], 0
    %26 = vsyncpa [#allocation8], 0
    %27 = vsyncpa [#allocation11], 0
    %28 = vsyncpa [#allocation6], 0
    loop: start=0, step=1, limit=4
    $region2: #{tpu_custom_call.1} parent=1 // loop_pre_header
      _
    $region3: #{tpu_custom_call.1} parent=1 // loop_header
      %s30 = sphi 0, %s34
      %p31 = scmp.ge.s32.totalorder %s30, 4
      %s38 = sphi 0, %s38
      %s40 = sphi 0, %s38
      %s41 = sphi 0, %s40
      %s55 = sphi 0, %s41
      %s59 = sphi 0, %s59
      %s61 = sphi 0, %s59
      %s62 = sphi 0, %s61
      %s76 = sphi 0, %s62
      %s80 = sphi 0, %s80
      %s82 = sphi 0, %s80
      %s83 = sphi 0, %s82
      %s97 = sphi 0, %s83
      %s101 = sphi 0, %s101
      %s103 = sphi 0, %s101
      %s104 = sphi 0, %s103
      %s118 = sphi 0, %s104
      %s124 = sphi 0, %s126
      %s127 = sphi 0, %s124
      %s128 = sphi 0, %s127
      %s144 = sphi 0, %s128
      %s150 = sphi 0, %s152
      %s153 = sphi 0, %s150
      %s154 = sphi 0, %s153
      %s170 = sphi 0, %s154
      %s176 = sphi 0, %s178
      %s179 = sphi 0, %s176
      %s180 = sphi 0, %s179
      %s196 = sphi 0, %s180
      %s202 = sphi 0, %s204
      %s205 = sphi 0, %s202
      %s206 = sphi 0, %s205
      %s222 = sphi 0, %s206
      %s228 = sphi 0, %s230
      %s231 = sphi 0, %s228
      %s232 = sphi 0, %s231
      %s248 = sphi 0, %s232
      %s254 = sphi 0, %s256
      %s257 = sphi 0, %s254
      %s258 = sphi 0, %s257
      %s274 = sphi 0, %s258
      %s280 = sphi 0, %s282
      %s283 = sphi 0, %s280
      %s284 = sphi 0, %s283
      %s300 = sphi 0, %s284
      %s306 = sphi 0, %s308
      %s309 = sphi 0, %s306
      %s310 = sphi 0, %s309
      %s326 = sphi 0, %s310
      %s332 = sphi 0, %s334
      %s335 = sphi 0, %s332
      %s336 = sphi 0, %s335
      %s352 = sphi 0, %s336
      %s358 = sphi 0, %s360
      %s361 = sphi 0, %s358
      %s362 = sphi 0, %s361
      %s378 = sphi 0, %s362
      %s384 = sphi 0, %s386
      %s387 = sphi 0, %s384
      %s388 = sphi 0, %s387
      %s404 = sphi 0, %s388
      %s410 = sphi 0, %s412
      %s413 = sphi 0, %s410
      %s414 = sphi 0, %s413
      %s430 = sphi 0, %s414
      %s434 = sphi 0, %s434
      %s436 = sphi 0, %s434
      %s437 = sphi 0, %s436
      %s451 = sphi 0, %s437
      %s455 = sphi 0, %s455
      %s457 = sphi 0, %s455
      %s458 = sphi 0, %s457
      %s472 = sphi 0, %s458
      %s476 = sphi 0, %s476
      %s478 = sphi 0, %s476
      %s479 = sphi 0, %s478
      %s493 = sphi 0, %s479
      %s497 = sphi 0, %s497
      %s499 = sphi 0, %s497
      %s500 = sphi 0, %s499
      %s514 = sphi 0, %s500
      %s518 = sphi 0, %s518
      %s520 = sphi 0, %s518
      %s521 = sphi 0, %s520
      %s535 = sphi 0, %s521
    $region4: #{tpu_custom_call.1} parent=1 // loop_header_branch
      %33 = sbr.rel (%p31) target = $region8
    $region5: #{tpu_custom_call.1} parent=1 // loop_body
      %s35 = ssub.s32 %s30, 1
      %s36 = ssub.s32 %s30, 2
      %s37 = sadd.s32 %s30, 1
      %s39 = sadd.s32 %s38, 1
      %p42 = scmp.eq.s32.totalorder %s30, 1
      %p43 = scmp.ne.s32.totalorder %s38, %s40
      %p44 = scmp.eq.s32.totalorder %s30, 0
      %p45 = por %p43, %p44
      %p46 = scmp.ne.s32.totalorder %s38, %s40
      %p47 = scmp.eq.s32.totalorder %s35, 1
      %p48 = por %p46, %p47
      %p49 = scmp.ne.s32.totalorder %s40, %s41
      %p50 = scmp.eq.s32.totalorder %s35, 0
      %p51 = por %p49, %p50
      %p52 = scmp.ne.s32.totalorder %s40, %s41
      %p53 = scmp.eq.s32.totalorder %s36, 1
      %p54 = por %p52, %p53
      %p56 = scmp.ne.s32.totalorder %s41, %s55
      %p57 = scmp.eq.s32.totalorder %s36, 0
      %p58 = por %p56, %p57
      %s60 = sadd.s32 %s59, 1
      %p63 = scmp.eq.s32.totalorder %s30, 1
      %p64 = scmp.ne.s32.totalorder %s59, %s61
      %p65 = scmp.eq.s32.totalorder %s30, 0
      %p66 = por %p64, %p65
      %p67 = scmp.ne.s32.totalorder %s59, %s61
      %p68 = scmp.eq.s32.totalorder %s35, 1
      %p69 = por %p67, %p68
      %p70 = scmp.ne.s32.totalorder %s61, %s62
      %p71 = scmp.eq.s32.totalorder %s35, 0
      %p72 = por %p70, %p71
      %p73 = scmp.ne.s32.totalorder %s61, %s62
      %p74 = scmp.eq.s32.totalorder %s36, 1
      %p75 = por %p73, %p74
      %p77 = scmp.ne.s32.totalorder %s62, %s76
      %p78 = scmp.eq.s32.totalorder %s36, 0
      %p79 = por %p77, %p78
      %s81 = sadd.s32 %s80, 1
      %p84 = scmp.eq.s32.totalorder %s30, 1
      %p85 = scmp.ne.s32.totalorder %s80, %s82
      %p86 = scmp.eq.s32.totalorder %s30, 0
      %p87 = por %p85, %p86
      %p88 = scmp.ne.s32.totalorder %s80, %s82
      %p89 = scmp.eq.s32.totalorder %s35, 1
      %p90 = por %p88, %p89
      %p91 = scmp.ne.s32.totalorder %s82, %s83
      %p92 = scmp.eq.s32.totalorder %s35, 0
      %p93 = por %p91, %p92
      %p94 = scmp.ne.s32.totalorder %s82, %s83
      %p95 = scmp.eq.s32.totalorder %s36, 1
      %p96 = por %p94, %p95
      %p98 = scmp.ne.s32.totalorder %s83, %s97
      %p99 = scmp.eq.s32.totalorder %s36, 0
      %p100 = por %p98, %p99
      %s102 = sadd.s32 %s101, 1
      %p105 = scmp.eq.s32.totalorder %s30, 1
      %p106 = scmp.ne.s32.totalorder %s101, %s103
      %p107 = scmp.eq.s32.totalorder %s30, 0
      %p108 = por %p106, %p107
      %p109 = scmp.ne.s32.totalorder %s101, %s103
      %p110 = scmp.eq.s32.totalorder %s35, 1
      %p111 = por %p109, %p110
      %p112 = scmp.ne.s32.totalorder %s103, %s104
      %p113 = scmp.eq.s32.totalorder %s35, 0
      %p114 = por %p112, %p113
      %p115 = scmp.ne.s32.totalorder %s103, %s104
      %p116 = scmp.eq.s32.totalorder %s36, 1
      %p117 = por %p115, %p116
      %p119 = scmp.ne.s32.totalorder %s104, %s118
      %p120 = scmp.eq.s32.totalorder %s36, 0
      %p121 = por %p119, %p120
      %s122 = ssub.s32 %s30, %s37
      %p123 = scmp.eq.s32.totalorder %s122, 0
      %s125 = sadd.s32 %s124, 1
      %s126 = scalar_select %p123, %s124, %s125
      %p129 = pneg %p123
      %p130 = scmp.eq.s32.totalorder %s30, 1
      %p131 = por %p129, %p130
      %p132 = scmp.ne.s32.totalorder %s124, %s127
      %p133 = scmp.eq.s32.totalorder %s30, 0
      %p134 = por %p132, %p133
      %p135 = scmp.ne.s32.totalorder %s124, %s127
      %p136 = scmp.eq.s32.totalorder %s35, 1
      %p137 = por %p135, %p136
      %p138 = scmp.ne.s32.totalorder %s127, %s128
      %p139 = scmp.eq.s32.totalorder %s35, 0
      %p140 = por %p138, %p139
      %p141 = scmp.ne.s32.totalorder %s127, %s128
      %p142 = scmp.eq.s32.totalorder %s36, 1
      %p143 = por %p141, %p142
      %p145 = scmp.ne.s32.totalorder %s128, %s144
      %p146 = scmp.eq.s32.totalorder %s36, 0
      %p147 = por %p145, %p146
      %s148 = ssub.s32 %s30, %s37
      %p149 = scmp.eq.s32.totalorder %s148, 0
      %s151 = sadd.s32 %s150, 1
      %s152 = scalar_select %p149, %s150, %s151
      %p155 = pneg %p149
      %p156 = scmp.eq.s32.totalorder %s30, 1
      %p157 = por %p155, %p156
      %p158 = scmp.ne.s32.totalorder %s150, %s153
      %p159 = scmp.eq.s32.totalorder %s30, 0
      %p160 = por %p158, %p159
      %p161 = scmp.ne.s32.totalorder %s150, %s153
      %p162 = scmp.eq.s32.totalorder %s35, 1
      %p163 = por %p161, %p162
      %p164 = scmp.ne.s32.totalorder %s153, %s154
      %p165 = scmp.eq.s32.totalorder %s35, 0
      %p166 = por %p164, %p165
      %p167 = scmp.ne.s32.totalorder %s153, %s154
      %p168 = scmp.eq.s32.totalorder %s36, 1
      %p169 = por %p167, %p168
      %p171 = scmp.ne.s32.totalorder %s154, %s170
      %p172 = scmp.eq.s32.totalorder %s36, 0
      %p173 = por %p171, %p172
      %s174 = ssub.s32 %s30, %s37
      %p175 = scmp.eq.s32.totalorder %s174, 0
      %s177 = sadd.s32 %s176, 1
      %s178 = scalar_select %p175, %s176, %s177
      %p181 = pneg %p175
      %p182 = scmp.eq.s32.totalorder %s30, 1
      %p183 = por %p181, %p182
      %p184 = scmp.ne.s32.totalorder %s176, %s179
      %p185 = scmp.eq.s32.totalorder %s30, 0
      %p186 = por %p184, %p185
      %p187 = scmp.ne.s32.totalorder %s176, %s179
      %p188 = scmp.eq.s32.totalorder %s35, 1
      %p189 = por %p187, %p188
      %p190 = scmp.ne.s32.totalorder %s179, %s180
      %p191 = scmp.eq.s32.totalorder %s35, 0
      %p192 = por %p190, %p191
      %p193 = scmp.ne.s32.totalorder %s179, %s180
      %p194 = scmp.eq.s32.totalorder %s36, 1
      %p195 = por %p193, %p194
      %p197 = scmp.ne.s32.totalorder %s180, %s196
      %p198 = scmp.eq.s32.totalorder %s36, 0
      %p199 = por %p197, %p198
      %s200 = ssub.s32 %s30, %s37
      %p201 = scmp.eq.s32.totalorder %s200, 0
      %s203 = sadd.s32 %s202, 1
      %s204 = scalar_select %p201, %s202, %s203
      %p207 = pneg %p201
      %p208 = scmp.eq.s32.totalorder %s30, 1
      %p209 = por %p207, %p208
      %p210 = scmp.ne.s32.totalorder %s202, %s205
      %p211 = scmp.eq.s32.totalorder %s30, 0
      %p212 = por %p210, %p211
      %p213 = scmp.ne.s32.totalorder %s202, %s205
      %p214 = scmp.eq.s32.totalorder %s35, 1
      %p215 = por %p213, %p214
      %p216 = scmp.ne.s32.totalorder %s205, %s206
      %p217 = scmp.eq.s32.totalorder %s35, 0
      %p218 = por %p216, %p217
      %p219 = scmp.ne.s32.totalorder %s205, %s206
      %p220 = scmp.eq.s32.totalorder %s36, 1
      %p221 = por %p219, %p220
      %p223 = scmp.ne.s32.totalorder %s206, %s222
      %p224 = scmp.eq.s32.totalorder %s36, 0
      %p225 = por %p223, %p224
      %s226 = ssub.s32 %s30, %s37
      %p227 = scmp.eq.s32.totalorder %s226, 0
      %s229 = sadd.s32 %s228, 1
      %s230 = scalar_select %p227, %s228, %s229
      %p233 = pneg %p227
      %p234 = scmp.eq.s32.totalorder %s30, 1
      %p235 = por %p233, %p234
      %p236 = scmp.ne.s32.totalorder %s228, %s231
      %p237 = scmp.eq.s32.totalorder %s30, 0
      %p238 = por %p236, %p237
      %p239 = scmp.ne.s32.totalorder %s228, %s231
      %p240 = scmp.eq.s32.totalorder %s35, 1
      %p241 = por %p239, %p240
      %p242 = scmp.ne.s32.totalorder %s231, %s232
      %p243 = scmp.eq.s32.totalorder %s35, 0
      %p244 = por %p242, %p243
      %p245 = scmp.ne.s32.totalorder %s231, %s232
      %p246 = scmp.eq.s32.totalorder %s36, 1
      %p247 = por %p245, %p246
      %p249 = scmp.ne.s32.totalorder %s232, %s248
      %p250 = scmp.eq.s32.totalorder %s36, 0
      %p251 = por %p249, %p250
      %s252 = ssub.s32 %s30, %s37
      %p253 = scmp.eq.s32.totalorder %s252, 0
      %s255 = sadd.s32 %s254, 1
      %s256 = scalar_select %p253, %s254, %s255
      %p259 = pneg %p253
      %p260 = scmp.eq.s32.totalorder %s30, 1
      %p261 = por %p259, %p260
      %p262 = scmp.ne.s32.totalorder %s254, %s257
      %p263 = scmp.eq.s32.totalorder %s30, 0
      %p264 = por %p262, %p263
      %p265 = scmp.ne.s32.totalorder %s254, %s257
      %p266 = scmp.eq.s32.totalorder %s35, 1
      %p267 = por %p265, %p266
      %p268 = scmp.ne.s32.totalorder %s257, %s258
      %p269 = scmp.eq.s32.totalorder %s35, 0
      %p270 = por %p268, %p269
      %p271 = scmp.ne.s32.totalorder %s257, %s258
      %p272 = scmp.eq.s32.totalorder %s36, 1
      %p273 = por %p271, %p272
      %p275 = scmp.ne.s32.totalorder %s258, %s274
      %p276 = scmp.eq.s32.totalorder %s36, 0
      %p277 = por %p275, %p276
      %s278 = ssub.s32 %s30, %s37
      %p279 = scmp.eq.s32.totalorder %s278, 0
      %s281 = sadd.s32 %s280, 1
      %s282 = scalar_select %p279, %s280, %s281
      %p285 = pneg %p279
      %p286 = scmp.eq.s32.totalorder %s30, 1
      %p287 = por %p285, %p286
      %p288 = scmp.ne.s32.totalorder %s280, %s283
      %p289 = scmp.eq.s32.totalorder %s30, 0
      %p290 = por %p288, %p289
      %p291 = scmp.ne.s32.totalorder %s280, %s283
      %p292 = scmp.eq.s32.totalorder %s35, 1
      %p293 = por %p291, %p292
      %p294 = scmp.ne.s32.totalorder %s283, %s284
      %p295 = scmp.eq.s32.totalorder %s35, 0
      %p296 = por %p294, %p295
      %p297 = scmp.ne.s32.totalorder %s283, %s284
      %p298 = scmp.eq.s32.totalorder %s36, 1
      %p299 = por %p297, %p298
      %p301 = scmp.ne.s32.totalorder %s284, %s300
      %p302 = scmp.eq.s32.totalorder %s36, 0
      %p303 = por %p301, %p302
      %s304 = ssub.s32 %s30, %s37
      %p305 = scmp.eq.s32.totalorder %s304, 0
      %s307 = sadd.s32 %s306, 1
      %s308 = scalar_select %p305, %s306, %s307
      %p311 = pneg %p305
      %p312 = scmp.eq.s32.totalorder %s30, 1
      %p313 = por %p311, %p312
      %p314 = scmp.ne.s32.totalorder %s306, %s309
      %p315 = scmp.eq.s32.totalorder %s30, 0
      %p316 = por %p314, %p315
      %p317 = scmp.ne.s32.totalorder %s306, %s309
      %p318 = scmp.eq.s32.totalorder %s35, 1
      %p319 = por %p317, %p318
      %p320 = scmp.ne.s32.totalorder %s309, %s310
      %p321 = scmp.eq.s32.totalorder %s35, 0
      %p322 = por %p320, %p321
      %p323 = scmp.ne.s32.totalorder %s309, %s310
      %p324 = scmp.eq.s32.totalorder %s36, 1
      %p325 = por %p323, %p324
      %p327 = scmp.ne.s32.totalorder %s310, %s326
      %p328 = scmp.eq.s32.totalorder %s36, 0
      %p329 = por %p327, %p328
      %s330 = ssub.s32 %s30, %s37
      %p331 = scmp.eq.s32.totalorder %s330, 0
      %s333 = sadd.s32 %s332, 1
      %s334 = scalar_select %p331, %s332, %s333
      %p337 = pneg %p331
      %p338 = scmp.eq.s32.totalorder %s30, 1
      %p339 = por %p337, %p338
      %p340 = scmp.ne.s32.totalorder %s332, %s335
      %p341 = scmp.eq.s32.totalorder %s30, 0
      %p342 = por %p340, %p341
      %p343 = scmp.ne.s32.totalorder %s332, %s335
      %p344 = scmp.eq.s32.totalorder %s35, 1
      %p345 = por %p343, %p344
      %p346 = scmp.ne.s32.totalorder %s335, %s336
      %p347 = scmp.eq.s32.totalorder %s35, 0
      %p348 = por %p346, %p347
      %p349 = scmp.ne.s32.totalorder %s335, %s336
      %p350 = scmp.eq.s32.totalorder %s36, 1
      %p351 = por %p349, %p350
      %p353 = scmp.ne.s32.totalorder %s336, %s352
      %p354 = scmp.eq.s32.totalorder %s36, 0
      %p355 = por %p353, %p354
      %s356 = ssub.s32 %s30, %s37
      %p357 = scmp.eq.s32.totalorder %s356, 0
      %s359 = sadd.s32 %s358, 1
      %s360 = scalar_select %p357, %s358, %s359
      %p363 = pneg %p357
      %p364 = scmp.eq.s32.totalorder %s30, 1
      %p365 = por %p363, %p364
      %p366 = scmp.ne.s32.totalorder %s358, %s361
      %p367 = scmp.eq.s32.totalorder %s30, 0
      %p368 = por %p366, %p367
      %p369 = scmp.ne.s32.totalorder %s358, %s361
      %p370 = scmp.eq.s32.totalorder %s35, 1
      %p371 = por %p369, %p370
      %p372 = scmp.ne.s32.totalorder %s361, %s362
      %p373 = scmp.eq.s32.totalorder %s35, 0
      %p374 = por %p372, %p373
      %p375 = scmp.ne.s32.totalorder %s361, %s362
      %p376 = scmp.eq.s32.totalorder %s36, 1
      %p377 = por %p375, %p376
      %p379 = scmp.ne.s32.totalorder %s362, %s378
      %p380 = scmp.eq.s32.totalorder %s36, 0
      %p381 = por %p379, %p380
      %s382 = ssub.s32 %s30, %s37
      %p383 = scmp.eq.s32.totalorder %s382, 0
      %s385 = sadd.s32 %s384, 1
      %s386 = scalar_select %p383, %s384, %s385
      %p389 = pneg %p383
      %p390 = scmp.eq.s32.totalorder %s30, 1
      %p391 = por %p389, %p390
      %p392 = scmp.ne.s32.totalorder %s384, %s387
      %p393 = scmp.eq.s32.totalorder %s30, 0
      %p394 = por %p392, %p393
      %p395 = scmp.ne.s32.totalorder %s384, %s387
      %p396 = scmp.eq.s32.totalorder %s35, 1
      %p397 = por %p395, %p396
      %p398 = scmp.ne.s32.totalorder %s387, %s388
      %p399 = scmp.eq.s32.totalorder %s35, 0
      %p400 = por %p398, %p399
      %p401 = scmp.ne.s32.totalorder %s387, %s388
      %p402 = scmp.eq.s32.totalorder %s36, 1
      %p403 = por %p401, %p402
      %p405 = scmp.ne.s32.totalorder %s388, %s404
      %p406 = scmp.eq.s32.totalorder %s36, 0
      %p407 = por %p405, %p406
      %s408 = ssub.s32 %s30, %s37
      %p409 = scmp.eq.s32.totalorder %s408, 0
      %s411 = sadd.s32 %s410, 1
      %s412 = scalar_select %p409, %s410, %s411
      %p415 = pneg %p409
      %p416 = scmp.eq.s32.totalorder %s30, 1
      %p417 = por %p415, %p416
      %p418 = scmp.ne.s32.totalorder %s410, %s413
      %p419 = scmp.eq.s32.totalorder %s30, 0
      %p420 = por %p418, %p419
      %p421 = scmp.ne.s32.totalorder %s410, %s413
      %p422 = scmp.eq.s32.totalorder %s35, 1
      %p423 = por %p421, %p422
      %p424 = scmp.ne.s32.totalorder %s413, %s414
      %p425 = scmp.eq.s32.totalorder %s35, 0
      %p426 = por %p424, %p425
      %p427 = scmp.ne.s32.totalorder %s413, %s414
      %p428 = scmp.eq.s32.totalorder %s36, 1
      %p429 = por %p427, %p428
      %p431 = scmp.ne.s32.totalorder %s414, %s430
      %p432 = scmp.eq.s32.totalorder %s36, 0
      %p433 = por %p431, %p432
      %s435 = sadd.s32 %s434, 1
      %p438 = scmp.eq.s32.totalorder %s30, 1
      %p439 = scmp.ne.s32.totalorder %s434, %s436
      %p440 = scmp.eq.s32.totalorder %s30, 0
      %p441 = por %p439, %p440
      %p442 = scmp.ne.s32.totalorder %s434, %s436
      %p443 = scmp.eq.s32.totalorder %s35, 1
      %p444 = por %p442, %p443
      %p445 = scmp.ne.s32.totalorder %s436, %s437
      %p446 = scmp.eq.s32.totalorder %s35, 0
      %p447 = por %p445, %p446
      %p448 = scmp.ne.s32.totalorder %s436, %s437
      %p449 = scmp.eq.s32.totalorder %s36, 1
      %p450 = por %p448, %p449
      %p452 = scmp.ne.s32.totalorder %s437, %s451
      %p453 = scmp.eq.s32.totalorder %s36, 0
      %p454 = por %p452, %p453
      %s456 = sadd.s32 %s455, 1
      %p459 = scmp.eq.s32.totalorder %s30, 1
      %p460 = scmp.ne.s32.totalorder %s455, %s457
      %p461 = scmp.eq.s32.totalorder %s30, 0
      %p462 = por %p460, %p461
      %p463 = scmp.ne.s32.totalorder %s455, %s457
      %p464 = scmp.eq.s32.totalorder %s35, 1
      %p465 = por %p463, %p464
      %p466 = scmp.ne.s32.totalorder %s457, %s458
      %p467 = scmp.eq.s32.totalorder %s35, 0
      %p468 = por %p466, %p467
      %p469 = scmp.ne.s32.totalorder %s457, %s458
      %p470 = scmp.eq.s32.totalorder %s36, 1
      %p471 = por %p469, %p470
      %p473 = scmp.ne.s32.totalorder %s458, %s472
      %p474 = scmp.eq.s32.totalorder %s36, 0
      %p475 = por %p473, %p474
      %s477 = sadd.s32 %s476, 1
      %p480 = scmp.eq.s32.totalorder %s30, 1
      %p481 = scmp.ne.s32.totalorder %s476, %s478
      %p482 = scmp.eq.s32.totalorder %s30, 0
      %p483 = por %p481, %p482
      %p484 = scmp.ne.s32.totalorder %s476, %s478
      %p485 = scmp.eq.s32.totalorder %s35, 1
      %p486 = por %p484, %p485
      %p487 = scmp.ne.s32.totalorder %s478, %s479
      %p488 = scmp.eq.s32.totalorder %s35, 0
      %p489 = por %p487, %p488
      %p490 = scmp.ne.s32.totalorder %s478, %s479
      %p491 = scmp.eq.s32.totalorder %s36, 1
      %p492 = por %p490, %p491
      %p494 = scmp.ne.s32.totalorder %s479, %s493
      %p495 = scmp.eq.s32.totalorder %s36, 0
      %p496 = por %p494, %p495
      %s498 = sadd.s32 %s497, 1
      %p501 = scmp.eq.s32.totalorder %s30, 1
      %p502 = scmp.ne.s32.totalorder %s497, %s499
      %p503 = scmp.eq.s32.totalorder %s30, 0
      %p504 = por %p502, %p503
      %p505 = scmp.ne.s32.totalorder %s497, %s499
      %p506 = scmp.eq.s32.totalorder %s35, 1
      %p507 = por %p505, %p506
      %p508 = scmp.ne.s32.totalorder %s499, %s500
      %p509 = scmp.eq.s32.totalorder %s35, 0
      %p510 = por %p508, %p509
      %p511 = scmp.ne.s32.totalorder %s499, %s500
      %p512 = scmp.eq.s32.totalorder %s36, 1
      %p513 = por %p511, %p512
      %p515 = scmp.ne.s32.totalorder %s500, %s514
      %p516 = scmp.eq.s32.totalorder %s36, 0
      %p517 = por %p515, %p516
      %s519 = sadd.s32 %s518, 1
      %p522 = scmp.eq.s32.totalorder %s30, 1
      %p523 = scmp.ne.s32.totalorder %s518, %s520
      %p524 = scmp.eq.s32.totalorder %s30, 0
      %p525 = por %p523, %p524
      %p526 = scmp.ne.s32.totalorder %s518, %s520
      %p527 = scmp.eq.s32.totalorder %s35, 1
      %p528 = por %p526, %p527
      %p529 = scmp.ne.s32.totalorder %s520, %s521
      %p530 = scmp.eq.s32.totalorder %s35, 0
      %p531 = por %p529, %p530
      %p532 = scmp.ne.s32.totalorder %s520, %s521
      %p533 = scmp.eq.s32.totalorder %s36, 1
      %p534 = por %p532, %p533
      %p536 = scmp.ne.s32.totalorder %s521, %s535
      %p537 = scmp.eq.s32.totalorder %s36, 0
      %p538 = por %p536, %p537
      %p539 = scmp.le.s32.totalorder 1, %s30
      %p540 = scmp.lt.s32.totalorder %s30, 3
      %p541 = pnand %p539, %p540
      %p542 = pneg %p541
      // Predicated region
      $region9: #{tpu_custom_call.1} parent=5 // pred_check
        _
      $region10: #{tpu_custom_call.1} parent=5 // pred_check_branch
        %544 = sbr.rel (%p541) target = $region12
      $region11: #{tpu_custom_call.1} parent=5 // pred_region
        %s545 = ssub.s32 %s30, 1
        // Predicated region
        $region13: #{tpu_custom_call.1} parent=11 // pred_check
          %p546 = pneg %p51
        $region14: #{tpu_custom_call.1} parent=11 // pred_check_branch
          %548 = sbr.rel (%p546) target = $region16
        $region15: #{tpu_custom_call.1} parent=11 // pred_region
          %s550 = ssub.s32 256, 256
          %551 = vsyncadd [#allocation5], %s550
          %s552 = sshll.u32 [#allocation4], 4
          %s553 = int_to_ptr.vmem [resolvable:$true] %s552
          %558 = dma.hbm_to_vmem [thread:$0]  %s0, 256, %s553, [#allocation5], 128, 128, 8
        $region16: #{tpu_custom_call.1} parent=11 // pred_fallthru
          _
        // Predicated region
        $region17: #{tpu_custom_call.1} parent=11 // pred_check
          %p559 = pneg %p72
        $region18: #{tpu_custom_call.1} parent=11 // pred_check_branch
          %561 = sbr.rel (%p559) target = $region20
        $region19: #{tpu_custom_call.1} parent=11 // pred_region
          %s563 = ssub.s32 32, 32
          %564 = vsyncadd [#allocation8], %s563
          %s566 = sshll.u32 [#allocation7], 4
          %s567 = int_to_ptr.vmem [resolvable:$true] %s566
          %569 = dma.hbm_to_vmem [thread:$0]  %s1, 32, %s567, [#allocation8]
        $region20: #{tpu_custom_call.1} parent=11 // pred_fallthru
          _
        // Predicated region
        $region21: #{tpu_custom_call.1} parent=11 // pred_check
          %p570 = pneg %p93
        $region22: #{tpu_custom_call.1} parent=11 // pred_check_branch
          %572 = sbr.rel (%p570) target = $region24
        $region23: #{tpu_custom_call.1} parent=11 // pred_region
          %s574 = ssub.s32 16, 16
          %575 = vsyncadd [#allocation8], %s574
          %s577 = sshll.u32 [#allocation9], 4
          %s578 = int_to_ptr.vmem [resolvable:$true] %s577
          %580 = dma.hbm_to_vmem [thread:$0]  %s2, 16, %s578, [#allocation8]
        $region24: #{tpu_custom_call.1} parent=11 // pred_fallthru
          _
        // Predicated region
        $region25: #{tpu_custom_call.1} parent=11 // pred_check
          %p581 = pneg %p114
        $region26: #{tpu_custom_call.1} parent=11 // pred_check_branch
          %583 = sbr.rel (%p581) target = $region28
        $region27: #{tpu_custom_call.1} parent=11 // pred_region
          %s585 = ssub.s32 16, 16
          %586 = vsyncadd [#allocation11], %s585
          %s588 = sshll.u32 [#allocation10], 4
          %s589 = int_to_ptr.vmem [resolvable:$true] %s588
          %591 = dma.hbm_to_vmem [thread:$0]  %s3, 16, %s589, [#allocation11]
        $region28: #{tpu_custom_call.1} parent=11 // pred_fallthru
          _
        // Predicated region
        $region29: #{tpu_custom_call.1} parent=11 // pred_check
          %p592 = pneg %p447
        $region30: #{tpu_custom_call.1} parent=11 // pred_check_branch
          %594 = sbr.rel (%p592) target = $region32
        $region31: #{tpu_custom_call.1} parent=11 // pred_region
          %s596 = ssub.s32 1024, 1024
          %597 = vsyncadd [#allocation8], %s596
          %s598 = sshll.u32 [#allocation18], 4
          %s599 = int_to_ptr.vmem [resolvable:$true] %s598
          %604 = dma.hbm_to_vmem [thread:$0]  %s16, 1024, %s599, [#allocation8], 64, 64, 4
        $region32: #{tpu_custom_call.1} parent=11 // pred_fallthru
          _
        // Predicated region
        $region33: #{tpu_custom_call.1} parent=11 // pred_check
          %p605 = pneg %p468
        $region34: #{tpu_custom_call.1} parent=11 // pred_check_branch
          %607 = sbr.rel (%p605) target = $region36
        $region35: #{tpu_custom_call.1} parent=11 // pred_region
          _
        $region36: #{tpu_custom_call.1} parent=11 // pred_fallthru
          _
        // Predicated region
        $region37: #{tpu_custom_call.1} parent=11 // pred_check
          %p608 = pneg %p489
        $region38: #{tpu_custom_call.1} parent=11 // pred_check_branch
          %610 = sbr.rel (%p608) target = $region40
        $region39: #{tpu_custom_call.1} parent=11 // pred_region
          %s612 = ssub.s32 1024, 1024
          %613 = vsyncadd [#allocation11], %s612
          %s614 = sshll.u32 [#allocation19], 4
          %s615 = int_to_ptr.vmem [resolvable:$true] %s614
          %620 = dma.hbm_to_vmem [thread:$0]  %s18, 1024, %s615, [#allocation11], 64, 64, 4
        $region40: #{tpu_custom_call.1} parent=11 // pred_fallthru
          _
        // Predicated region
        $region41: #{tpu_custom_call.1} parent=11 // pred_check
          %p621 = pneg %p510
        $region42: #{tpu_custom_call.1} parent=11 // pred_check_branch
          %623 = sbr.rel (%p621) target = $region44
        $region43: #{tpu_custom_call.1} parent=11 // pred_region
          _
        $region44: #{tpu_custom_call.1} parent=11 // pred_fallthru
          _
      $region12: #{tpu_custom_call.1} parent=5 // pred_fallthru
        _
      %p624 = scmp.lt.s32.totalorder %s30, 2
      // Predicated region
      $region45: #{tpu_custom_call.1} parent=5 // pred_check
        %p625 = pneg %p624
      $region46: #{tpu_custom_call.1} parent=5 // pred_check_branch
        %627 = sbr.rel (%p625) target = $region48
      $region47: #{tpu_custom_call.1} parent=5 // pred_region
        // Predicated region
        $region49: #{tpu_custom_call.1} parent=47 // pred_check
          %p628 = pneg %p134
        $region50: #{tpu_custom_call.1} parent=47 // pred_check_branch
          %630 = sbr.rel (%p628) target = $region52
        $region51: #{tpu_custom_call.1} parent=47 // pred_region
          %s631 = sand.u32 %s30, 1
          %s632 = scalar_lea.sflag [#allocation5], %s631
          %s633 = sand.u32 %s124, 1
          %s634 = smul.addr %s633, 192
          %s635 = scalar_lea.vmem [#allocation12], %s634
          %s637 = ssub.s32 3072, 3072
          %638 = vsyncadd %s632, %s637
          %s639 = smul.addr %s30, 48
          %s640 = smul.addr %s639, 64
          %s641 = scalar_lea.hbm %s4, %s640
          %s642 = sshll.u32 %s635, 4
          %s643 = int_to_ptr.vmem [resolvable:$true] %s642
          %648 = dma.hbm_to_vmem [thread:$0]  %s641, 3072, %s643, %s632, 192, 192, 12
        $region52: #{tpu_custom_call.1} parent=47 // pred_fallthru
          _
        // Predicated region
        $region53: #{tpu_custom_call.1} parent=47 // pred_check
          %p649 = pneg %p160
        $region54: #{tpu_custom_call.1} parent=47 // pred_check_branch
          %651 = sbr.rel (%p649) target = $region56
        $region55: #{tpu_custom_call.1} parent=47 // pred_region
          %p652 = scmp.lt.s32.totalorder %s30, 1
          %s653 = scalar_select %p652, %s30, 1
          %s654 = smul.addr %s653, 3
          %s655 = scalar_lea.vmem %s5, %s654
        $region56: #{tpu_custom_call.1} parent=47 // pred_fallthru
          _
        // Predicated region
        $region57: #{tpu_custom_call.1} parent=47 // pred_check
          %p656 = pneg %p186
        $region58: #{tpu_custom_call.1} parent=47 // pred_check_branch
          %658 = sbr.rel (%p656) target = $region60
        $region59: #{tpu_custom_call.1} parent=47 // pred_region
          %s659 = sand.u32 %s30, 1
          %s660 = scalar_lea.sflag [#allocation5], %s659
          %s661 = sand.u32 %s176, 1
          %s662 = smul.addr %s661, 64
          %s663 = scalar_lea.vmem [#allocation13], %s662
          %s665 = ssub.s32 1024, 1024
          %666 = vsyncadd %s660, %s665
          %s667 = smul.addr %s30, 16
          %s668 = smul.addr %s667, 64
          %s669 = scalar_lea.hbm %s6, %s668
          %s670 = sshll.u32 %s663, 4
          %s671 = int_to_ptr.vmem [resolvable:$true] %s670
          %676 = dma.hbm_to_vmem [thread:$0]  %s669, 1024, %s671, %s660, 64, 64, 4
        $region60: #{tpu_custom_call.1} parent=47 // pred_fallthru
          _
        // Predicated region
        $region61: #{tpu_custom_call.1} parent=47 // pred_check
          %p677 = pneg %p212
        $region62: #{tpu_custom_call.1} parent=47 // pred_check_branch
          %679 = sbr.rel (%p677) target = $region64
        $region63: #{tpu_custom_call.1} parent=47 // pred_region
          %p680 = scmp.lt.s32.totalorder %s30, 1
          %s681 = scalar_select %p680, %s30, 1
          %s682 = scalar_lea.vmem %s7, %s681
        $region64: #{tpu_custom_call.1} parent=47 // pred_fallthru
          _
        // Predicated region
        $region65: #{tpu_custom_call.1} parent=47 // pred_check
          %p683 = pneg %p238
        $region66: #{tpu_custom_call.1} parent=47 // pred_check_branch
          %685 = sbr.rel (%p683) target = $region68
        $region67: #{tpu_custom_call.1} parent=47 // pred_region
          %s686 = sand.u32 %s30, 1
          %s687 = scalar_lea.sflag [#allocation5], %s686
          %s688 = sand.u32 %s228, 1
          %s689 = scalar_lea.vmem [#allocation14], %s688
          %s691 = ssub.s32 16, 16
          %692 = vsyncadd %s687, %s691
          %s693 = smul.addr %s30, 16
          %s694 = scalar_lea.hbm %s8, %s693
          %s696 = sshll.u32 %s689, 4
          %s697 = int_to_ptr.vmem [resolvable:$true] %s696
          %699 = dma.hbm_to_vmem [thread:$0]  %s694, 16, %s697, %s687
        $region68: #{tpu_custom_call.1} parent=47 // pred_fallthru
          _
        // Predicated region
        $region69: #{tpu_custom_call.1} parent=47 // pred_check
          %p700 = pneg %p264
        $region70: #{tpu_custom_call.1} parent=47 // pred_check_branch
          %702 = sbr.rel (%p700) target = $region72
        $region71: #{tpu_custom_call.1} parent=47 // pred_region
          %s703 = sand.u32 %s30, 1
          %s704 = scalar_lea.sflag [#allocation5], %s703
          %s705 = sand.u32 %s254, 1
          %s706 = scalar_lea.vmem [#allocation15], %s705
          %s708 = ssub.s32 16, 16
          %709 = vsyncadd %s704, %s708
          %s710 = smul.addr %s30, 16
          %s711 = scalar_lea.hbm %s9, %s710
          %s713 = sshll.u32 %s706, 4
          %s714 = int_to_ptr.vmem [resolvable:$true] %s713
          %716 = dma.hbm_to_vmem [thread:$0]  %s711, 16, %s714, %s704
        $region72: #{tpu_custom_call.1} parent=47 // pred_fallthru
          _
        // Predicated region
        $region73: #{tpu_custom_call.1} parent=47 // pred_check
          %p717 = pneg %p290
        $region74: #{tpu_custom_call.1} parent=47 // pred_check_branch
          %719 = sbr.rel (%p717) target = $region76
        $region75: #{tpu_custom_call.1} parent=47 // pred_region
          %s720 = sand.u32 %s30, 1
          %s721 = scalar_lea.sflag [#allocation5], %s720
          %s722 = sand.u32 %s280, 1
          %s723 = smul.addr %s722, 256
          %s724 = scalar_lea.vmem [#allocation16], %s723
          %s726 = ssub.s32 4096, 4096
          %727 = vsyncadd %s721, %s726
          %s728 = smul.addr %s30, 64
          %s729 = smul.addr %s728, 64
          %s730 = scalar_lea.hbm %s10, %s729
          %s731 = sshll.u32 %s724, 4
          %s732 = int_to_ptr.vmem [resolvable:$true] %s731
          %737 = dma.hbm_to_vmem [thread:$0]  %s730, 4096, %s732, %s721, 256, 256, 16
        $region76: #{tpu_custom_call.1} parent=47 // pred_fallthru
          _
        // Predicated region
        $region77: #{tpu_custom_call.1} parent=47 // pred_check
          %p738 = pneg %p316
        $region78: #{tpu_custom_call.1} parent=47 // pred_check_branch
          %740 = sbr.rel (%p738) target = $region80
        $region79: #{tpu_custom_call.1} parent=47 // pred_region
          %p741 = scmp.lt.s32.totalorder %s30, 1
          %s742 = scalar_select %p741, %s30, 1
          %s743 = smul.addr %s742, 4
          %s744 = scalar_lea.vmem %s11, %s743
        $region80: #{tpu_custom_call.1} parent=47 // pred_fallthru
          _
        // Predicated region
        $region81: #{tpu_custom_call.1} parent=47 // pred_check
          %p745 = pneg %p342
        $region82: #{tpu_custom_call.1} parent=47 // pred_check_branch
          %747 = sbr.rel (%p745) target = $region84
        $region83: #{tpu_custom_call.1} parent=47 // pred_region
          %s748 = sand.u32 %s30, 1
          %s749 = scalar_lea.sflag [#allocation5], %s748
          %s750 = sand.u32 %s332, 1
          %s751 = smul.addr %s750, 256
          %s752 = scalar_lea.vmem [#allocation17], %s751
          %s754 = ssub.s32 4096, 4096
          %755 = vsyncadd %s749, %s754
          %s756 = smul.addr %s30, 64
          %s757 = smul.addr %s756, 64
          %s758 = scalar_lea.hbm %s12, %s757
          %s759 = sshll.u32 %s752, 4
          %s760 = int_to_ptr.vmem [resolvable:$true] %s759
          %765 = dma.hbm_to_vmem [thread:$0]  %s758, 4096, %s760, %s749, 64, 64, 4
        $region84: #{tpu_custom_call.1} parent=47 // pred_fallthru
          _
        // Predicated region
        $region85: #{tpu_custom_call.1} parent=47 // pred_check
          %p766 = pneg %p368
        $region86: #{tpu_custom_call.1} parent=47 // pred_check_branch
          %768 = sbr.rel (%p766) target = $region88
        $region87: #{tpu_custom_call.1} parent=47 // pred_region
          %p769 = scmp.lt.s32.totalorder %s30, 1
          %s770 = scalar_select %p769, %s30, 1
          %s771 = scalar_lea.vmem %s13, %s770
        $region88: #{tpu_custom_call.1} parent=47 // pred_fallthru
          _
        // Predicated region
        $region89: #{tpu_custom_call.1} parent=47 // pred_check
          %p772 = pneg %p394
        $region90: #{tpu_custom_call.1} parent=47 // pred_check_branch
          %774 = sbr.rel (%p772) target = $region92
        $region91: #{tpu_custom_call.1} parent=47 // pred_region
          %p775 = scmp.lt.s32.totalorder %s30, 1
          %s776 = scalar_select %p775, %s30, 1
          %s777 = scalar_lea.vmem %s14, %s776
        $region92: #{tpu_custom_call.1} parent=47 // pred_fallthru
          _
        // Predicated region
        $region93: #{tpu_custom_call.1} parent=47 // pred_check
          %p778 = pneg %p420
        $region94: #{tpu_custom_call.1} parent=47 // pred_check_branch
          %780 = sbr.rel (%p778) target = $region96
        $region95: #{tpu_custom_call.1} parent=47 // pred_region
          %p781 = scmp.lt.s32.totalorder %s30, 1
          %s782 = scalar_select %p781, %s30, 1
          %s783 = scalar_lea.vmem %s15, %s782
        $region96: #{tpu_custom_call.1} parent=47 // pred_fallthru
          _
      $region48: #{tpu_custom_call.1} parent=5 // pred_fallthru
        _
      %p784 = scmp.le.s32.totalorder 1, %s30
      %p785 = scmp.lt.s32.totalorder %s30, 3
      %p786 = pnand %p784, %p785
      %p787 = pneg %p786
      // Predicated region
      $region97: #{tpu_custom_call.1} parent=5 // pred_check
        _
      $region98: #{tpu_custom_call.1} parent=5 // pred_check_branch
        %789 = sbr.rel (%p786) target = $region100
      $region99: #{tpu_custom_call.1} parent=5 // pred_region
        %s790 = ssub.s32 %s30, 1
        // Predicated region
        $region101: #{tpu_custom_call.1} parent=99 // pred_check
          %p791 = pneg %p51
        $region102: #{tpu_custom_call.1} parent=99 // pred_check_branch
          %793 = sbr.rel (%p791) target = $region104
        $region103: #{tpu_custom_call.1} parent=99 // pred_region
          %794 = dma.done [#allocation5], 256
        $region104: #{tpu_custom_call.1} parent=99 // pred_fallthru
          _
        // Predicated region
        $region105: #{tpu_custom_call.1} parent=99 // pred_check
          %p795 = pneg %p72
        $region106: #{tpu_custom_call.1} parent=99 // pred_check_branch
          %797 = sbr.rel (%p795) target = $region108
        $region107: #{tpu_custom_call.1} parent=99 // pred_region
          %798 = dma.done [#allocation8], 32
        $region108: #{tpu_custom_call.1} parent=99 // pred_fallthru
          _
        // Predicated region
        $region109: #{tpu_custom_call.1} parent=99 // pred_check
          %p799 = pneg %p93
        $region110: #{tpu_custom_call.1} parent=99 // pred_check_branch
          %801 = sbr.rel (%p799) target = $region112
        $region111: #{tpu_custom_call.1} parent=99 // pred_region
          %802 = dma.done [#allocation8], 16
        $region112: #{tpu_custom_call.1} parent=99 // pred_fallthru
          _
        // Predicated region
        $region113: #{tpu_custom_call.1} parent=99 // pred_check
          %p803 = pneg %p114
        $region114: #{tpu_custom_call.1} parent=99 // pred_check_branch
          %805 = sbr.rel (%p803) target = $region116
        $region115: #{tpu_custom_call.1} parent=99 // pred_region
          %806 = dma.done [#allocation11], 16
        $region116: #{tpu_custom_call.1} parent=99 // pred_fallthru
          _
        %s807 = sand.u32 %s35, 1
        %s808 = scalar_lea.sflag [#allocation5], %s807
        %s809 = sand.u32 %s127, 1
        %s810 = smul.addr %s809, 192
        %s811 = scalar_lea.vmem [#allocation12], %s810
        // Predicated region
        $region117: #{tpu_custom_call.1} parent=99 // pred_check
          %p812 = pneg %p140
        $region118: #{tpu_custom_call.1} parent=99 // pred_check_branch
          %814 = sbr.rel (%p812) target = $region120
        $region119: #{tpu_custom_call.1} parent=99 // pred_region
          %815 = dma.done %s808, 3072
        $region120: #{tpu_custom_call.1} parent=99 // pred_fallthru
          _
        %s816 = sand.u32 %s35, 1
        %s817 = scalar_lea.sflag [#allocation5], %s816
        %s818 = sand.u32 %s179, 1
        %s819 = smul.addr %s818, 64
        %s820 = scalar_lea.vmem [#allocation13], %s819
        // Predicated region
        $region121: #{tpu_custom_call.1} parent=99 // pred_check
          %p821 = pneg %p192
        $region122: #{tpu_custom_call.1} parent=99 // pred_check_branch
          %823 = sbr.rel (%p821) target = $region124
        $region123: #{tpu_custom_call.1} parent=99 // pred_region
          %824 = dma.done %s817, 1024
        $region124: #{tpu_custom_call.1} parent=99 // pred_fallthru
          _
        %s825 = sand.u32 %s35, 1
        %s826 = scalar_lea.sflag [#allocation5], %s825
        %s827 = sand.u32 %s231, 1
        %s828 = scalar_lea.vmem [#allocation14], %s827
        // Predicated region
        $region125: #{tpu_custom_call.1} parent=99 // pred_check
          %p829 = pneg %p244
        $region126: #{tpu_custom_call.1} parent=99 // pred_check_branch
          %831 = sbr.rel (%p829) target = $region128
        $region127: #{tpu_custom_call.1} parent=99 // pred_region
          %832 = dma.done %s826, 16
        $region128: #{tpu_custom_call.1} parent=99 // pred_fallthru
          _
        %s833 = sand.u32 %s35, 1
        %s834 = scalar_lea.sflag [#allocation5], %s833
        %s835 = sand.u32 %s257, 1
        %s836 = scalar_lea.vmem [#allocation15], %s835
        // Predicated region
        $region129: #{tpu_custom_call.1} parent=99 // pred_check
          %p837 = pneg %p270
        $region130: #{tpu_custom_call.1} parent=99 // pred_check_branch
          %839 = sbr.rel (%p837) target = $region132
        $region131: #{tpu_custom_call.1} parent=99 // pred_region
          %840 = dma.done %s834, 16
        $region132: #{tpu_custom_call.1} parent=99 // pred_fallthru
          _
        %s841 = sand.u32 %s35, 1
        %s842 = scalar_lea.sflag [#allocation5], %s841
        %s843 = sand.u32 %s283, 1
        %s844 = smul.addr %s843, 256
        %s845 = scalar_lea.vmem [#allocation16], %s844
        // Predicated region
        $region133: #{tpu_custom_call.1} parent=99 // pred_check
          %p846 = pneg %p296
        $region134: #{tpu_custom_call.1} parent=99 // pred_check_branch
          %848 = sbr.rel (%p846) target = $region136
        $region135: #{tpu_custom_call.1} parent=99 // pred_region
          %849 = dma.done %s842, 4096
        $region136: #{tpu_custom_call.1} parent=99 // pred_fallthru
          _
        %s850 = sand.u32 %s35, 1
        %s851 = scalar_lea.sflag [#allocation5], %s850
        %s852 = sand.u32 %s335, 1
        %s853 = smul.addr %s852, 256
        %s854 = scalar_lea.vmem [#allocation17], %s853
        // Predicated region
        $region137: #{tpu_custom_call.1} parent=99 // pred_check
          %p855 = pneg %p348
        $region138: #{tpu_custom_call.1} parent=99 // pred_check_branch
          %857 = sbr.rel (%p855) target = $region140
        $region139: #{tpu_custom_call.1} parent=99 // pred_region
          %858 = dma.done %s851, 4096
        $region140: #{tpu_custom_call.1} parent=99 // pred_fallthru
          _
        // Predicated region
        $region141: #{tpu_custom_call.1} parent=99 // pred_check
          %p859 = pneg %p447
        $region142: #{tpu_custom_call.1} parent=99 // pred_check_branch
          %861 = sbr.rel (%p859) target = $region144
        $region143: #{tpu_custom_call.1} parent=99 // pred_region
          %862 = dma.done [#allocation8], 1024
        $region144: #{tpu_custom_call.1} parent=99 // pred_fallthru
          _
        // Predicated region
        $region145: #{tpu_custom_call.1} parent=99 // pred_check
          %p863 = pneg %p489
        $region146: #{tpu_custom_call.1} parent=99 // pred_check_branch
          %865 = sbr.rel (%p863) target = $region148
        $region147: #{tpu_custom_call.1} parent=99 // pred_region
          %866 = dma.done [#allocation11], 1024
        $region148: #{tpu_custom_call.1} parent=99 // pred_fallthru
          _
        %p867 = pneg %p51
        %p868 = pneg %p48
        %p869 = pneg %p72
        %p870 = pneg %p69
        %p871 = pneg %p93
        %p872 = pneg %p90
        %p873 = pneg %p114
        %p874 = pneg %p111
        %s875 = sand.u32 %s35, 1
        %s876 = scalar_lea.sflag [#allocation5], %s875
        %s877 = sand.u32 %s127, 1
        %s878 = smul.addr %s877, 192
        %s879 = scalar_lea.vmem [#allocation12], %s878
        %p880 = pneg %p140
        %p881 = pneg %p137
        %p882 = scmp.lt.s32.totalorder %s35, 1
        %s883 = scalar_select %p882, %s35, 1
        %s884 = smul.addr %s883, 3
        %s885 = scalar_lea.vmem %s5, %s884
        %p886 = pneg %p166
        %p887 = pneg %p163
        %s888 = sand.u32 %s35, 1
        %s889 = scalar_lea.sflag [#allocation5], %s888
        %s890 = sand.u32 %s179, 1
        %s891 = smul.addr %s890, 64
        %s892 = scalar_lea.vmem [#allocation13], %s891
        %p893 = pneg %p192
        %p894 = pneg %p189
        %p895 = scmp.lt.s32.totalorder %s35, 1
        %s896 = scalar_select %p895, %s35, 1
        %s897 = scalar_lea.vmem %s7, %s896
        %p898 = pneg %p218
        %p899 = pneg %p215
        %s900 = sand.u32 %s35, 1
        %s901 = scalar_lea.sflag [#allocation5], %s900
        %s902 = sand.u32 %s231, 1
        %s903 = scalar_lea.vmem [#allocation14], %s902
        %p904 = pneg %p244
        %p905 = pneg %p241
        %s906 = sand.u32 %s35, 1
        %s907 = scalar_lea.sflag [#allocation5], %s906
        %s908 = sand.u32 %s257, 1
        %s909 = scalar_lea.vmem [#allocation15], %s908
        %p910 = pneg %p270
        %p911 = pneg %p267
        %s912 = sand.u32 %s35, 1
        %s913 = scalar_lea.sflag [#allocation5], %s912
        %s914 = sand.u32 %s283, 1
        %s915 = smul.addr %s914, 256
        %s916 = scalar_lea.vmem [#allocation16], %s915
        %p917 = pneg %p296
        %p918 = pneg %p293
        %p919 = scmp.lt.s32.totalorder %s35, 1
        %s920 = scalar_select %p919, %s35, 1
        %s921 = smul.addr %s920, 4
        %s922 = scalar_lea.vmem %s11, %s921
        %p923 = pneg %p322
        %p924 = pneg %p319
        %s925 = sand.u32 %s35, 1
        %s926 = scalar_lea.sflag [#allocation5], %s925
        %s927 = sand.u32 %s335, 1
        %s928 = smul.addr %s927, 256
        %s929 = scalar_lea.vmem [#allocation17], %s928
        %p930 = pneg %p348
        %p931 = pneg %p345
        %p932 = scmp.lt.s32.totalorder %s35, 1
        %s933 = scalar_select %p932, %s35, 1
        %s934 = scalar_lea.vmem %s13, %s933
        %p935 = pneg %p374
        %p936 = pneg %p371
        %p937 = scmp.lt.s32.totalorder %s35, 1
        %s938 = scalar_select %p937, %s35, 1
        %s939 = scalar_lea.vmem %s14, %s938
        %p940 = pneg %p400
        %p941 = pneg %p397
        %p942 = scmp.lt.s32.totalorder %s35, 1
        %s943 = scalar_select %p942, %s35, 1
        %s944 = scalar_lea.vmem %s15, %s943
        %p945 = pneg %p426
        %p946 = pneg %p423
        %p947 = pneg %p447
        %p948 = pneg %p444
        %p949 = pneg %p468
        %p950 = pneg %p465
        %p951 = pneg %p489
        %p952 = pneg %p486
        %p953 = pneg %p510
        %p954 = pneg %p507
        %p955 = pneg %p531
        %p956 = pneg %p528
        %p957 = scmp.lt.s32.totalorder %s35, 1
        %s958 = scalar_select %p957, %s35, 1
        %s959 = smul.addr %s958, 3
        %s960 = scalar_lea.vmem %s5, %s959
        %p961 = scmp.lt.s32.totalorder %s35, 1
        %s962 = scalar_select %p961, %s35, 1
        %s963 = scalar_lea.vmem %s7, %s962
        %p964 = scmp.lt.s32.totalorder %s35, 1
        %s965 = scalar_select %p964, %s35, 1
        %s966 = smul.addr %s965, 4
        %s967 = scalar_lea.vmem %s11, %s966
        %p968 = scmp.lt.s32.totalorder %s35, 1
        %s969 = scalar_select %p968, %s35, 1
        %s970 = scalar_lea.vmem %s13, %s969
        %p971 = scmp.lt.s32.totalorder %s35, 1
        %s972 = scalar_select %p971, %s35, 1
        %s973 = scalar_lea.vmem %s14, %s972
        %p974 = scmp.lt.s32.totalorder %s35, 1
        %s975 = scalar_select %p974, %s35, 1
        %s976 = scalar_lea.vmem %s15, %s975
        %p978 = scmp.eq.s32.totalorder %s35, 0
        // Predicated region
        $region149: #{tpu_custom_call.1} parent=99 // pred_check
          %p979 = pneg %p978
        $region150: #{tpu_custom_call.1} parent=99 // pred_check_branch
          %981 = sbr.rel (%p979) target = $region152
        $region151: #{tpu_custom_call.1} parent=99 // pred_region
          %v982 = vld [vmem:[#allocation4] sm:$0xff]
          %v983 = vld [vmem:[#allocation4 + $0x8] sm:$0xff]
          %v984 = vld [vmem:[#allocation9] sm:$0x1]
          %v985 = vld [vmem:[#allocation10] sm:$0x1]
          %986 = vadd.xlane.f32.xlu0 %v982
          %v987 = vpop.xlane.xlu0 %986
          %988 = vadd.xlane.f32.xlu0 %v983
          %v989 = vpop.xlane.xlu0 %988
          %v990 = vrcp.pop 128.0
          %v991 = vmul.f32 %v987, %v990
          %v992 = vmul.f32 %v989, %v990
          %v993 = vsub.f32 %v982, %v991
          %v994 = vsub.f32 %v983, %v992
          %v995 = vmul.f32 %v993, %v993
          %v996 = vmul.f32 %v994, %v994
          %997 = vadd.xlane.f32.xlu0 %v995
          %v998 = vpop.xlane.xlu0 %997
          %999 = vadd.xlane.f32.xlu0 %v996
          %v1000 = vpop.xlane.xlu0 %999
          %v1001 = vmul.f32 %v998, %v990
          %v1002 = vmul.f32 %v1000, %v990
          %v1003 = vadd.f32 %v1001, 1e-12
          %v1004 = vadd.f32 %v1002, 1e-12
          %v1005 = vrsqrt.pop %v1003
          %v1006 = vrsqrt.pop %v1004
          %v1007 = vmul.f32 %v993, %v1005
          %v1008 = vmul.f32 %v994, %v1006
          %v1010 = vlaneseq
          %v1011 = vshrl.u32 %v1010, 7
          %v1012 = vsub.s32 0, %v1011
          %v1013 = vrot.slane %v984, %v1012
          %v1015 = vmul.f32 %v1007, %v1013
          %v1016 = vmul.f32 %v1008, %v1013
          %v1018 = vlaneseq
          %v1019 = vshrl.u32 %v1018, 7
          %v1020 = vsub.s32 0, %v1019
          %v1021 = vrot.slane %v985, %v1020
          %v1023 = vadd.f32 %v1015, %v1021
          %v1024 = vadd.f32 %v1016, %v1021
          %1025 = vst [vmem:[#allocation2] sm:$0xff] %v1023
          %1026 = vst [vmem:[#allocation2 + $0x8] sm:$0xff] %v1024
          %1027 = vst [vmem:[#allocation20] sm:$0xff] 0.0
          %1028 = vst [vmem:[#allocation20 + $0x8] sm:$0xff] 0.0
        $region152: #{tpu_custom_call.1} parent=99 // pred_fallthru
          _
        %v1029 = vld [vmem:[#allocation2] sm:$0xff]
        %v1030 = vld [vmem:[#allocation2 + $0x8] sm:$0xff]
        %v1031 = vpack.c.bf16 %v1030, %v1029
        %v1032 = vld [vmem:[%s811] sm:$0xff]
        %v1033 = vld [vmem:[%s811 + $0x8] sm:$0xf]
        %v1034 = vld [vmem:[%s811 + $0xc] sm:$0xff]
        %v1035 = vld [vmem:[%s811 + $0x14] sm:$0xf]
        %v1036 = vld [vmem:[%s811 + $0x18] sm:$0xff]
        %v1037 = vld [vmem:[%s811 + $0x20] sm:$0xf]
        %v1038 = vld [vmem:[%s811 + $0x24] sm:$0xff]
        %v1039 = vld [vmem:[%s811 + $0x2c] sm:$0xf]
        %v1040 = vld [vmem:[%s811 + $0x30] sm:$0xff]
        %v1041 = vld [vmem:[%s811 + $0x38] sm:$0xf]
        %v1042 = vld [vmem:[%s811 + $0x3c] sm:$0xff]
        %v1043 = vld [vmem:[%s811 + $0x44] sm:$0xf]
        %v1044 = vld [vmem:[%s811 + $0x48] sm:$0xff]
        %v1045 = vld [vmem:[%s811 + $0x50] sm:$0xf]
        %v1046 = vld [vmem:[%s811 + $0x54] sm:$0xff]
        %v1047 = vld [vmem:[%s811 + $0x5c] sm:$0xf]
        %v1048 = vld [vmem:[%s811 + $0x60] sm:$0xff]
        %v1049 = vld [vmem:[%s811 + $0x68] sm:$0xf]
        %v1050 = vld [vmem:[%s811 + $0x6c] sm:$0xff]
        %v1051 = vld [vmem:[%s811 + $0x74] sm:$0xf]
        %v1052 = vld [vmem:[%s811 + $0x78] sm:$0xff]
        %v1053 = vld [vmem:[%s811 + $0x80] sm:$0xf]
        %v1054 = vld [vmem:[%s811 + $0x84] sm:$0xff]
        %v1055 = vld [vmem:[%s811 + $0x8c] sm:$0xf]
        %v1056 = vld [vmem:[%s811 + $0x90] sm:$0xff]
        %v1057 = vld [vmem:[%s811 + $0x98] sm:$0xf]
        %v1058 = vld [vmem:[%s811 + $0x9c] sm:$0xff]
        %v1059 = vld [vmem:[%s811 + $0xa4] sm:$0xf]
        %v1060 = vld [vmem:[%s811 + $0xa8] sm:$0xff]
        %v1061 = vld [vmem:[%s811 + $0xb0] sm:$0xf]
        %v1062 = vld [vmem:[%s811 + $0xb4] sm:$0xff]
        %v1063 = vld [vmem:[%s811 + $0xbc] sm:$0xf]
        %v1064 = vld [vmem:[%s960] sm:$0x7]
        %v1066 = vlaneseq
        %v1067 = vshrl.u32 %v1066, 7
        %v1068 = vsub.s32 0, %v1067
        %v1069 = vrot.slane %v1064, %v1068
        %v1070 = vlaneseq
        %v1071 = vshrl.u32 %v1070, 7
        %v1072 = vsub.s32 1, %v1071
        %v1073 = vrot.slane %v1064, %v1072
        %v1074 = vlaneseq
        %v1075 = vshrl.u32 %v1074, 7
        %v1076 = vsub.s32 2, %v1075
        %v1077 = vrot.slane %v1064, %v1076
        %v1113 = vunpack.c.l.b16 %v1032
        %v1114 = vunpack.c.h.b16 %v1032
        %v1115 = vunpack.c.l.b16 %v1033
        %v1116 = vunpack.c.l.b16 %v1034
        %v1117 = vunpack.c.h.b16 %v1034
        %v1118 = vunpack.c.l.b16 %v1035
        %v1119 = vunpack.c.l.b16 %v1036
        %v1120 = vunpack.c.h.b16 %v1036
        %v1121 = vunpack.c.l.b16 %v1037
        %v1122 = vunpack.c.l.b16 %v1038
        %v1123 = vunpack.c.h.b16 %v1038
        %v1124 = vunpack.c.l.b16 %v1039
        %v1125 = vunpack.c.l.b16 %v1040
        %v1126 = vunpack.c.h.b16 %v1040
        %v1127 = vunpack.c.l.b16 %v1041
        %v1128 = vunpack.c.l.b16 %v1042
        %v1129 = vunpack.c.h.b16 %v1042
        %v1130 = vunpack.c.l.b16 %v1043
        %v1131 = vunpack.c.l.b16 %v1044
        %v1132 = vunpack.c.h.b16 %v1044
        %v1133 = vunpack.c.l.b16 %v1045
        %v1134 = vunpack.c.l.b16 %v1046
        %v1135 = vunpack.c.h.b16 %v1046
        %v1136 = vunpack.c.l.b16 %v1047
        %v1137 = vunpack.c.l.b16 %v1048
        %v1138 = vunpack.c.h.b16 %v1048
        %v1139 = vunpack.c.l.b16 %v1049
        %v1140 = vunpack.c.l.b16 %v1050
        %v1141 = vunpack.c.h.b16 %v1050
        %v1142 = vunpack.c.l.b16 %v1051
        %v1143 = vunpack.c.l.b16 %v1052
        %v1144 = vunpack.c.h.b16 %v1052
        %v1145 = vunpack.c.l.b16 %v1053
        %v1146 = vunpack.c.l.b16 %v1054
        %v1147 = vunpack.c.h.b16 %v1054
        %v1148 = vunpack.c.l.b16 %v1055
        %v1149 = vunpack.c.l.b16 %v1056
        %v1150 = vunpack.c.h.b16 %v1056
        %v1151 = vunpack.c.l.b16 %v1057
        %v1152 = vunpack.c.l.b16 %v1058
        %v1153 = vunpack.c.h.b16 %v1058
        %v1154 = vunpack.c.l.b16 %v1059
        %v1155 = vunpack.c.l.b16 %v1060
        %v1156 = vunpack.c.h.b16 %v1060
        %v1157 = vunpack.c.l.b16 %v1061
        %v1158 = vunpack.c.l.b16 %v1062
        %v1159 = vunpack.c.h.b16 %v1062
        %v1160 = vunpack.c.l.b16 %v1063
        %v1161 = vpack.c.b16 %v1116, %v1113
        %v1162 = vpack.c.b16 %v1117, %v1114
        %v1163 = vpack.c.b16 %v1118, %v1115
        %v1164 = vpack.c.b16 %v1122, %v1119
        %v1165 = vpack.c.b16 %v1123, %v1120
        %v1166 = vpack.c.b16 %v1124, %v1121
        %v1167 = vpack.c.b16 %v1128, %v1125
        %v1168 = vpack.c.b16 %v1129, %v1126
        %v1169 = vpack.c.b16 %v1130, %v1127
        %v1170 = vpack.c.b16 %v1134, %v1131
        %v1171 = vpack.c.b16 %v1135, %v1132
        %v1172 = vpack.c.b16 %v1136, %v1133
        %v1173 = vpack.c.b16 %v1140, %v1137
        %v1174 = vpack.c.b16 %v1141, %v1138
        %v1175 = vpack.c.b16 %v1142, %v1139
        %v1176 = vpack.c.b16 %v1146, %v1143
        %v1177 = vpack.c.b16 %v1147, %v1144
        %v1178 = vpack.c.b16 %v1148, %v1145
        %v1179 = vpack.c.b16 %v1152, %v1149
        %v1180 = vpack.c.b16 %v1153, %v1150
        %v1181 = vpack.c.b16 %v1154, %v1151
        %v1182 = vpack.c.b16 %v1158, %v1155
        %v1183 = vpack.c.b16 %v1159, %v1156
        %v1184 = vpack.c.b16 %v1160, %v1157
        %1209 = vmatprep.subr.bf16.mxu0 %v1183
        %1210 = vmatpush1.bf16.msra.mxu0 %v1182
        %1211 = vmatprep.subr.bf16.mxu0 %v1180
        %1212 = vmatpush1.bf16.msra.mxu0 %v1179
        %1213 = vmatprep.subr.bf16.mxu0 %v1177
        %1214 = vmatpush1.bf16.msra.mxu0 %v1176
        %1215 = vmatprep.subr.bf16.mxu0 %v1174
        %1216 = vmatpush1.bf16.msra.mxu0 %v1173
        %1217 = vmatprep.subr.bf16.mxu0 %v1171
        %1218 = vmatpush1.bf16.msra.mxu0 %v1170
        %1219 = vmatprep.subr.bf16.mxu0 %v1168
        %1220 = vmatpush1.bf16.msra.mxu0 %v1167
        %1221 = vmatprep.subr.bf16.mxu0 %v1165
        %1222 = vmatpush1.bf16.msra.mxu0 %v1164
        %1223 = vmatprep.subr.bf16.mxu0 %v1162
        %1224 = vmatpush1.bf16.msra.mxu0 %v1161
        %1225 = vmatprep.subr.bf16.mxu0 0
        %1226 = vmatpush2.bf16.msra.mxu0 0
        %1227 = vmatprep.subr.bf16.mxu0 0
        %1228 = vmatpush2.bf16.msra.mxu0 0
        %1229 = vmatprep.subr.bf16.mxu0 0
        %1230 = vmatpush2.bf16.msra.mxu0 0
        %1231 = vmatprep.subr.bf16.mxu0 0
        %1232 = vmatpush2.bf16.msra.mxu0 0
        %1233 = vmatprep.subr.bf16.mxu0 0
        %1234 = vmatpush2.bf16.msra.mxu0 0
        %1235 = vmatprep.subr.bf16.mxu0 0
        %1236 = vmatpush2.bf16.msra.mxu0 0
        %1237 = vmatprep.subr.bf16.mxu0 0
        %1238 = vmatpush2.bf16.msra.mxu0 0
        %1239 = vmatprep.subr.bf16.mxu0 0
        %1240 = vmatpush2.bf16.msra.mxu0 0
        %1241 = vmatprep.mubr.bf16.mxu0 0
        %1242 = vmatmul.mubr.bf16.gmra.mxu0 %v1031
        %v1243 = vpop.f32.mrf.mxu0
        %v1244 = vadd.f32 %v1069, %v1243
        %v1245 = vpop.f32.mrf.mxu0
        %v1246 = vadd.f32 %v1073, %v1245
        %v1247 = vpop.f32.mrf.mxu0
        %v1248 = vadd.f32 %v1069, %v1247
        %v1249 = vpop.f32.mrf.mxu0
        %v1250 = vadd.f32 %v1073, %v1249
        %1251 = vdwg.mxu0
        %1252 = vmatprep.subr.bf16.mxu0 0
        %1253 = vmatpush1.bf16.msra.mxu0 %v1184
        %1254 = vmatprep.subr.bf16.mxu0 0
        %1255 = vmatpush1.bf16.msra.mxu0 %v1181
        %1256 = vmatprep.subr.bf16.mxu0 0
        %1257 = vmatpush1.bf16.msra.mxu0 %v1178
        %1258 = vmatprep.subr.bf16.mxu0 0
        %1259 = vmatpush1.bf16.msra.mxu0 %v1175
        %1260 = vmatprep.subr.bf16.mxu0 0
        %1261 = vmatpush1.bf16.msra.mxu0 %v1172
        %1262 = vmatprep.subr.bf16.mxu0 0
        %1263 = vmatpush1.bf16.msra.mxu0 %v1169
        %1264 = vmatprep.subr.bf16.mxu0 0
        %1265 = vmatpush1.bf16.msra.mxu0 %v1166
        %1266 = vmatprep.subr.bf16.mxu0 0
        %1267 = vmatpush1.bf16.msra.mxu0 %v1163
        %1268 = vmatprep.subr.bf16.mxu0 0
        %1269 = vmatpush2.bf16.msra.mxu0 0
        %1270 = vmatprep.subr.bf16.mxu0 0
        %1271 = vmatpush2.bf16.msra.mxu0 0
        %1272 = vmatprep.subr.bf16.mxu0 0
        %1273 = vmatpush2.bf16.msra.mxu0 0
        %1274 = vmatprep.subr.bf16.mxu0 0
        %1275 = vmatpush2.bf16.msra.mxu0 0
        %1276 = vmatprep.subr.bf16.mxu0 0
        %1277 = vmatpush2.bf16.msra.mxu0 0
        %1278 = vmatprep.subr.bf16.mxu0 0
        %1279 = vmatpush2.bf16.msra.mxu0 0
        %1280 = vmatprep.subr.bf16.mxu0 0
        %1281 = vmatpush2.bf16.msra.mxu0 0
        %1282 = vmatprep.subr.bf16.mxu0 0
        %1283 = vmatpush2.bf16.msra.mxu0 0
        %1284 = vmatprep.mubr.bf16.mxu0 0
        %1285 = vmatmul.mubr.bf16.gmra.mxu0 %v1031
        %v1286 = vpop.f32.mrf.mxu0
        %v1287 = vadd.f32 %v1077, %v1286
        %v1288 = vpop.f32.mrf.mxu0
        %v1289 = vpop.f32.mrf.mxu0
        %v1290 = vadd.f32 %v1077, %v1289
        %v1291 = vpop.f32.mrf.mxu0
        %1292 = vdwg.mxu0
        %v1293 = vld [vmem:[#allocation7] sm:$0x1]
        %v1294 = vpack.c.bf16 %v1244, %v1244
        %v1295 = vpack.c.bf16 %v1246, %v1246
        %vm1296 = vcmask 523264
        %v1298 = vsel %vm1296, %v1294, 0
        %v1301 = vsel %vm1296, %v1295, 0
        %1303 = vmatprep.subr.bf16.mxu0 0
        %1304 = vmatpush1.bf16.xpose.msra.mxu0 0
        %1305 = vmatprep.subr.bf16.mxu0 0
        %1306 = vmatpush1.bf16.xpose.msra.mxu0 0
        %1307 = vmatprep.subr.bf16.mxu0 0
        %1308 = vmatpush1.bf16.xpose.msra.mxu0 0
        %1309 = vmatprep.subr.bf16.mxu0 0
        %1310 = vmatpush1.bf16.xpose.msra.mxu0 0
        %1311 = vmatprep.subr.bf16.mxu0 0
        %1312 = vmatpush1.bf16.xpose.msra.mxu0 0
        %1313 = vmatprep.subr.bf16.mxu0 0
        %1314 = vmatpush1.bf16.xpose.msra.mxu0 0
        %1315 = vmatprep.subr.bf16.mxu0 0
        %1316 = vmatpush1.bf16.xpose.msra.mxu0 0
        %1317 = vmatprep.subr.bf16.mxu0 0
        %1318 = vmatpush1.bf16.xpose.msra.mxu0 %v1301
        %1319 = vmatprep.subr.bf16.mxu0 0
        %1320 = vmatpush2.bf16.xpose.msra.mxu0 0
        %1321 = vmatprep.subr.bf16.mxu0 0
        %1322 = vmatpush2.bf16.xpose.msra.mxu0 0
        %1323 = vmatprep.subr.bf16.mxu0 0
        %1324 = vmatpush2.bf16.xpose.msra.mxu0 0
        %1325 = vmatprep.subr.bf16.mxu0 0
        %1326 = vmatpush2.bf16.xpose.msra.mxu0 0
        %1327 = vmatprep.subr.bf16.mxu0 0
        %1328 = vmatpush2.bf16.xpose.msra.mxu0 0
        %1329 = vmatprep.subr.bf16.mxu0 0
        %1330 = vmatpush2.bf16.xpose.msra.mxu0 0
        %1331 = vmatprep.subr.bf16.mxu0 0
        %1332 = vmatpush2.bf16.xpose.msra.mxu0 0
        %1333 = vmatprep.subr.bf16.mxu0 0
        %1334 = vmatpush2.bf16.xpose.msra.mxu0 0
        %1335 = vmatprep.mubr.bf16.mxu0 0
        %1336 = vmatmul.mubr.bf16.gmra.mxu0 %v1298
        %v1337 = vpop.f32.mrf.mxu0
        %v1338 = vadd.f32 0.0, %v1337
        %v1339 = vpop.f32.mrf.mxu0
        %v1340 = vpop.f32.mrf.mxu0
        %v1341 = vpop.f32.mrf.mxu0
        %1342 = vdwg.mxu0
        %v1343 = vmul.f32 %v1338, 0.125
        %v1344 = vlaneseq
        %v1345 = vshrl.u32 %v1344, 7
        %v1346 = vsub.s32 0, %v1345
        %v1347 = vrot.slane %v1293, %v1346
        %v1348 = vadd.f32 %v1343, %v1347
        %vm1349 = vcmask 64512
        %v1350 = vsel %vm1349, %v1348, -inf
        %1351 = vmax.xlane.f32.xlu0 %v1350
        %v1352 = vpop.xlane.xlu0 %1351
        %v1353 = vsub.f32 %v1348, %v1352
        %v1354 = vmul.f32 %v1353, 1.442695
        %v1355 = vpow.pop %v1354
        %v1356 = vsel %vm1349, %v1355, 0.0
        %1357 = vadd.xlane.f32.xlu0 %v1356
        %v1358 = vpop.xlane.xlu0 %1357
        %v1359 = vrcp.pop %v1358
        %v1360 = vmul.f32 %v1355, %v1359
        %v1361 = vpack.c.bf16 %v1360, %v1360
        %v1362 = vpack.c.bf16 %v1287, %v1287
        %v1364 = vsel %vm1349, %v1361, 0
        %vm1366 = vcmask 1043456
        %v1368 = vsel %vm1366, %v1362, 0
        %1370 = vmatprep.subr.bf16.mxu0 0
        %1371 = vmatpush1.bf16.msra.mxu0 0
        %1372 = vmatprep.subr.bf16.mxu0 0
        %1373 = vmatpush1.bf16.msra.mxu0 0
        %1374 = vmatprep.subr.bf16.mxu0 0
        %1375 = vmatpush1.bf16.msra.mxu0 0
        %1376 = vmatprep.subr.bf16.mxu0 0
        %1377 = vmatpush1.bf16.msra.mxu0 0
        %1378 = vmatprep.subr.bf16.mxu0 0
        %1379 = vmatpush1.bf16.msra.mxu0 0
        %1380 = vmatprep.subr.bf16.mxu0 0
        %1381 = vmatpush1.bf16.msra.mxu0 0
        %1382 = vmatprep.subr.bf16.mxu0 0
        %1383 = vmatpush1.bf16.msra.mxu0 0
        %1384 = vmatprep.subr.bf16.mxu0 0
        %1385 = vmatpush1.bf16.msra.mxu0 %v1368
        %1386 = vmatprep.subr.bf16.mxu0 0
        %1387 = vmatpush2.bf16.msra.mxu0 0
        %1388 = vmatprep.subr.bf16.mxu0 0
        %1389 = vmatpush2.bf16.msra.mxu0 0
        %1390 = vmatprep.subr.bf16.mxu0 0
        %1391 = vmatpush2.bf16.msra.mxu0 0
        %1392 = vmatprep.subr.bf16.mxu0 0
        %1393 = vmatpush2.bf16.msra.mxu0 0
        %1394 = vmatprep.subr.bf16.mxu0 0
        %1395 = vmatpush2.bf16.msra.mxu0 0
        %1396 = vmatprep.subr.bf16.mxu0 0
        %1397 = vmatpush2.bf16.msra.mxu0 0
        %1398 = vmatprep.subr.bf16.mxu0 0
        %1399 = vmatpush2.bf16.msra.mxu0 0
        %1400 = vmatprep.subr.bf16.mxu0 0
        %1401 = vmatpush2.bf16.msra.mxu0 0
        %1402 = vmatprep.mubr.bf16.mxu0 0
        %1403 = vmatmul.mubr.bf16.gmra.mxu0 %v1364
        %v1404 = vpop.f32.mrf.mxu0
        %v1405 = vadd.f32 0.0, %v1404
        %v1406 = vpop.f32.mrf.mxu0
        %v1407 = vpop.f32.mrf.mxu0
        %v1408 = vpop.f32.mrf.mxu0
        %1409 = vdwg.mxu0
        %1410 = vst.msk [vmem:[#allocation3] sm:$0xff] %vm1296, %v1405
        %1412 = vrot.lane.b32.xlu0 %v1294, 64
        %v1413 = vpop.permute.xlu0 %1412
        %1415 = vrot.lane.b32.xlu0 %v1295, 64
        %v1416 = vpop.permute.xlu0 %1415
        %v1418 = vsel %vm1296, %v1413, 0
        %v1421 = vsel %vm1296, %v1416, 0
        %1423 = vmatprep.subr.bf16.mxu0 0
        %1424 = vmatpush1.bf16.xpose.msra.mxu0 0
        %1425 = vmatprep.subr.bf16.mxu0 0
        %1426 = vmatpush1.bf16.xpose.msra.mxu0 0
        %1427 = vmatprep.subr.bf16.mxu0 0
        %1428 = vmatpush1.bf16.xpose.msra.mxu0 0
        %1429 = vmatprep.subr.bf16.mxu0 0
        %1430 = vmatpush1.bf16.xpose.msra.mxu0 0
        %1431 = vmatprep.subr.bf16.mxu0 0
        %1432 = vmatpush1.bf16.xpose.msra.mxu0 0
        %1433 = vmatprep.subr.bf16.mxu0 0
        %1434 = vmatpush1.bf16.xpose.msra.mxu0 0
        %1435 = vmatprep.subr.bf16.mxu0 0
        %1436 = vmatpush1.bf16.xpose.msra.mxu0 0
        %1437 = vmatprep.subr.bf16.mxu0 0
        %1438 = vmatpush1.bf16.xpose.msra.mxu0 %v1421
        %1439 = vmatprep.subr.bf16.mxu0 0
        %1440 = vmatpush2.bf16.xpose.msra.mxu0 0
        %1441 = vmatprep.subr.bf16.mxu0 0
        %1442 = vmatpush2.bf16.xpose.msra.mxu0 0
        %1443 = vmatprep.subr.bf16.mxu0 0
        %1444 = vmatpush2.bf16.xpose.msra.mxu0 0
        %1445 = vmatprep.subr.bf16.mxu0 0
        %1446 = vmatpush2.bf16.xpose.msra.mxu0 0
        %1447 = vmatprep.subr.bf16.mxu0 0
        %1448 = vmatpush2.bf16.xpose.msra.mxu0 0
        %1449 = vmatprep.subr.bf16.mxu0 0
        %1450 = vmatpush2.bf16.xpose.msra.mxu0 0
        %1451 = vmatprep.subr.bf16.mxu0 0
        %1452 = vmatpush2.bf16.xpose.msra.mxu0 0
        %1453 = vmatprep.subr.bf16.mxu0 0
        %1454 = vmatpush2.bf16.xpose.msra.mxu0 0
        %1455 = vmatprep.mubr.bf16.mxu0 0
        %1456 = vmatmul.mubr.bf16.gmra.mxu0 %v1418
        %v1457 = vpop.f32.mrf.mxu0
        %v1458 = vadd.f32 0.0, %v1457
        %v1459 = vpop.f32.mrf.mxu0
        %v1460 = vpop.f32.mrf.mxu0
        %v1461 = vpop.f32.mrf.mxu0
        %1462 = vdwg.mxu0
        %v1463 = vmul.f32 %v1458, 0.125
        %v1464 = vadd.f32 %v1463, %v1347
        %v1465 = vsel %vm1349, %v1464, -inf
        %1466 = vmax.xlane.f32.xlu0 %v1465
        %v1467 = vpop.xlane.xlu0 %1466
        %v1468 = vsub.f32 %v1464, %v1467
        %v1469 = vmul.f32 %v1468, 1.442695
        %v1470 = vpow.pop %v1469
        %v1471 = vsel %vm1349, %v1470, 0.0
        %1472 = vadd.xlane.f32.xlu0 %v1471
        %v1473 = vpop.xlane.xlu0 %1472
        %v1474 = vrcp.pop %v1473
        %v1475 = vmul.f32 %v1470, %v1474
        %v1476 = vpack.c.bf16 %v1475, %v1475
        %1478 = vrot.lane.b32.xlu0 %v1362, 64
        %v1479 = vpop.permute.xlu0 %1478
        %v1481 = vsel %vm1349, %v1476, 0
        %v1484 = vsel %vm1366, %v1479, 0
        %1486 = vmatprep.subr.bf16.mxu0 0
        %1487 = vmatpush1.bf16.msra.mxu0 0
        %1488 = vmatprep.subr.bf16.mxu0 0
        %1489 = vmatpush1.bf16.msra.mxu0 0
        %1490 = vmatprep.subr.bf16.mxu0 0
        %1491 = vmatpush1.bf16.msra.mxu0 0
        %1492 = vmatprep.subr.bf16.mxu0 0
        %1493 = vmatpush1.bf16.msra.mxu0 0
        %1494 = vmatprep.subr.bf16.mxu0 0
        %1495 = vmatpush1.bf16.msra.mxu0 0
        %1496 = vmatprep.subr.bf16.mxu0 0
        %1497 = vmatpush1.bf16.msra.mxu0 0
        %1498 = vmatprep.subr.bf16.mxu0 0
        %1499 = vmatpush1.bf16.msra.mxu0 0
        %1500 = vmatprep.subr.bf16.mxu0 0
        %1501 = vmatpush1.bf16.msra.mxu0 %v1484
        %1502 = vmatprep.subr.bf16.mxu0 0
        %1503 = vmatpush2.bf16.msra.mxu0 0
        %1504 = vmatprep.subr.bf16.mxu0 0
        %1505 = vmatpush2.bf16.msra.mxu0 0
        %1506 = vmatprep.subr.bf16.mxu0 0
        %1507 = vmatpush2.bf16.msra.mxu0 0
        %1508 = vmatprep.subr.bf16.mxu0 0
        %1509 = vmatpush2.bf16.msra.mxu0 0
        %1510 = vmatprep.subr.bf16.mxu0 0
        %1511 = vmatpush2.bf16.msra.mxu0 0
        %1512 = vmatprep.subr.bf16.mxu0 0
        %1513 = vmatpush2.bf16.msra.mxu0 0
        %1514 = vmatprep.subr.bf16.mxu0 0
        %1515 = vmatpush2.bf16.msra.mxu0 0
        %1516 = vmatprep.subr.bf16.mxu0 0
        %1517 = vmatpush2.bf16.msra.mxu0 0
        %1518 = vmatprep.mubr.bf16.mxu0 0
        %1519 = vmatmul.mubr.bf16.gmra.mxu0 %v1481
        %v1520 = vpop.f32.mrf.mxu0
        %v1521 = vadd.f32 0.0, %v1520
        %v1522 = vpop.f32.mrf.mxu0
        %v1523 = vpop.f32.mrf.mxu0
        %v1524 = vpop.f32.mrf.mxu0
        %1525 = vdwg.mxu0
        %1527 = vrot.lane.b32.xlu0 %v1521, 64
        %v1528 = vpop.permute.xlu0 %1527
        %vm1530 = vcmask 1048064
        %1531 = vst.msk [vmem:[#allocation3] sm:$0xff] %vm1530, %v1528
        %v1532 = vld [vmem:[#allocation7 + $0x1] sm:$0x1]
        %v1533 = vpack.c.bf16 %v1248, %v1248
        %v1534 = vpack.c.bf16 %v1250, %v1250
        %v1536 = vsel %vm1296, %v1533, 0
        %v1539 = vsel %vm1296, %v1534, 0
        %1541 = vmatprep.subr.bf16.mxu0 0
        %1542 = vmatpush1.bf16.xpose.msra.mxu0 0
        %1543 = vmatprep.subr.bf16.mxu0 0
        %1544 = vmatpush1.bf16.xpose.msra.mxu0 0
        %1545 = vmatprep.subr.bf16.mxu0 0
        %1546 = vmatpush1.bf16.xpose.msra.mxu0 0
        %1547 = vmatprep.subr.bf16.mxu0 0
        %1548 = vmatpush1.bf16.xpose.msra.mxu0 0
        %1549 = vmatprep.subr.bf16.mxu0 0
        %1550 = vmatpush1.bf16.xpose.msra.mxu0 0
        %1551 = vmatprep.subr.bf16.mxu0 0
        %1552 = vmatpush1.bf16.xpose.msra.mxu0 0
        %1553 = vmatprep.subr.bf16.mxu0 0
        %1554 = vmatpush1.bf16.xpose.msra.mxu0 0
        %1555 = vmatprep.subr.bf16.mxu0 0
        %1556 = vmatpush1.bf16.xpose.msra.mxu0 %v1539
        %1557 = vmatprep.subr.bf16.mxu0 0
        %1558 = vmatpush2.bf16.xpose.msra.mxu0 0
        %1559 = vmatprep.subr.bf16.mxu0 0
        %1560 = vmatpush2.bf16.xpose.msra.mxu0 0
        %1561 = vmatprep.subr.bf16.mxu0 0
        %1562 = vmatpush2.bf16.xpose.msra.mxu0 0
        %1563 = vmatprep.subr.bf16.mxu0 0
        %1564 = vmatpush2.bf16.xpose.msra.mxu0 0
        %1565 = vmatprep.subr.bf16.mxu0 0
        %1566 = vmatpush2.bf16.xpose.msra.mxu0 0
        %1567 = vmatprep.subr.bf16.mxu0 0
        %1568 = vmatpush2.bf16.xpose.msra.mxu0 0
        %1569 = vmatprep.subr.bf16.mxu0 0
        %1570 = vmatpush2.bf16.xpose.msra.mxu0 0
        %1571 = vmatprep.subr.bf16.mxu0 0
        %1572 = vmatpush2.bf16.xpose.msra.mxu0 0
        %1573 = vmatprep.mubr.bf16.mxu0 0
        %1574 = vmatmul.mubr.bf16.gmra.mxu0 %v1536
        %v1575 = vpop.f32.mrf.mxu0
        %v1576 = vadd.f32 0.0, %v1575
        %v1577 = vpop.f32.mrf.mxu0
        %v1578 = vpop.f32.mrf.mxu0
        %v1579 = vpop.f32.mrf.mxu0
        %1580 = vdwg.mxu0
        %v1581 = vmul.f32 %v1576, 0.125
        %v1582 = vlaneseq
        %v1583 = vshrl.u32 %v1582, 7
        %v1584 = vsub.s32 0, %v1583
        %v1585 = vrot.slane %v1532, %v1584
        %v1586 = vadd.f32 %v1581, %v1585
        %v1587 = vsel %vm1349, %v1586, -inf
        %1588 = vmax.xlane.f32.xlu0 %v1587
        %v1589 = vpop.xlane.xlu0 %1588
        %v1590 = vsub.f32 %v1586, %v1589
        %v1591 = vmul.f32 %v1590, 1.442695
        %v1592 = vpow.pop %v1591
        %v1593 = vsel %vm1349, %v1592, 0.0
        %1594 = vadd.xlane.f32.xlu0 %v1593
        %v1595 = vpop.xlane.xlu0 %1594
        %v1596 = vrcp.pop %v1595
        %v1597 = vmul.f32 %v1592, %v1596
        %v1598 = vpack.c.bf16 %v1597, %v1597
        %v1599 = vpack.c.bf16 %v1290, %v1290
        %v1601 = vsel %vm1349, %v1598, 0
        %v1604 = vsel %vm1366, %v1599, 0
        %1606 = vmatprep.subr.bf16.mxu0 0
        %1607 = vmatpush1.bf16.msra.mxu0 0
        %1608 = vmatprep.subr.bf16.mxu0 0
        %1609 = vmatpush1.bf16.msra.mxu0 0
        %1610 = vmatprep.subr.bf16.mxu0 0
        %1611 = vmatpush1.bf16.msra.mxu0 0
        %1612 = vmatprep.subr.bf16.mxu0 0
        %1613 = vmatpush1.bf16.msra.mxu0 0
        %1614 = vmatprep.subr.bf16.mxu0 0
        %1615 = vmatpush1.bf16.msra.mxu0 0
        %1616 = vmatprep.subr.bf16.mxu0 0
        %1617 = vmatpush1.bf16.msra.mxu0 0
        %1618 = vmatprep.subr.bf16.mxu0 0
        %1619 = vmatpush1.bf16.msra.mxu0 0
        %1620 = vmatprep.subr.bf16.mxu0 0
        %1621 = vmatpush1.bf16.msra.mxu0 %v1604
        %1622 = vmatprep.subr.bf16.mxu0 0
        %1623 = vmatpush2.bf16.msra.mxu0 0
        %1624 = vmatprep.subr.bf16.mxu0 0
        %1625 = vmatpush2.bf16.msra.mxu0 0
        %1626 = vmatprep.subr.bf16.mxu0 0
        %1627 = vmatpush2.bf16.msra.mxu0 0
        %1628 = vmatprep.subr.bf16.mxu0 0
        %1629 = vmatpush2.bf16.msra.mxu0 0
        %1630 = vmatprep.subr.bf16.mxu0 0
        %1631 = vmatpush2.bf16.msra.mxu0 0
        %1632 = vmatprep.subr.bf16.mxu0 0
        %1633 = vmatpush2.bf16.msra.mxu0 0
        %1634 = vmatprep.subr.bf16.mxu0 0
        %1635 = vmatpush2.bf16.msra.mxu0 0
        %1636 = vmatprep.subr.bf16.mxu0 0
        %1637 = vmatpush2.bf16.msra.mxu0 0
        %1638 = vmatprep.mubr.bf16.mxu0 0
        %1639 = vmatmul.mubr.bf16.gmra.mxu0 %v1601
        %v1640 = vpop.f32.mrf.mxu0
        %v1641 = vadd.f32 0.0, %v1640
        %v1642 = vpop.f32.mrf.mxu0
        %v1643 = vpop.f32.mrf.mxu0
        %v1644 = vpop.f32.mrf.mxu0
        %1645 = vdwg.mxu0
        %1646 = vst.msk [vmem:[#allocation3 + $0x8] sm:$0xff] %vm1296, %v1641
        %1648 = vrot.lane.b32.xlu0 %v1533, 64
        %v1649 = vpop.permute.xlu0 %1648
        %1651 = vrot.lane.b32.xlu0 %v1534, 64
        %v1652 = vpop.permute.xlu0 %1651
        %v1654 = vsel %vm1296, %v1649, 0
        %v1657 = vsel %vm1296, %v1652, 0
        %1659 = vmatprep.subr.bf16.mxu0 0
        %1660 = vmatpush1.bf16.xpose.msra.mxu0 0
        %1661 = vmatprep.subr.bf16.mxu0 0
        %1662 = vmatpush1.bf16.xpose.msra.mxu0 0
        %1663 = vmatprep.subr.bf16.mxu0 0
        %1664 = vmatpush1.bf16.xpose.msra.mxu0 0
        %1665 = vmatprep.subr.bf16.mxu0 0
        %1666 = vmatpush1.bf16.xpose.msra.mxu0 0
        %1667 = vmatprep.subr.bf16.mxu0 0
        %1668 = vmatpush1.bf16.xpose.msra.mxu0 0
        %1669 = vmatprep.subr.bf16.mxu0 0
        %1670 = vmatpush1.bf16.xpose.msra.mxu0 0
        %1671 = vmatprep.subr.bf16.mxu0 0
        %1672 = vmatpush1.bf16.xpose.msra.mxu0 0
        %1673 = vmatprep.subr.bf16.mxu0 0
        %1674 = vmatpush1.bf16.xpose.msra.mxu0 %v1657
        %1675 = vmatprep.subr.bf16.mxu0 0
        %1676 = vmatpush2.bf16.xpose.msra.mxu0 0
        %1677 = vmatprep.subr.bf16.mxu0 0
        %1678 = vmatpush2.bf16.xpose.msra.mxu0 0
        %1679 = vmatprep.subr.bf16.mxu0 0
        %1680 = vmatpush2.bf16.xpose.msra.mxu0 0
        %1681 = vmatprep.subr.bf16.mxu0 0
        %1682 = vmatpush2.bf16.xpose.msra.mxu0 0
        %1683 = vmatprep.subr.bf16.mxu0 0
        %1684 = vmatpush2.bf16.xpose.msra.mxu0 0
        %1685 = vmatprep.subr.bf16.mxu0 0
        %1686 = vmatpush2.bf16.xpose.msra.mxu0 0
        %1687 = vmatprep.subr.bf16.mxu0 0
        %1688 = vmatpush2.bf16.xpose.msra.mxu0 0
        %1689 = vmatprep.subr.bf16.mxu0 0
        %1690 = vmatpush2.bf16.xpose.msra.mxu0 0
        %1691 = vmatprep.mubr.bf16.mxu0 0
        %1692 = vmatmul.mubr.bf16.gmra.mxu0 %v1654
        %v1693 = vpop.f32.mrf.mxu0
        %v1694 = vadd.f32 0.0, %v1693
        %v1695 = vpop.f32.mrf.mxu0
        %v1696 = vpop.f32.mrf.mxu0
        %v1697 = vpop.f32.mrf.mxu0
        %1698 = vdwg.mxu0
        %v1699 = vmul.f32 %v1694, 0.125
        %v1700 = vadd.f32 %v1699, %v1585
        %v1701 = vsel %vm1349, %v1700, -inf
        %1702 = vmax.xlane.f32.xlu0 %v1701
        %v1703 = vpop.xlane.xlu0 %1702
        %v1704 = vsub.f32 %v1700, %v1703
        %v1705 = vmul.f32 %v1704, 1.442695
        %v1706 = vpow.pop %v1705
        %v1707 = vsel %vm1349, %v1706, 0.0
        %1708 = vadd.xlane.f32.xlu0 %v1707
        %v1709 = vpop.xlane.xlu0 %1708
        %v1710 = vrcp.pop %v1709
        %v1711 = vmul.f32 %v1706, %v1710
        %v1712 = vpack.c.bf16 %v1711, %v1711
        %1714 = vrot.lane.b32.xlu0 %v1599, 64
        %v1715 = vpop.permute.xlu0 %1714
        %v1717 = vsel %vm1349, %v1712, 0
        %v1720 = vsel %vm1366, %v1715, 0
        %1722 = vmatprep.subr.bf16.mxu0 0
        %1723 = vmatpush1.bf16.msra.mxu0 0
        %1724 = vmatprep.subr.bf16.mxu0 0
        %1725 = vmatpush1.bf16.msra.mxu0 0
        %1726 = vmatprep.subr.bf16.mxu0 0
        %1727 = vmatpush1.bf16.msra.mxu0 0
        %1728 = vmatprep.subr.bf16.mxu0 0
        %1729 = vmatpush1.bf16.msra.mxu0 0
        %1730 = vmatprep.subr.bf16.mxu0 0
        %1731 = vmatpush1.bf16.msra.mxu0 0
        %1732 = vmatprep.subr.bf16.mxu0 0
        %1733 = vmatpush1.bf16.msra.mxu0 0
        %1734 = vmatprep.subr.bf16.mxu0 0
        %1735 = vmatpush1.bf16.msra.mxu0 0
        %1736 = vmatprep.subr.bf16.mxu0 0
        %1737 = vmatpush1.bf16.msra.mxu0 %v1720
        %1738 = vmatprep.subr.bf16.mxu0 0
        %1739 = vmatpush2.bf16.msra.mxu0 0
        %1740 = vmatprep.subr.bf16.mxu0 0
        %1741 = vmatpush2.bf16.msra.mxu0 0
        %1742 = vmatprep.subr.bf16.mxu0 0
        %1743 = vmatpush2.bf16.msra.mxu0 0
        %1744 = vmatprep.subr.bf16.mxu0 0
        %1745 = vmatpush2.bf16.msra.mxu0 0
        %1746 = vmatprep.subr.bf16.mxu0 0
        %1747 = vmatpush2.bf16.msra.mxu0 0
        %1748 = vmatprep.subr.bf16.mxu0 0
        %1749 = vmatpush2.bf16.msra.mxu0 0
        %1750 = vmatprep.subr.bf16.mxu0 0
        %1751 = vmatpush2.bf16.msra.mxu0 0
        %1752 = vmatprep.subr.bf16.mxu0 0
        %1753 = vmatpush2.bf16.msra.mxu0 0
        %1754 = vmatprep.mubr.bf16.mxu0 0
        %1755 = vmatmul.mubr.bf16.gmra.mxu0 %v1717
        %v1756 = vpop.f32.mrf.mxu0
        %v1757 = vadd.f32 0.0, %v1756
        %v1758 = vpop.f32.mrf.mxu0
        %v1759 = vpop.f32.mrf.mxu0
        %v1760 = vpop.f32.mrf.mxu0
        %1761 = vdwg.mxu0
        %1763 = vrot.lane.b32.xlu0 %v1757, 64
        %v1764 = vpop.permute.xlu0 %1763
        %1766 = vst.msk [vmem:[#allocation3 + $0x8] sm:$0xff] %vm1530, %v1764
        %v1767 = vld [vmem:[#allocation3] sm:$0xff]
        %v1768 = vld [vmem:[#allocation3 + $0x8] sm:$0xff]
        %v1769 = vpack.c.bf16 %v1768, %v1767
        %v1770 = vld [vmem:[%s820] sm:$0xf]
        %v1771 = vld [vmem:[%s820 + $0x4] sm:$0xf]
        %v1772 = vld [vmem:[%s820 + $0x8] sm:$0xf]
        %v1773 = vld [vmem:[%s820 + $0xc] sm:$0xf]
        %v1774 = vld [vmem:[%s820 + $0x10] sm:$0xf]
        %v1775 = vld [vmem:[%s820 + $0x14] sm:$0xf]
        %v1776 = vld [vmem:[%s820 + $0x18] sm:$0xf]
        %v1777 = vld [vmem:[%s820 + $0x1c] sm:$0xf]
        %v1778 = vld [vmem:[%s820 + $0x20] sm:$0xf]
        %v1779 = vld [vmem:[%s820 + $0x24] sm:$0xf]
        %v1780 = vld [vmem:[%s820 + $0x28] sm:$0xf]
        %v1781 = vld [vmem:[%s820 + $0x2c] sm:$0xf]
        %v1782 = vld [vmem:[%s820 + $0x30] sm:$0xf]
        %v1783 = vld [vmem:[%s820 + $0x34] sm:$0xf]
        %v1784 = vld [vmem:[%s820 + $0x38] sm:$0xf]
        %v1785 = vld [vmem:[%s820 + $0x3c] sm:$0xf]
        %v1786 = vld [vmem:[%s963] sm:$0x1]
        %v1788 = vlaneseq
        %v1789 = vshrl.u32 %v1788, 7
        %v1790 = vsub.s32 0, %v1789
        %v1791 = vrot.slane %v1786, %v1790
        %v1809 = vunpack.c.l.b16 %v1770
        %v1810 = vunpack.c.l.b16 %v1771
        %v1811 = vunpack.c.l.b16 %v1772
        %v1812 = vunpack.c.l.b16 %v1773
        %v1813 = vunpack.c.l.b16 %v1774
        %v1814 = vunpack.c.l.b16 %v1775
        %v1815 = vunpack.c.l.b16 %v1776
        %v1816 = vunpack.c.l.b16 %v1777
        %v1817 = vunpack.c.l.b16 %v1778
        %v1818 = vunpack.c.l.b16 %v1779
        %v1819 = vunpack.c.l.b16 %v1780
        %v1820 = vunpack.c.l.b16 %v1781
        %v1821 = vunpack.c.l.b16 %v1782
        %v1822 = vunpack.c.l.b16 %v1783
        %v1823 = vunpack.c.l.b16 %v1784
        %v1824 = vunpack.c.l.b16 %v1785
        %v1825 = vpack.c.b16 %v1810, %v1809
        %v1826 = vpack.c.b16 %v1812, %v1811
        %v1827 = vpack.c.b16 %v1814, %v1813
        %v1828 = vpack.c.b16 %v1816, %v1815
        %v1829 = vpack.c.b16 %v1818, %v1817
        %v1830 = vpack.c.b16 %v1820, %v1819
        %v1831 = vpack.c.b16 %v1822, %v1821
        %v1832 = vpack.c.b16 %v1824, %v1823
        %1841 = vmatprep.subr.bf16.mxu0 0
        %1842 = vmatpush1.bf16.msra.mxu0 %v1832
        %1843 = vmatprep.subr.bf16.mxu0 0
        %1844 = vmatpush1.bf16.msra.mxu0 %v1831
        %1845 = vmatprep.subr.bf16.mxu0 0
        %1846 = vmatpush1.bf16.msra.mxu0 %v1830
        %1847 = vmatprep.subr.bf16.mxu0 0
        %1848 = vmatpush1.bf16.msra.mxu0 %v1829
        %1849 = vmatprep.subr.bf16.mxu0 0
        %1850 = vmatpush1.bf16.msra.mxu0 %v1828
        %1851 = vmatprep.subr.bf16.mxu0 0
        %1852 = vmatpush1.bf16.msra.mxu0 %v1827
        %1853 = vmatprep.subr.bf16.mxu0 0
        %1854 = vmatpush1.bf16.msra.mxu0 %v1826
        %1855 = vmatprep.subr.bf16.mxu0 0
        %1856 = vmatpush1.bf16.msra.mxu0 %v1825
        %1857 = vmatprep.subr.bf16.mxu0 0
        %1858 = vmatpush2.bf16.msra.mxu0 0
        %1859 = vmatprep.subr.bf16.mxu0 0
        %1860 = vmatpush2.bf16.msra.mxu0 0
        %1861 = vmatprep.subr.bf16.mxu0 0
        %1862 = vmatpush2.bf16.msra.mxu0 0
        %1863 = vmatprep.subr.bf16.mxu0 0
        %1864 = vmatpush2.bf16.msra.mxu0 0
        %1865 = vmatprep.subr.bf16.mxu0 0
        %1866 = vmatpush2.bf16.msra.mxu0 0
        %1867 = vmatprep.subr.bf16.mxu0 0
        %1868 = vmatpush2.bf16.msra.mxu0 0
        %1869 = vmatprep.subr.bf16.mxu0 0
        %1870 = vmatpush2.bf16.msra.mxu0 0
        %1871 = vmatprep.subr.bf16.mxu0 0
        %1872 = vmatpush2.bf16.msra.mxu0 0
        %1873 = vmatprep.mubr.bf16.mxu0 0
        %1874 = vmatmul.mubr.bf16.gmra.mxu0 %v1769
        %v1875 = vpop.f32.mrf.mxu0
        %v1876 = vadd.f32 %v1791, %v1875
        %v1877 = vpop.f32.mrf.mxu0
        %v1878 = vpop.f32.mrf.mxu0
        %v1879 = vadd.f32 %v1791, %v1878
        %v1880 = vpop.f32.mrf.mxu0
        %1881 = vdwg.mxu0
        %v1882 = vadd.f32 %v1029, %v1876
        %v1883 = vadd.f32 %v1030, %v1879
        %v1884 = vld [vmem:[%s828] sm:$0x1]
        %v1885 = vld [vmem:[%s836] sm:$0x1]
        %1886 = vadd.xlane.f32.xlu0 %v1882
        %v1887 = vpop.xlane.xlu0 %1886
        %1888 = vadd.xlane.f32.xlu0 %v1883
        %v1889 = vpop.xlane.xlu0 %1888
        %v1890 = vrcp.pop 128.0
        %v1891 = vmul.f32 %v1887, %v1890
        %v1892 = vmul.f32 %v1889, %v1890
        %v1893 = vsub.f32 %v1882, %v1891
        %v1894 = vsub.f32 %v1883, %v1892
        %v1895 = vmul.f32 %v1893, %v1893
        %v1896 = vmul.f32 %v1894, %v1894
        %1897 = vadd.xlane.f32.xlu0 %v1895
        %v1898 = vpop.xlane.xlu0 %1897
        %1899 = vadd.xlane.f32.xlu0 %v1896
        %v1900 = vpop.xlane.xlu0 %1899
        %v1901 = vmul.f32 %v1898, %v1890
        %v1902 = vmul.f32 %v1900, %v1890
        %v1903 = vadd.f32 %v1901, 1e-12
        %v1904 = vadd.f32 %v1902, 1e-12
        %v1905 = vrsqrt.pop %v1903
        %v1906 = vrsqrt.pop %v1904
        %v1907 = vmul.f32 %v1893, %v1905
        %v1908 = vmul.f32 %v1894, %v1906
        %v1910 = vlaneseq
        %v1911 = vshrl.u32 %v1910, 7
        %v1912 = vsub.s32 0, %v1911
        %v1913 = vrot.slane %v1884, %v1912
        %v1915 = vmul.f32 %v1907, %v1913
        %v1916 = vmul.f32 %v1908, %v1913
        %v1918 = vlaneseq
        %v1919 = vshrl.u32 %v1918, 7
        %v1920 = vsub.s32 0, %v1919
        %v1921 = vrot.slane %v1885, %v1920
        %v1923 = vadd.f32 %v1915, %v1921
        %v1924 = vadd.f32 %v1916, %v1921
        %v1925 = vpack.c.bf16 %v1924, %v1923
        %v1926 = vld [vmem:[%s845] sm:$0xff]
        %v1927 = vld [vmem:[%s845 + $0x8] sm:$0xff]
        %v1928 = vld [vmem:[%s845 + $0x10] sm:$0xff]
        %v1929 = vld [vmem:[%s845 + $0x18] sm:$0xff]
        %v1930 = vld [vmem:[%s845 + $0x20] sm:$0xff]
        %v1931 = vld [vmem:[%s845 + $0x28] sm:$0xff]
        %v1932 = vld [vmem:[%s845 + $0x30] sm:$0xff]
        %v1933 = vld [vmem:[%s845 + $0x38] sm:$0xff]
        %v1934 = vld [vmem:[%s845 + $0x40] sm:$0xff]
        %v1935 = vld [vmem:[%s845 + $0x48] sm:$0xff]
        %v1936 = vld [vmem:[%s845 + $0x50] sm:$0xff]
        %v1937 = vld [vmem:[%s845 + $0x58] sm:$0xff]
        %v1938 = vld [vmem:[%s845 + $0x60] sm:$0xff]
        %v1939 = vld [vmem:[%s845 + $0x68] sm:$0xff]
        %v1940 = vld [vmem:[%s845 + $0x70] sm:$0xff]
        %v1941 = vld [vmem:[%s845 + $0x78] sm:$0xff]
        %v1942 = vld [vmem:[%s845 + $0x80] sm:$0xff]
        %v1943 = vld [vmem:[%s845 + $0x88] sm:$0xff]
        %v1944 = vld [vmem:[%s845 + $0x90] sm:$0xff]
        %v1945 = vld [vmem:[%s845 + $0x98] sm:$0xff]
        %v1946 = vld [vmem:[%s845 + $0xa0] sm:$0xff]
        %v1947 = vld [vmem:[%s845 + $0xa8] sm:$0xff]
        %v1948 = vld [vmem:[%s845 + $0xb0] sm:$0xff]
        %v1949 = vld [vmem:[%s845 + $0xb8] sm:$0xff]
        %v1950 = vld [vmem:[%s845 + $0xc0] sm:$0xff]
        %v1951 = vld [vmem:[%s845 + $0xc8] sm:$0xff]
        %v1952 = vld [vmem:[%s845 + $0xd0] sm:$0xff]
        %v1953 = vld [vmem:[%s845 + $0xd8] sm:$0xff]
        %v1954 = vld [vmem:[%s845 + $0xe0] sm:$0xff]
        %v1955 = vld [vmem:[%s845 + $0xe8] sm:$0xff]
        %v1956 = vld [vmem:[%s845 + $0xf0] sm:$0xff]
        %v1957 = vld [vmem:[%s845 + $0xf8] sm:$0xff]
        %v1958 = vld [vmem:[%s967] sm:$0xf]
        %v1960 = vlaneseq
        %v1961 = vshrl.u32 %v1960, 7
        %v1962 = vsub.s32 0, %v1961
        %v1963 = vrot.slane %v1958, %v1962
        %v1964 = vlaneseq
        %v1965 = vshrl.u32 %v1964, 7
        %v1966 = vsub.s32 1, %v1965
        %v1967 = vrot.slane %v1958, %v1966
        %v1968 = vlaneseq
        %v1969 = vshrl.u32 %v1968, 7
        %v1970 = vsub.s32 2, %v1969
        %v1971 = vrot.slane %v1958, %v1970
        %v1972 = vlaneseq
        %v1973 = vshrl.u32 %v1972, 7
        %v1974 = vsub.s32 3, %v1973
        %v1975 = vrot.slane %v1958, %v1974
        %v2012 = vunpack.c.l.b16 %v1926
        %v2013 = vunpack.c.h.b16 %v1926
        %v2014 = vunpack.c.l.b16 %v1927
        %v2015 = vunpack.c.h.b16 %v1927
        %v2016 = vunpack.c.l.b16 %v1928
        %v2017 = vunpack.c.h.b16 %v1928
        %v2018 = vunpack.c.l.b16 %v1929
        %v2019 = vunpack.c.h.b16 %v1929
        %v2020 = vunpack.c.l.b16 %v1930
        %v2021 = vunpack.c.h.b16 %v1930
        %v2022 = vunpack.c.l.b16 %v1931
        %v2023 = vunpack.c.h.b16 %v1931
        %v2024 = vunpack.c.l.b16 %v1932
        %v2025 = vunpack.c.h.b16 %v1932
        %v2026 = vunpack.c.l.b16 %v1933
        %v2027 = vunpack.c.h.b16 %v1933
        %v2028 = vunpack.c.l.b16 %v1934
        %v2029 = vunpack.c.h.b16 %v1934
        %v2030 = vunpack.c.l.b16 %v1935
        %v2031 = vunpack.c.h.b16 %v1935
        %v2032 = vunpack.c.l.b16 %v1936
        %v2033 = vunpack.c.h.b16 %v1936
        %v2034 = vunpack.c.l.b16 %v1937
        %v2035 = vunpack.c.h.b16 %v1937
        %v2036 = vunpack.c.l.b16 %v1938
        %v2037 = vunpack.c.h.b16 %v1938
        %v2038 = vunpack.c.l.b16 %v1939
        %v2039 = vunpack.c.h.b16 %v1939
        %v2040 = vunpack.c.l.b16 %v1940
        %v2041 = vunpack.c.h.b16 %v1940
        %v2042 = vunpack.c.l.b16 %v1941
        %v2043 = vunpack.c.h.b16 %v1941
        %v2044 = vunpack.c.l.b16 %v1942
        %v2045 = vunpack.c.h.b16 %v1942
        %v2046 = vunpack.c.l.b16 %v1943
        %v2047 = vunpack.c.h.b16 %v1943
        %v2048 = vunpack.c.l.b16 %v1944
        %v2049 = vunpack.c.h.b16 %v1944
        %v2050 = vunpack.c.l.b16 %v1945
        %v2051 = vunpack.c.h.b16 %v1945
        %v2052 = vunpack.c.l.b16 %v1946
        %v2053 = vunpack.c.h.b16 %v1946
        %v2054 = vunpack.c.l.b16 %v1947
        %v2055 = vunpack.c.h.b16 %v1947
        %v2056 = vunpack.c.l.b16 %v1948
        %v2057 = vunpack.c.h.b16 %v1948
        %v2058 = vunpack.c.l.b16 %v1949
        %v2059 = vunpack.c.h.b16 %v1949
        %v2060 = vunpack.c.l.b16 %v1950
        %v2061 = vunpack.c.h.b16 %v1950
        %v2062 = vunpack.c.l.b16 %v1951
        %v2063 = vunpack.c.h.b16 %v1951
        %v2064 = vunpack.c.l.b16 %v1952
        %v2065 = vunpack.c.h.b16 %v1952
        %v2066 = vunpack.c.l.b16 %v1953
        %v2067 = vunpack.c.h.b16 %v1953
        %v2068 = vunpack.c.l.b16 %v1954
        %v2069 = vunpack.c.h.b16 %v1954
        %v2070 = vunpack.c.l.b16 %v1955
        %v2071 = vunpack.c.h.b16 %v1955
        %v2072 = vunpack.c.l.b16 %v1956
        %v2073 = vunpack.c.h.b16 %v1956
        %v2074 = vunpack.c.l.b16 %v1957
        %v2075 = vunpack.c.h.b16 %v1957
        %v2076 = vpack.c.b16 %v2016, %v2012
        %v2077 = vpack.c.b16 %v2017, %v2013
        %v2078 = vpack.c.b16 %v2018, %v2014
        %v2079 = vpack.c.b16 %v2019, %v2015
        %v2080 = vpack.c.b16 %v2024, %v2020
        %v2081 = vpack.c.b16 %v2025, %v2021
        %v2082 = vpack.c.b16 %v2026, %v2022
        %v2083 = vpack.c.b16 %v2027, %v2023
        %v2084 = vpack.c.b16 %v2032, %v2028
        %v2085 = vpack.c.b16 %v2033, %v2029
        %v2086 = vpack.c.b16 %v2034, %v2030
        %v2087 = vpack.c.b16 %v2035, %v2031
        %v2088 = vpack.c.b16 %v2040, %v2036
        %v2089 = vpack.c.b16 %v2041, %v2037
        %v2090 = vpack.c.b16 %v2042, %v2038
        %v2091 = vpack.c.b16 %v2043, %v2039
        %v2092 = vpack.c.b16 %v2048, %v2044
        %v2093 = vpack.c.b16 %v2049, %v2045
        %v2094 = vpack.c.b16 %v2050, %v2046
        %v2095 = vpack.c.b16 %v2051, %v2047
        %v2096 = vpack.c.b16 %v2056, %v2052
        %v2097 = vpack.c.b16 %v2057, %v2053
        %v2098 = vpack.c.b16 %v2058, %v2054
        %v2099 = vpack.c.b16 %v2059, %v2055
        %v2100 = vpack.c.b16 %v2064, %v2060
        %v2101 = vpack.c.b16 %v2065, %v2061
        %v2102 = vpack.c.b16 %v2066, %v2062
        %v2103 = vpack.c.b16 %v2067, %v2063
        %v2104 = vpack.c.b16 %v2072, %v2068
        %v2105 = vpack.c.b16 %v2073, %v2069
        %v2106 = vpack.c.b16 %v2074, %v2070
        %v2107 = vpack.c.b16 %v2075, %v2071
        %2140 = vmatprep.subr.bf16.mxu0 %v2105
        %2141 = vmatpush1.bf16.msra.mxu0 %v2104
        %2142 = vmatprep.subr.bf16.mxu0 %v2101
        %2143 = vmatpush1.bf16.msra.mxu0 %v2100
        %2144 = vmatprep.subr.bf16.mxu0 %v2097
        %2145 = vmatpush1.bf16.msra.mxu0 %v2096
        %2146 = vmatprep.subr.bf16.mxu0 %v2093
        %2147 = vmatpush1.bf16.msra.mxu0 %v2092
        %2148 = vmatprep.subr.bf16.mxu0 %v2089
        %2149 = vmatpush1.bf16.msra.mxu0 %v2088
        %2150 = vmatprep.subr.bf16.mxu0 %v2085
        %2151 = vmatpush1.bf16.msra.mxu0 %v2084
        %2152 = vmatprep.subr.bf16.mxu0 %v2081
        %2153 = vmatpush1.bf16.msra.mxu0 %v2080
        %2154 = vmatprep.subr.bf16.mxu0 %v2077
        %2155 = vmatpush1.bf16.msra.mxu0 %v2076
        %2156 = vmatprep.subr.bf16.mxu0 0
        %2157 = vmatpush2.bf16.msra.mxu0 0
        %2158 = vmatprep.subr.bf16.mxu0 0
        %2159 = vmatpush2.bf16.msra.mxu0 0
        %2160 = vmatprep.subr.bf16.mxu0 0
        %2161 = vmatpush2.bf16.msra.mxu0 0
        %2162 = vmatprep.subr.bf16.mxu0 0
        %2163 = vmatpush2.bf16.msra.mxu0 0
        %2164 = vmatprep.subr.bf16.mxu0 0
        %2165 = vmatpush2.bf16.msra.mxu0 0
        %2166 = vmatprep.subr.bf16.mxu0 0
        %2167 = vmatpush2.bf16.msra.mxu0 0
        %2168 = vmatprep.subr.bf16.mxu0 0
        %2169 = vmatpush2.bf16.msra.mxu0 0
        %2170 = vmatprep.subr.bf16.mxu0 0
        %2171 = vmatpush2.bf16.msra.mxu0 0
        %2172 = vmatprep.mubr.bf16.mxu0 0
        %2173 = vmatmul.mubr.bf16.gmra.mxu0 %v1925
        %v2174 = vpop.f32.mrf.mxu0
        %v2175 = vadd.f32 %v1963, %v2174
        %v2176 = vpop.f32.mrf.mxu0
        %v2177 = vadd.f32 %v1967, %v2176
        %v2178 = vpop.f32.mrf.mxu0
        %v2179 = vadd.f32 %v1963, %v2178
        %v2180 = vpop.f32.mrf.mxu0
        %v2181 = vadd.f32 %v1967, %v2180
        %2182 = vdwg.mxu0
        %2183 = vmatprep.subr.bf16.mxu0 %v2107
        %2184 = vmatpush1.bf16.msra.mxu0 %v2106
        %2185 = vmatprep.subr.bf16.mxu0 %v2103
        %2186 = vmatpush1.bf16.msra.mxu0 %v2102
        %2187 = vmatprep.subr.bf16.mxu0 %v2099
        %2188 = vmatpush1.bf16.msra.mxu0 %v2098
        %2189 = vmatprep.subr.bf16.mxu0 %v2095
        %2190 = vmatpush1.bf16.msra.mxu0 %v2094
        %2191 = vmatprep.subr.bf16.mxu0 %v2091
        %2192 = vmatpush1.bf16.msra.mxu0 %v2090
        %2193 = vmatprep.subr.bf16.mxu0 %v2087
        %2194 = vmatpush1.bf16.msra.mxu0 %v2086
        %2195 = vmatprep.subr.bf16.mxu0 %v2083
        %2196 = vmatpush1.bf16.msra.mxu0 %v2082
        %2197 = vmatprep.subr.bf16.mxu0 %v2079
        %2198 = vmatpush1.bf16.msra.mxu0 %v2078
        %2199 = vmatprep.subr.bf16.mxu0 0
        %2200 = vmatpush2.bf16.msra.mxu0 0
        %2201 = vmatprep.subr.bf16.mxu0 0
        %2202 = vmatpush2.bf16.msra.mxu0 0
        %2203 = vmatprep.subr.bf16.mxu0 0
        %2204 = vmatpush2.bf16.msra.mxu0 0
        %2205 = vmatprep.subr.bf16.mxu0 0
        %2206 = vmatpush2.bf16.msra.mxu0 0
        %2207 = vmatprep.subr.bf16.mxu0 0
        %2208 = vmatpush2.bf16.msra.mxu0 0
        %2209 = vmatprep.subr.bf16.mxu0 0
        %2210 = vmatpush2.bf16.msra.mxu0 0
        %2211 = vmatprep.subr.bf16.mxu0 0
        %2212 = vmatpush2.bf16.msra.mxu0 0
        %2213 = vmatprep.subr.bf16.mxu0 0
        %2214 = vmatpush2.bf16.msra.mxu0 0
        %2215 = vmatprep.mubr.bf16.mxu0 0
        %2216 = vmatmul.mubr.bf16.gmra.mxu0 %v1925
        %v2217 = vpop.f32.mrf.mxu0
        %v2218 = vadd.f32 %v1971, %v2217
        %v2219 = vpop.f32.mrf.mxu0
        %v2220 = vadd.f32 %v1975, %v2219
        %v2221 = vpop.f32.mrf.mxu0
        %v2222 = vadd.f32 %v1971, %v2221
        %v2223 = vpop.f32.mrf.mxu0
        %v2224 = vadd.f32 %v1975, %v2223
        %2225 = vdwg.mxu0
        %v2226 = vmul.f32 %v2175, 0.5
        %v2227 = vmul.f32 %v2177, 0.5
        %v2228 = vmul.f32 %v2218, 0.5
        %v2229 = vmul.f32 %v2220, 0.5
        %v2230 = vmul.f32 %v2179, 0.5
        %v2231 = vmul.f32 %v2181, 0.5
        %v2232 = vmul.f32 %v2222, 0.5
        %v2233 = vmul.f32 %v2224, 0.5
        %v2234 = vmul.f32 %v2175, 0.044715
        %v2235 = vmul.f32 %v2177, 0.044715
        %v2236 = vmul.f32 %v2218, 0.044715
        %v2237 = vmul.f32 %v2220, 0.044715
        %v2238 = vmul.f32 %v2179, 0.044715
        %v2239 = vmul.f32 %v2181, 0.044715
        %v2240 = vmul.f32 %v2222, 0.044715
        %v2241 = vmul.f32 %v2224, 0.044715
        %v2242 = vmul.f32 %v2234, %v2175
        %v2243 = vmul.f32 %v2235, %v2177
        %v2244 = vmul.f32 %v2236, %v2218
        %v2245 = vmul.f32 %v2237, %v2220
        %v2246 = vmul.f32 %v2238, %v2179
        %v2247 = vmul.f32 %v2239, %v2181
        %v2248 = vmul.f32 %v2240, %v2222
        %v2249 = vmul.f32 %v2241, %v2224
        %v2250 = vmul.f32 %v2242, %v2175
        %v2251 = vmul.f32 %v2243, %v2177
        %v2252 = vmul.f32 %v2244, %v2218
        %v2253 = vmul.f32 %v2245, %v2220
        %v2254 = vmul.f32 %v2246, %v2179
        %v2255 = vmul.f32 %v2247, %v2181
        %v2256 = vmul.f32 %v2248, %v2222
        %v2257 = vmul.f32 %v2249, %v2224
        %v2258 = vadd.f32 %v2175, %v2250
        %v2259 = vadd.f32 %v2177, %v2251
        %v2260 = vadd.f32 %v2218, %v2252
        %v2261 = vadd.f32 %v2220, %v2253
        %v2262 = vadd.f32 %v2179, %v2254
        %v2263 = vadd.f32 %v2181, %v2255
        %v2264 = vadd.f32 %v2222, %v2256
        %v2265 = vadd.f32 %v2224, %v2257
        %v2266 = vmul.f32 %v2258, 0.7978846
        %v2267 = vmul.f32 %v2259, 0.7978846
        %v2268 = vmul.f32 %v2260, 0.7978846
        %v2269 = vmul.f32 %v2261, 0.7978846
        %v2270 = vmul.f32 %v2262, 0.7978846
        %v2271 = vmul.f32 %v2263, 0.7978846
        %v2272 = vmul.f32 %v2264, 0.7978846
        %v2273 = vmul.f32 %v2265, 0.7978846
        %v2274 = vtanh.pop %v2266
        %v2275 = vtanh.pop %v2267
        %v2276 = vtanh.pop %v2268
        %v2277 = vtanh.pop %v2269
        %v2278 = vtanh.pop %v2270
        %v2279 = vtanh.pop %v2271
        %v2280 = vtanh.pop %v2272
        %v2281 = vtanh.pop %v2273
        %v2282 = vadd.f32 %v2274, 1.0
        %v2283 = vadd.f32 %v2275, 1.0
        %v2284 = vadd.f32 %v2276, 1.0
        %v2285 = vadd.f32 %v2277, 1.0
        %v2286 = vadd.f32 %v2278, 1.0
        %v2287 = vadd.f32 %v2279, 1.0
        %v2288 = vadd.f32 %v2280, 1.0
        %v2289 = vadd.f32 %v2281, 1.0
        %v2290 = vmul.f32 %v2226, %v2282
        %v2291 = vmul.f32 %v2227, %v2283
        %v2292 = vmul.f32 %v2228, %v2284
        %v2293 = vmul.f32 %v2229, %v2285
        %v2294 = vmul.f32 %v2230, %v2286
        %v2295 = vmul.f32 %v2231, %v2287
        %v2296 = vmul.f32 %v2232, %v2288
        %v2297 = vmul.f32 %v2233, %v2289
        %v2298 = vpack.c.bf16 %v2294, %v2290
        %v2299 = vpack.c.bf16 %v2295, %v2291
        %v2300 = vpack.c.bf16 %v2296, %v2292
        %v2301 = vpack.c.bf16 %v2297, %v2293
        %v2302 = vld [vmem:[%s854] sm:$0xf]
        %v2303 = vld [vmem:[%s854 + $0x4] sm:$0xf]
        %v2304 = vld [vmem:[%s854 + $0x8] sm:$0xf]
        %v2305 = vld [vmem:[%s854 + $0xc] sm:$0xf]
        %v2306 = vld [vmem:[%s854 + $0x10] sm:$0xf]
        %v2307 = vld [vmem:[%s854 + $0x14] sm:$0xf]
        %v2308 = vld [vmem:[%s854 + $0x18] sm:$0xf]
        %v2309 = vld [vmem:[%s854 + $0x1c] sm:$0xf]
        %v2310 = vld [vmem:[%s854 + $0x20] sm:$0xf]
        %v2311 = vld [vmem:[%s854 + $0x24] sm:$0xf]
        %v2312 = vld [vmem:[%s854 + $0x28] sm:$0xf]
        %v2313 = vld [vmem:[%s854 + $0x2c] sm:$0xf]
        %v2314 = vld [vmem:[%s854 + $0x30] sm:$0xf]
        %v2315 = vld [vmem:[%s854 + $0x34] sm:$0xf]
        %v2316 = vld [vmem:[%s854 + $0x38] sm:$0xf]
        %v2317 = vld [vmem:[%s854 + $0x3c] sm:$0xf]
        %v2318 = vld [vmem:[%s854 + $0x40] sm:$0xf]
        %v2319 = vld [vmem:[%s854 + $0x44] sm:$0xf]
        %v2320 = vld [vmem:[%s854 + $0x48] sm:$0xf]
        %v2321 = vld [vmem:[%s854 + $0x4c] sm:$0xf]
        %v2322 = vld [vmem:[%s854 + $0x50] sm:$0xf]
        %v2323 = vld [vmem:[%s854 + $0x54] sm:$0xf]
        %v2324 = vld [vmem:[%s854 + $0x58] sm:$0xf]
        %v2325 = vld [vmem:[%s854 + $0x5c] sm:$0xf]
        %v2326 = vld [vmem:[%s854 + $0x60] sm:$0xf]
        %v2327 = vld [vmem:[%s854 + $0x64] sm:$0xf]
        %v2328 = vld [vmem:[%s854 + $0x68] sm:$0xf]
        %v2329 = vld [vmem:[%s854 + $0x6c] sm:$0xf]
        %v2330 = vld [vmem:[%s854 + $0x70] sm:$0xf]
        %v2331 = vld [vmem:[%s854 + $0x74] sm:$0xf]
        %v2332 = vld [vmem:[%s854 + $0x78] sm:$0xf]
        %v2333 = vld [vmem:[%s854 + $0x7c] sm:$0xf]
        %v2334 = vld [vmem:[%s854 + $0x80] sm:$0xf]
        %v2335 = vld [vmem:[%s854 + $0x84] sm:$0xf]
        %v2336 = vld [vmem:[%s854 + $0x88] sm:$0xf]
        %v2337 = vld [vmem:[%s854 + $0x8c] sm:$0xf]
        %v2338 = vld [vmem:[%s854 + $0x90] sm:$0xf]
        %v2339 = vld [vmem:[%s854 + $0x94] sm:$0xf]
        %v2340 = vld [vmem:[%s854 + $0x98] sm:$0xf]
        %v2341 = vld [vmem:[%s854 + $0x9c] sm:$0xf]
        %v2342 = vld [vmem:[%s854 + $0xa0] sm:$0xf]
        %v2343 = vld [vmem:[%s854 + $0xa4] sm:$0xf]
        %v2344 = vld [vmem:[%s854 + $0xa8] sm:$0xf]
        %v2345 = vld [vmem:[%s854 + $0xac] sm:$0xf]
        %v2346 = vld [vmem:[%s854 + $0xb0] sm:$0xf]
        %v2347 = vld [vmem:[%s854 + $0xb4] sm:$0xf]
        %v2348 = vld [vmem:[%s854 + $0xb8] sm:$0xf]
        %v2349 = vld [vmem:[%s854 + $0xbc] sm:$0xf]
        %v2350 = vld [vmem:[%s854 + $0xc0] sm:$0xf]
        %v2351 = vld [vmem:[%s854 + $0xc4] sm:$0xf]
        %v2352 = vld [vmem:[%s854 + $0xc8] sm:$0xf]
        %v2353 = vld [vmem:[%s854 + $0xcc] sm:$0xf]
        %v2354 = vld [vmem:[%s854 + $0xd0] sm:$0xf]
        %v2355 = vld [vmem:[%s854 + $0xd4] sm:$0xf]
        %v2356 = vld [vmem:[%s854 + $0xd8] sm:$0xf]
        %v2357 = vld [vmem:[%s854 + $0xdc] sm:$0xf]
        %v2358 = vld [vmem:[%s854 + $0xe0] sm:$0xf]
        %v2359 = vld [vmem:[%s854 + $0xe4] sm:$0xf]
        %v2360 = vld [vmem:[%s854 + $0xe8] sm:$0xf]
        %v2361 = vld [vmem:[%s854 + $0xec] sm:$0xf]
        %v2362 = vld [vmem:[%s854 + $0xf0] sm:$0xf]
        %v2363 = vld [vmem:[%s854 + $0xf4] sm:$0xf]
        %v2364 = vld [vmem:[%s854 + $0xf8] sm:$0xf]
        %v2365 = vld [vmem:[%s854 + $0xfc] sm:$0xf]
        %v2366 = vld [vmem:[%s970] sm:$0x1]
        %v2368 = vlaneseq
        %v2369 = vshrl.u32 %v2368, 7
        %v2370 = vsub.s32 0, %v2369
        %v2371 = vrot.slane %v2366, %v2370
        %v2437 = vunpack.c.l.b16 %v2302
        %v2438 = vunpack.c.l.b16 %v2303
        %v2439 = vunpack.c.l.b16 %v2304
        %v2440 = vunpack.c.l.b16 %v2305
        %v2441 = vunpack.c.l.b16 %v2306
        %v2442 = vunpack.c.l.b16 %v2307
        %v2443 = vunpack.c.l.b16 %v2308
        %v2444 = vunpack.c.l.b16 %v2309
        %v2445 = vunpack.c.l.b16 %v2310
        %v2446 = vunpack.c.l.b16 %v2311
        %v2447 = vunpack.c.l.b16 %v2312
        %v2448 = vunpack.c.l.b16 %v2313
        %v2449 = vunpack.c.l.b16 %v2314
        %v2450 = vunpack.c.l.b16 %v2315
        %v2451 = vunpack.c.l.b16 %v2316
        %v2452 = vunpack.c.l.b16 %v2317
        %v2453 = vunpack.c.l.b16 %v2318
        %v2454 = vunpack.c.l.b16 %v2319
        %v2455 = vunpack.c.l.b16 %v2320
        %v2456 = vunpack.c.l.b16 %v2321
        %v2457 = vunpack.c.l.b16 %v2322
        %v2458 = vunpack.c.l.b16 %v2323
        %v2459 = vunpack.c.l.b16 %v2324
        %v2460 = vunpack.c.l.b16 %v2325
        %v2461 = vunpack.c.l.b16 %v2326
        %v2462 = vunpack.c.l.b16 %v2327
        %v2463 = vunpack.c.l.b16 %v2328
        %v2464 = vunpack.c.l.b16 %v2329
        %v2465 = vunpack.c.l.b16 %v2330
        %v2466 = vunpack.c.l.b16 %v2331
        %v2467 = vunpack.c.l.b16 %v2332
        %v2468 = vunpack.c.l.b16 %v2333
        %v2469 = vunpack.c.l.b16 %v2334
        %v2470 = vunpack.c.l.b16 %v2335
        %v2471 = vunpack.c.l.b16 %v2336
        %v2472 = vunpack.c.l.b16 %v2337
        %v2473 = vunpack.c.l.b16 %v2338
        %v2474 = vunpack.c.l.b16 %v2339
        %v2475 = vunpack.c.l.b16 %v2340
        %v2476 = vunpack.c.l.b16 %v2341
        %v2477 = vunpack.c.l.b16 %v2342
        %v2478 = vunpack.c.l.b16 %v2343
        %v2479 = vunpack.c.l.b16 %v2344
        %v2480 = vunpack.c.l.b16 %v2345
        %v2481 = vunpack.c.l.b16 %v2346
        %v2482 = vunpack.c.l.b16 %v2347
        %v2483 = vunpack.c.l.b16 %v2348
        %v2484 = vunpack.c.l.b16 %v2349
        %v2485 = vunpack.c.l.b16 %v2350
        %v2486 = vunpack.c.l.b16 %v2351
        %v2487 = vunpack.c.l.b16 %v2352
        %v2488 = vunpack.c.l.b16 %v2353
        %v2489 = vunpack.c.l.b16 %v2354
        %v2490 = vunpack.c.l.b16 %v2355
        %v2491 = vunpack.c.l.b16 %v2356
        %v2492 = vunpack.c.l.b16 %v2357
        %v2493 = vunpack.c.l.b16 %v2358
        %v2494 = vunpack.c.l.b16 %v2359
        %v2495 = vunpack.c.l.b16 %v2360
        %v2496 = vunpack.c.l.b16 %v2361
        %v2497 = vunpack.c.l.b16 %v2362
        %v2498 = vunpack.c.l.b16 %v2363
        %v2499 = vunpack.c.l.b16 %v2364
        %v2500 = vunpack.c.l.b16 %v2365
        %v2501 = vpack.c.b16 %v2438, %v2437
        %v2502 = vpack.c.b16 %v2440, %v2439
        %v2503 = vpack.c.b16 %v2442, %v2441
        %v2504 = vpack.c.b16 %v2444, %v2443
        %v2505 = vpack.c.b16 %v2446, %v2445
        %v2506 = vpack.c.b16 %v2448, %v2447
        %v2507 = vpack.c.b16 %v2450, %v2449
        %v2508 = vpack.c.b16 %v2452, %v2451
        %v2509 = vpack.c.b16 %v2454, %v2453
        %v2510 = vpack.c.b16 %v2456, %v2455
        %v2511 = vpack.c.b16 %v2458, %v2457
        %v2512 = vpack.c.b16 %v2460, %v2459
        %v2513 = vpack.c.b16 %v2462, %v2461
        %v2514 = vpack.c.b16 %v2464, %v2463
        %v2515 = vpack.c.b16 %v2466, %v2465
        %v2516 = vpack.c.b16 %v2468, %v2467
        %v2517 = vpack.c.b16 %v2470, %v2469
        %v2518 = vpack.c.b16 %v2472, %v2471
        %v2519 = vpack.c.b16 %v2474, %v2473
        %v2520 = vpack.c.b16 %v2476, %v2475
        %v2521 = vpack.c.b16 %v2478, %v2477
        %v2522 = vpack.c.b16 %v2480, %v2479
        %v2523 = vpack.c.b16 %v2482, %v2481
        %v2524 = vpack.c.b16 %v2484, %v2483
        %v2525 = vpack.c.b16 %v2486, %v2485
        %v2526 = vpack.c.b16 %v2488, %v2487
        %v2527 = vpack.c.b16 %v2490, %v2489
        %v2528 = vpack.c.b16 %v2492, %v2491
        %v2529 = vpack.c.b16 %v2494, %v2493
        %v2530 = vpack.c.b16 %v2496, %v2495
        %v2531 = vpack.c.b16 %v2498, %v2497
        %v2532 = vpack.c.b16 %v2500, %v2499
        %2565 = vmatprep.subr.bf16.mxu0 0
        %2566 = vmatpush1.bf16.msra.mxu0 %v2508
        %2567 = vmatprep.subr.bf16.mxu0 0
        %2568 = vmatpush1.bf16.msra.mxu0 %v2507
        %2569 = vmatprep.subr.bf16.mxu0 0
        %2570 = vmatpush1.bf16.msra.mxu0 %v2506
        %2571 = vmatprep.subr.bf16.mxu0 0
        %2572 = vmatpush1.bf16.msra.mxu0 %v2505
        %2573 = vmatprep.subr.bf16.mxu0 0
        %2574 = vmatpush1.bf16.msra.mxu0 %v2504
        %2575 = vmatprep.subr.bf16.mxu0 0
        %2576 = vmatpush1.bf16.msra.mxu0 %v2503
        %2577 = vmatprep.subr.bf16.mxu0 0
        %2578 = vmatpush1.bf16.msra.mxu0 %v2502
        %2579 = vmatprep.subr.bf16.mxu0 0
        %2580 = vmatpush1.bf16.msra.mxu0 %v2501
        %2581 = vmatprep.subr.bf16.mxu0 0
        %2582 = vmatpush2.bf16.msra.mxu0 %v2516
        %2583 = vmatprep.subr.bf16.mxu0 0
        %2584 = vmatpush2.bf16.msra.mxu0 %v2515
        %2585 = vmatprep.subr.bf16.mxu0 0
        %2586 = vmatpush2.bf16.msra.mxu0 %v2514
        %2587 = vmatprep.subr.bf16.mxu0 0
        %2588 = vmatpush2.bf16.msra.mxu0 %v2513
        %2589 = vmatprep.subr.bf16.mxu0 0
        %2590 = vmatpush2.bf16.msra.mxu0 %v2512
        %2591 = vmatprep.subr.bf16.mxu0 0
        %2592 = vmatpush2.bf16.msra.mxu0 %v2511
        %2593 = vmatprep.subr.bf16.mxu0 0
        %2594 = vmatpush2.bf16.msra.mxu0 %v2510
        %2595 = vmatprep.subr.bf16.mxu0 0
        %2596 = vmatpush2.bf16.msra.mxu0 %v2509
        %2597 = vmatprep.mubr.bf16.mxu0 %v2299
        %2598 = vmatmul.mubr.bf16.gmra.mxu0 %v2298
        %v2599 = vpop.f32.mrf.mxu0
        %v2600 = vadd.f32 %v2371, %v2599
        %v2601 = vpop.f32.mrf.mxu0
        %v2602 = vpop.f32.mrf.mxu0
        %v2603 = vadd.f32 %v2371, %v2602
        %v2604 = vpop.f32.mrf.mxu0
        %2605 = vdwg.mxu0
        %2606 = vmatprep.subr.bf16.mxu0 0
        %2607 = vmatpush1.bf16.msra.mxu0 %v2524
        %2608 = vmatprep.subr.bf16.mxu0 0
        %2609 = vmatpush1.bf16.msra.mxu0 %v2523
        %2610 = vmatprep.subr.bf16.mxu0 0
        %2611 = vmatpush1.bf16.msra.mxu0 %v2522
        %2612 = vmatprep.subr.bf16.mxu0 0
        %2613 = vmatpush1.bf16.msra.mxu0 %v2521
        %2614 = vmatprep.subr.bf16.mxu0 0
        %2615 = vmatpush1.bf16.msra.mxu0 %v2520
        %2616 = vmatprep.subr.bf16.mxu0 0
        %2617 = vmatpush1.bf16.msra.mxu0 %v2519
        %2618 = vmatprep.subr.bf16.mxu0 0
        %2619 = vmatpush1.bf16.msra.mxu0 %v2518
        %2620 = vmatprep.subr.bf16.mxu0 0
        %2621 = vmatpush1.bf16.msra.mxu0 %v2517
        %2622 = vmatprep.subr.bf16.mxu0 0
        %2623 = vmatpush2.bf16.msra.mxu0 %v2532
        %2624 = vmatprep.subr.bf16.mxu0 0
        %2625 = vmatpush2.bf16.msra.mxu0 %v2531
        %2626 = vmatprep.subr.bf16.mxu0 0
        %2627 = vmatpush2.bf16.msra.mxu0 %v2530
        %2628 = vmatprep.subr.bf16.mxu0 0
        %2629 = vmatpush2.bf16.msra.mxu0 %v2529
        %2630 = vmatprep.subr.bf16.mxu0 0
        %2631 = vmatpush2.bf16.msra.mxu0 %v2528
        %2632 = vmatprep.subr.bf16.mxu0 0
        %2633 = vmatpush2.bf16.msra.mxu0 %v2527
        %2634 = vmatprep.subr.bf16.mxu0 0
        %2635 = vmatpush2.bf16.msra.mxu0 %v2526
        %2636 = vmatprep.subr.bf16.mxu0 0
        %2637 = vmatpush2.bf16.msra.mxu0 %v2525
        %2638 = vmatprep.mubr.bf16.mxu0 %v2301
        %2639 = vmatmul.mubr.bf16.gmra.mxu0 %v2300
        %v2640 = vpop.f32.mrf.mxu0
        %v2641 = vadd.f32 %v2600, %v2640
        %v2642 = vpop.f32.mrf.mxu0
        %v2643 = vpop.f32.mrf.mxu0
        %v2644 = vadd.f32 %v2603, %v2643
        %v2645 = vpop.f32.mrf.mxu0
        %2646 = vdwg.mxu0
        %v2647 = vadd.f32 %v1923, %v2641
        %v2648 = vadd.f32 %v1924, %v2644
        %v2649 = vld [vmem:[%s973] sm:$0x1]
        %v2650 = vld [vmem:[%s976] sm:$0x1]
        %2651 = vadd.xlane.f32.xlu0 %v2647
        %v2652 = vpop.xlane.xlu0 %2651
        %2653 = vadd.xlane.f32.xlu0 %v2648
        %v2654 = vpop.xlane.xlu0 %2653
        %v2655 = vmul.f32 %v2652, %v1890
        %v2656 = vmul.f32 %v2654, %v1890
        %v2657 = vsub.f32 %v2647, %v2655
        %v2658 = vsub.f32 %v2648, %v2656
        %v2659 = vmul.f32 %v2657, %v2657
        %v2660 = vmul.f32 %v2658, %v2658
        %2661 = vadd.xlane.f32.xlu0 %v2659
        %v2662 = vpop.xlane.xlu0 %2661
        %2663 = vadd.xlane.f32.xlu0 %v2660
        %v2664 = vpop.xlane.xlu0 %2663
        %v2665 = vmul.f32 %v2662, %v1890
        %v2666 = vmul.f32 %v2664, %v1890
        %v2667 = vadd.f32 %v2665, 1e-12
        %v2668 = vadd.f32 %v2666, 1e-12
        %v2669 = vrsqrt.pop %v2667
        %v2670 = vrsqrt.pop %v2668
        %v2671 = vmul.f32 %v2657, %v2669
        %v2672 = vmul.f32 %v2658, %v2670
        %v2674 = vlaneseq
        %v2675 = vshrl.u32 %v2674, 7
        %v2676 = vsub.s32 0, %v2675
        %v2677 = vrot.slane %v2649, %v2676
        %v2679 = vmul.f32 %v2671, %v2677
        %v2680 = vmul.f32 %v2672, %v2677
        %v2682 = vlaneseq
        %v2683 = vshrl.u32 %v2682, 7
        %v2684 = vsub.s32 0, %v2683
        %v2685 = vrot.slane %v2650, %v2684
        %v2687 = vadd.f32 %v2679, %v2685
        %v2688 = vadd.f32 %v2680, %v2685
        %2689 = vst [vmem:[#allocation2] sm:$0xff] %v2687
        %2690 = vst [vmem:[#allocation2 + $0x8] sm:$0xff] %v2688
        %p2691 = scmp.eq.s32.totalorder %s35, 1
        // Predicated region
        $region153: #{tpu_custom_call.1} parent=99 // pred_check
          %p2692 = pneg %p2691
        $region154: #{tpu_custom_call.1} parent=99 // pred_check_branch
          %2694 = sbr.rel (%p2692) target = $region156
        $region155: #{tpu_custom_call.1} parent=99 // pred_region
          %v2695 = vpack.c.bf16 %v2688, %v2687
          %v2696 = vld [vmem:[#allocation18] sm:$0xf]
          %v2697 = vld [vmem:[#allocation18 + $0x4] sm:$0xf]
          %v2698 = vld [vmem:[#allocation18 + $0x8] sm:$0xf]
          %v2699 = vld [vmem:[#allocation18 + $0xc] sm:$0xf]
          %v2700 = vld [vmem:[#allocation18 + $0x10] sm:$0xf]
          %v2701 = vld [vmem:[#allocation18 + $0x14] sm:$0xf]
          %v2702 = vld [vmem:[#allocation18 + $0x18] sm:$0xf]
          %v2703 = vld [vmem:[#allocation18 + $0x1c] sm:$0xf]
          %v2704 = vld [vmem:[#allocation18 + $0x20] sm:$0xf]
          %v2705 = vld [vmem:[#allocation18 + $0x24] sm:$0xf]
          %v2706 = vld [vmem:[#allocation18 + $0x28] sm:$0xf]
          %v2707 = vld [vmem:[#allocation18 + $0x2c] sm:$0xf]
          %v2708 = vld [vmem:[#allocation18 + $0x30] sm:$0xf]
          %v2709 = vld [vmem:[#allocation18 + $0x34] sm:$0xf]
          %v2710 = vld [vmem:[#allocation18 + $0x38] sm:$0xf]
          %v2711 = vld [vmem:[#allocation18 + $0x3c] sm:$0xf]
          %v2712 = vld [vmem:[%s17] sm:$0x1]
          %v2714 = vlaneseq
          %v2715 = vshrl.u32 %v2714, 7
          %v2716 = vsub.s32 0, %v2715
          %v2717 = vrot.slane %v2712, %v2716
          %v2735 = vunpack.c.l.b16 %v2696
          %v2736 = vunpack.c.l.b16 %v2697
          %v2737 = vunpack.c.l.b16 %v2698
          %v2738 = vunpack.c.l.b16 %v2699
          %v2739 = vunpack.c.l.b16 %v2700
          %v2740 = vunpack.c.l.b16 %v2701
          %v2741 = vunpack.c.l.b16 %v2702
          %v2742 = vunpack.c.l.b16 %v2703
          %v2743 = vunpack.c.l.b16 %v2704
          %v2744 = vunpack.c.l.b16 %v2705
          %v2745 = vunpack.c.l.b16 %v2706
          %v2746 = vunpack.c.l.b16 %v2707
          %v2747 = vunpack.c.l.b16 %v2708
          %v2748 = vunpack.c.l.b16 %v2709
          %v2749 = vunpack.c.l.b16 %v2710
          %v2750 = vunpack.c.l.b16 %v2711
          %v2751 = vpack.c.b16 %v2736, %v2735
          %v2752 = vpack.c.b16 %v2738, %v2737
          %v2753 = vpack.c.b16 %v2740, %v2739
          %v2754 = vpack.c.b16 %v2742, %v2741
          %v2755 = vpack.c.b16 %v2744, %v2743
          %v2756 = vpack.c.b16 %v2746, %v2745
          %v2757 = vpack.c.b16 %v2748, %v2747
          %v2758 = vpack.c.b16 %v2750, %v2749
          %2767 = vmatprep.subr.bf16.mxu0 0
          %2768 = vmatpush1.bf16.msra.mxu0 %v2758
          %2769 = vmatprep.subr.bf16.mxu0 0
          %2770 = vmatpush1.bf16.msra.mxu0 %v2757
          %2771 = vmatprep.subr.bf16.mxu0 0
          %2772 = vmatpush1.bf16.msra.mxu0 %v2756
          %2773 = vmatprep.subr.bf16.mxu0 0
          %2774 = vmatpush1.bf16.msra.mxu0 %v2755
          %2775 = vmatprep.subr.bf16.mxu0 0
          %2776 = vmatpush1.bf16.msra.mxu0 %v2754
          %2777 = vmatprep.subr.bf16.mxu0 0
          %2778 = vmatpush1.bf16.msra.mxu0 %v2753
          %2779 = vmatprep.subr.bf16.mxu0 0
          %2780 = vmatpush1.bf16.msra.mxu0 %v2752
          %2781 = vmatprep.subr.bf16.mxu0 0
          %2782 = vmatpush1.bf16.msra.mxu0 %v2751
          %2783 = vmatprep.subr.bf16.mxu0 0
          %2784 = vmatpush2.bf16.msra.mxu0 0
          %2785 = vmatprep.subr.bf16.mxu0 0
          %2786 = vmatpush2.bf16.msra.mxu0 0
          %2787 = vmatprep.subr.bf16.mxu0 0
          %2788 = vmatpush2.bf16.msra.mxu0 0
          %2789 = vmatprep.subr.bf16.mxu0 0
          %2790 = vmatpush2.bf16.msra.mxu0 0
          %2791 = vmatprep.subr.bf16.mxu0 0
          %2792 = vmatpush2.bf16.msra.mxu0 0
          %2793 = vmatprep.subr.bf16.mxu0 0
          %2794 = vmatpush2.bf16.msra.mxu0 0
          %2795 = vmatprep.subr.bf16.mxu0 0
          %2796 = vmatpush2.bf16.msra.mxu0 0
          %2797 = vmatprep.subr.bf16.mxu0 0
          %2798 = vmatpush2.bf16.msra.mxu0 0
          %2799 = vmatprep.mubr.bf16.mxu0 0
          %2800 = vmatmul.mubr.bf16.gmra.mxu0 %v2695
          %v2801 = vpop.f32.mrf.mxu0
          %v2802 = vadd.f32 %v2717, %v2801
          %v2803 = vpop.f32.mrf.mxu0
          %v2804 = vpop.f32.mrf.mxu0
          %v2805 = vadd.f32 %v2717, %v2804
          %v2806 = vpop.f32.mrf.mxu0
          %2807 = vdwg.mxu0
          %v2808 = vtanh.pop %v2802
          %v2809 = vtanh.pop %v2805
          %v2810 = vpack.c.bf16 %v2809, %v2808
          %v2811 = vld [vmem:[#allocation19] sm:$0xf]
          %v2812 = vld [vmem:[#allocation19 + $0x4] sm:$0xf]
          %v2813 = vld [vmem:[#allocation19 + $0x8] sm:$0xf]
          %v2814 = vld [vmem:[#allocation19 + $0xc] sm:$0xf]
          %v2815 = vld [vmem:[#allocation19 + $0x10] sm:$0xf]
          %v2816 = vld [vmem:[#allocation19 + $0x14] sm:$0xf]
          %v2817 = vld [vmem:[#allocation19 + $0x18] sm:$0xf]
          %v2818 = vld [vmem:[#allocation19 + $0x1c] sm:$0xf]
          %v2819 = vld [vmem:[#allocation19 + $0x20] sm:$0xf]
          %v2820 = vld [vmem:[#allocation19 + $0x24] sm:$0xf]
          %v2821 = vld [vmem:[#allocation19 + $0x28] sm:$0xf]
          %v2822 = vld [vmem:[#allocation19 + $0x2c] sm:$0xf]
          %v2823 = vld [vmem:[#allocation19 + $0x30] sm:$0xf]
          %v2824 = vld [vmem:[#allocation19 + $0x34] sm:$0xf]
          %v2825 = vld [vmem:[#allocation19 + $0x38] sm:$0xf]
          %v2826 = vld [vmem:[#allocation19 + $0x3c] sm:$0xf]
          %v2827 = vld [vmem:[%s19] sm:$0x1]
          %v2829 = vlaneseq
          %v2830 = vshrl.u32 %v2829, 7
          %v2831 = vsub.s32 0, %v2830
          %v2832 = vrot.slane %v2827, %v2831
          %v2850 = vunpack.c.l.b16 %v2811
          %v2851 = vunpack.c.l.b16 %v2812
          %v2852 = vunpack.c.l.b16 %v2813
          %v2853 = vunpack.c.l.b16 %v2814
          %v2854 = vunpack.c.l.b16 %v2815
          %v2855 = vunpack.c.l.b16 %v2816
          %v2856 = vunpack.c.l.b16 %v2817
          %v2857 = vunpack.c.l.b16 %v2818
          %v2858 = vunpack.c.l.b16 %v2819
          %v2859 = vunpack.c.l.b16 %v2820
          %v2860 = vunpack.c.l.b16 %v2821
          %v2861 = vunpack.c.l.b16 %v2822
          %v2862 = vunpack.c.l.b16 %v2823
          %v2863 = vunpack.c.l.b16 %v2824
          %v2864 = vunpack.c.l.b16 %v2825
          %v2865 = vunpack.c.l.b16 %v2826
          %v2866 = vpack.c.b16 %v2851, %v2850
          %v2867 = vpack.c.b16 %v2853, %v2852
          %v2868 = vpack.c.b16 %v2855, %v2854
          %v2869 = vpack.c.b16 %v2857, %v2856
          %v2870 = vpack.c.b16 %v2859, %v2858
          %v2871 = vpack.c.b16 %v2861, %v2860
          %v2872 = vpack.c.b16 %v2863, %v2862
          %v2873 = vpack.c.b16 %v2865, %v2864
          %2882 = vmatprep.subr.bf16.mxu0 0
          %2883 = vmatpush1.bf16.msra.mxu0 %v2873
          %2884 = vmatprep.subr.bf16.mxu0 0
          %2885 = vmatpush1.bf16.msra.mxu0 %v2872
          %2886 = vmatprep.subr.bf16.mxu0 0
          %2887 = vmatpush1.bf16.msra.mxu0 %v2871
          %2888 = vmatprep.subr.bf16.mxu0 0
          %2889 = vmatpush1.bf16.msra.mxu0 %v2870
          %2890 = vmatprep.subr.bf16.mxu0 0
          %2891 = vmatpush1.bf16.msra.mxu0 %v2869
          %2892 = vmatprep.subr.bf16.mxu0 0
          %2893 = vmatpush1.bf16.msra.mxu0 %v2868
          %2894 = vmatprep.subr.bf16.mxu0 0
          %2895 = vmatpush1.bf16.msra.mxu0 %v2867
          %2896 = vmatprep.subr.bf16.mxu0 0
          %2897 = vmatpush1.bf16.msra.mxu0 %v2866
          %2898 = vmatprep.subr.bf16.mxu0 0
          %2899 = vmatpush2.bf16.msra.mxu0 0
          %2900 = vmatprep.subr.bf16.mxu0 0
          %2901 = vmatpush2.bf16.msra.mxu0 0
          %2902 = vmatprep.subr.bf16.mxu0 0
          %2903 = vmatpush2.bf16.msra.mxu0 0
          %2904 = vmatprep.subr.bf16.mxu0 0
          %2905 = vmatpush2.bf16.msra.mxu0 0
          %2906 = vmatprep.subr.bf16.mxu0 0
          %2907 = vmatpush2.bf16.msra.mxu0 0
          %2908 = vmatprep.subr.bf16.mxu0 0
          %2909 = vmatpush2.bf16.msra.mxu0 0
          %2910 = vmatprep.subr.bf16.mxu0 0
          %2911 = vmatpush2.bf16.msra.mxu0 0
          %2912 = vmatprep.subr.bf16.mxu0 0
          %2913 = vmatpush2.bf16.msra.mxu0 0
          %2914 = vmatprep.mubr.bf16.mxu0 0
          %2915 = vmatmul.mubr.bf16.gmra.mxu0 %v2810
          %v2916 = vpop.f32.mrf.mxu0
          %v2917 = vadd.f32 %v2832, %v2916
          %v2918 = vpop.f32.mrf.mxu0
          %v2919 = vpop.f32.mrf.mxu0
          %v2920 = vadd.f32 %v2832, %v2919
          %v2921 = vpop.f32.mrf.mxu0
          %2922 = vdwg.mxu0
          %2923 = vst [vmem:[#allocation20] sm:$0xff] %v2917
          %2924 = vst [vmem:[#allocation20 + $0x8] sm:$0xff] %v2920
        $region156: #{tpu_custom_call.1} parent=99 // pred_fallthru
          _
        // Predicated region
        $region157: #{tpu_custom_call.1} parent=99 // pred_check
          %p2925 = pneg %p528
        $region158: #{tpu_custom_call.1} parent=99 // pred_check_branch
          %2927 = sbr.rel (%p2925) target = $region160
        $region159: #{tpu_custom_call.1} parent=99 // pred_region
          %s2929 = ssub.s32 256, 256
          %2930 = vsyncadd [#allocation6], %s2929
          %s2931 = sshll.u32 [#allocation20], 4
          %s2932 = int_to_ptr.vmem [resolvable:$true] %s2931
          %2937 = dma.vmem_to_hbm [thread:$0]  %s2932, 256, %s20, [#allocation6], 128, 128, 8
        $region160: #{tpu_custom_call.1} parent=99 // pred_fallthru
          _
        // Predicated region
        $region161: #{tpu_custom_call.1} parent=99 // pred_check
          %p2938 = pneg %p528
        $region162: #{tpu_custom_call.1} parent=99 // pred_check_branch
          %2940 = sbr.rel (%p2938) target = $region164
        $region163: #{tpu_custom_call.1} parent=99 // pred_region
          %2941 = dma.done [#allocation6], 256
        $region164: #{tpu_custom_call.1} parent=99 // pred_fallthru
          _
      $region100: #{tpu_custom_call.1} parent=5 // pred_fallthru
        _
      %p2942 = scmp.le.s32.totalorder 2, %s30
      // Predicated region
      $region165: #{tpu_custom_call.1} parent=5 // pred_check
        %p2943 = pneg %p2942
      $region166: #{tpu_custom_call.1} parent=5 // pred_check_branch
        %2945 = sbr.rel (%p2943) target = $region168
      $region167: #{tpu_custom_call.1} parent=5 // pred_region
        %s2946 = ssub.s32 %s30, 2
      $region168: #{tpu_custom_call.1} parent=5 // pred_fallthru
        _
    $region6: #{tpu_custom_call.1} parent=1 // loop_footer
      %s34 = sadd.s32 1, %s30
    $region7: #{tpu_custom_call.1} parent=1 // loop_footer_branch
      %29 = sbr.rel target = $region3
    $region8: #{tpu_custom_call.1} parent=1 // loop_exit
      _
    %2947 = vsyncpa [#allocation5], 1
    %s2948 = scalar_lea.sflag [#allocation5], 1
    %2949 = vsyncpa %s2948, 1
    %2950 = vsyncpa [#allocation8], 1
    %2951 = vsyncpa [#allocation11], 1
    %2952 = vsyncpa [#allocation6], 1
    %s2953 = scalar_lea.sflag [#allocation6], 1
    %2954 = vsyncpa %s2953, 1

</llo_original>
